<compile_context>
chip_gen: v7x
topology: tpu7x:2x2x1
jax: 0.10.0
libtpu: 0.0.40
codegen_flags: <defaults>
</compile_context>

<pallas_src>
import math

import jax
import jax.numpy as jnp
from jax.experimental import pallas as pl
from jax.experimental.pallas import tpu as pltpu

Z_MIN = 0.001
Z_MAX = 0.1
DELTA_T = 1.0


def _stp_cell_kernel(h_ref, hj_ref, pre_ref, X_ref, U_ref,
                     zx_ref, zu_ref, ucap_ref, w_ref, zh_ref,
                     h_out_ref, X_out_ref, U_out_ref):
    # Per grid step (Bt = block_b):
    #   h_ref   : (H, Bt)      h_t[j, b]
    #   hj_ref  : (H, 1, Bt)   same values, pre-shaped for the k-broadcast
    #   pre_ref : (H, Bt)      (p @ x + b)[j, b]
    #   X_ref   : (H, H, Bt)   X[j, k, b]
    #   U_ref   : (H, H, Bt)   U[j, k, b]
    #   zx/zu/ucap/w_ref : (H, H, 1)   hoisted batch-invariant parameters
    #   zh_ref  : (H, 1)
    X = X_ref[...]
    U = U_ref[...]
    h = h_ref[...]
    bshape = X.shape

    # Broadcast the (H, H, 1) parameters over the lane (batch) axis once each.
    z_x = jnp.broadcast_to(zx_ref[...], bshape)
    z_u = jnp.broadcast_to(zu_ref[...], bshape)
    ucap = jnp.broadcast_to(ucap_ref[...], bshape)
    w = jnp.broadcast_to(w_ref[...], bshape)

    # h[j, b] broadcast over k (sublanes) and h[k, b] broadcast over j (outer).
    h_j = jnp.broadcast_to(hj_ref[...], bshape)          # (H, H, Bt)
    h_k = jnp.broadcast_to(h[None, :, :], bshape)        # (H, H, Bt)

    # X update:  X_new = z_x + (1 - z_x) * X - dt * U * X * h_j
    X_new = z_x + (1.0 - z_x) * X - DELTA_T * (U * X * h_j)

    # U update, clamped to [Ucap, 1].
    U_new = ucap * z_u + (1.0 - z_u) * U + DELTA_T * ucap * ((1.0 - U) * h_j)
    U_new = jnp.clip(U_new, ucap, 1.0)

    # Hidden-state update:  rec[j, b] = sum_k (w*U_new*X_new)[j, k, b] * h[k, b]
    W_eff = w * U_new * X_new                             # (H, H, Bt)
    rec = jnp.sum(W_eff * h_k, axis=1)                    # (H, Bt) sublane reduce
    z_h = zh_ref[...]                                     # (H, 1)
    h_new = (1.0 - z_h) * h + z_h * jax.nn.sigmoid(rec + pre_ref[...])

    h_out_ref[...] = h_new
    X_out_ref[...] = X_new
    U_out_ref[...] = U_new


def stp_cell_forward(x, h, X, U, params, e_h, *, block_b=None):
    """One STPCell ('rich') step.

    Args:
      x: (B, I) input.
      h: (B, H) previous hidden state.
      X, U: (H, H, B) synaptic state in batch-minor ("kernel") layout.
      params: dict with c_x, c_u, c_U, w (H, H); c_h, b (H, 1); p (H, I).
      e_h: hidden-gate scale (python float or scalar array).
    Returns:
      h_new (B, H), X_new (H, H, B), U_new (H, H, B).
    """
    f32 = jnp.float32
    B, _ = x.shape
    H = h.shape[1]
    assert X.shape == (H, H, B) and U.shape == (H, H, B)

    if block_b is None:
        # VMEM per step ~ (input/output double-buffers + ~10 live temps)
        # * H*H*block_b*4 B.  block_b=256, H=32 -> ~18 MiB, fits every
        # generation with the raised vmem limit below.  block_b is either the
        # full batch or a multiple of 128, satisfying the (8,128) tile rule.
        block_b = min(B, 256)
    grid_b = pl.cdiv(B, block_b)

    sig = jax.nn.sigmoid
    # Hoisted batch-invariant parameter transforms (computed once, not B times).
    z_x = (Z_MIN + (Z_MAX - Z_MIN) * sig(params["c_x"])).astype(f32)[:, :, None]
    z_u = (Z_MIN + (Z_MAX - Z_MIN) * sig(params["c_u"])).astype(f32)[:, :, None]
    ucap = (0.9 * sig(params["c_U"])).astype(f32)[:, :, None]
    w = params["w"].astype(f32)[:, :, None]
    z_h = (e_h * sig(params["c_h"])).astype(f32)                        # (H, 1)

    # Input projection (+ bias) as one batched XLA matmul, stored batch-minor.
    pre = (x.astype(f32) @ params["p"].astype(f32).T
           + params["b"].astype(f32)[:, 0][None, :]).T                  # (H, B)
    h_t = h.astype(f32).T                                               # (H, B)
    h_j3 = h_t[:, None, :]                                              # (H, 1, B)

    state_spec = pl.BlockSpec((H, H, block_b), lambda b: (0, 0, b))
    vec_spec = pl.BlockSpec((H, block_b), lambda b: (0, b))
    hj_spec = pl.BlockSpec((H, 1, block_b), lambda b: (0, 0, b))
    par3_spec = pl.BlockSpec((H, H, 1), lambda b: (0, 0, 0))
    parv_spec = pl.BlockSpec((H, 1), lambda b: (0, 0))

    out_shapes = (
        jax.ShapeDtypeStruct((H, B), f32),
        jax.ShapeDtypeStruct((H, H, B), f32),
        jax.ShapeDtypeStruct((H, H, B), f32),
    )

    h_new_t, X_new, U_new = pl.pallas_call(
        _stp_cell_kernel,
        out_shape=out_shapes,
        grid=(grid_b,),
        in_specs=[vec_spec, hj_spec, vec_spec, state_spec, state_spec,
                  par3_spec, par3_spec, par3_spec, par3_spec, parv_spec],
        out_specs=(vec_spec, state_spec, state_spec),
        compiler_params=pltpu.CompilerParams(
            dimension_semantics=("parallel",),
            vmem_limit_bytes=48 * 1024 * 1024,
        ),
    )(h_t, h_j3, pre, X.astype(f32), U.astype(f32), z_x, z_u, ucap, w, z_h)

    return h_new_t.T, X_new, U_new


def stp_cell_reference(x, h, X, U, params, e_h):
    """Pure-JAX reference in the original batch-major (B, H, H) convention."""
    sig = jax.nn.sigmoid
    hcol = h[:, :, None]                                       # (B, H, 1)
    z_x = Z_MIN + (Z_MAX - Z_MIN) * sig(params["c_x"])
    X_new = z_x[None] + (1.0 - z_x)[None] * X - DELTA_T * U * X * hcol
    z_u = Z_MIN + (Z_MAX - Z_MIN) * sig(params["c_u"])
    Ucap = 0.9 * sig(params["c_U"])
    U_new = (Ucap[None] * z_u[None] + (1.0 - z_u)[None] * U
             + DELTA_T * Ucap[None] * (1.0 - U) * hcol)
    U_new = jnp.clip(U_new, Ucap[None], 1.0)
    z_h = e_h * sig(params["c_h"])[:, 0]                        # (H,)
    W_eff = params["w"][None] * U_new * X_new                   # (B, H, H)
    rec = jnp.einsum("bjk,bk->bj", W_eff, h)
    inp = x @ params["p"].T
    h_new = (1.0 - z_h)[None] * h + z_h[None] * sig(rec + inp + params["b"][:, 0][None])
    return h_new, X_new, U_new


if __name__ == "__main__":
    B, H, I = 2, 32, 4          # batch, hidden_size, input_size
    e_h, alpha = 0.5, 2.0       # alpha only feeds e_ux, which is unused in forward

    key = jax.random.PRNGKey(0)
    ks = jax.random.split(key, 9)
    lim = 1.0 / math.sqrt(H)    # matches nn.init.uniform_(-1/sqrt(H), 1/sqrt(H))
    uni = lambda k, shape: jax.random.uniform(k, shape, jnp.float32, minval=-lim, maxval=lim)

    params = dict(
        c_x=uni(ks[0], (H, H)),
        c_u=uni(ks[1], (H, H)),
        c_U=uni(ks[2], (H, H)),
        c_h=uni(ks[3], (H, 1)),
        w=uni(ks[4], (H, H)),
        p=uni(ks[5], (H, I)),
        b=uni(ks[6], (H, 1)),
    )

    x1 = jax.random.normal(ks[7], (B, I), jnp.float32)
    x2 = jax.random.normal(ks[8], (B, I), jnp.float32)

    # Module state init: h_t = zeros, X = ones, U = 0.9 (kernel keeps X/U
    # batch-minor, shape (H, H, B)).
    h0 = jnp.zeros((B, H), jnp.float32)
    X0_k = jnp.ones((H, H, B), jnp.float32)
    U0_k = jnp.full((H, H, B), 0.9, jnp.float32)

    # Jit the whole step so the hoisted parameter transforms, input projection
    # and the pallas_call fuse into one executable / one dispatch.
    stp_step = jax.jit(stp_cell_forward)

    # Two recurrent steps through the Pallas kernel (second step exercises the
    # batch-dependent h / X / U broadcast paths).
    h1, X1_k, U1_k = stp_step(x1, h0, X0_k, U0_k, params, e_h)
    h2, X2_k, U2_k = stp_step(x2, h1, X1_k, U1_k, params, e_h)
    jax.block_until_ready((h2, X2_k, U2_k))

    # Reference in the original (B, H, H) convention.
    to_bjk = lambda a: jnp.transpose(a, (2, 0, 1))
    X0 = to_bjk(X0_k)
    U0 = to_bjk(U0_k)
    h1_r, X1_r, U1_r = stp_cell_reference(x1, h0, X0, U0, params, e_h)
    h2_r, X2_r, U2_r = stp_cell_reference(x2, h1_r, X1_r, U1_r, params, e_h)

    assert jnp.allclose(h1, h1_r, atol=1e-5, rtol=1e-5)
    assert jnp.allclose(to_bjk(X1_k), X1_r, atol=1e-5, rtol=1e-5)
    assert jnp.allclose(to_bjk(U1_k), U1_r, atol=1e-5, rtol=1e-5)
    assert jnp.allclose(h2, h2_r, atol=1e-5, rtol=1e-5)
    assert jnp.allclose(to_bjk(X2_k), X2_r, atol=1e-5, rtol=1e-5)
    assert jnp.allclose(to_bjk(U2_k), U2_r, atol=1e-5, rtol=1e-5)

    print("KERNEL_OK")
</pallas_src>

<mosaic_0001>
module attributes {stable_mosaic.version = 11 : i64} {
  func.func @_stp_cell_kernel(%arg0: i32, %arg1: memref<32x2xf32, #tpu.memory_space<vmem>>, %arg2: memref<32x1x2xf32, #tpu.memory_space<vmem>>, %arg3: memref<32x2xf32, #tpu.memory_space<vmem>>, %arg4: memref<32x32x2xf32, #tpu.memory_space<vmem>>, %arg5: memref<32x32x2xf32, #tpu.memory_space<vmem>>, %arg6: memref<32x32x1xf32, #tpu.memory_space<vmem>>, %arg7: memref<32x32x1xf32, #tpu.memory_space<vmem>>, %arg8: memref<32x32x1xf32, #tpu.memory_space<vmem>>, %arg9: memref<32x32x1xf32, #tpu.memory_space<vmem>>, %arg10: memref<32x1xf32, #tpu.memory_space<vmem>>, %arg11: memref<32x2xf32, #tpu.memory_space<vmem>>, %arg12: memref<32x32x2xf32, #tpu.memory_space<vmem>>, %arg13: memref<32x32x2xf32, #tpu.memory_space<vmem>>) attributes {dimension_semantics = [#tpu.dimension_semantics<parallel>], iteration_bounds = array<i64: 1>, scalar_prefetch = 0 : i64, scratch_operands = 0 : i64, tpu.core_type = #tpu.core_type<tc>, window_params = [{transform_indices = @transform_0, window_bounds = array<i64: 32, 2>}, {transform_indices = @transform_1, window_bounds = array<i64: 32, 1, 2>}, {transform_indices = @transform_2, window_bounds = array<i64: 32, 2>}, {transform_indices = @transform_3, window_bounds = array<i64: 32, 32, 2>}, {transform_indices = @transform_4, window_bounds = array<i64: 32, 32, 2>}, {pipeline_mode = #tpu.pipeline_mode<synchronous>, transform_indices = @transform_5, window_bounds = array<i64: 32, 32, 1>}, {pipeline_mode = #tpu.pipeline_mode<synchronous>, transform_indices = @transform_6, window_bounds = array<i64: 32, 32, 1>}, {pipeline_mode = #tpu.pipeline_mode<synchronous>, transform_indices = @transform_7, window_bounds = array<i64: 32, 32, 1>}, {pipeline_mode = #tpu.pipeline_mode<synchronous>, transform_indices = @transform_8, window_bounds = array<i64: 32, 32, 1>}, {pipeline_mode = #tpu.pipeline_mode<synchronous>, transform_indices = @transform_9, window_bounds = array<i64: 32, 1>}, {transform_indices = @transform_10, window_bounds = array<i64: 32, 2>}, {transform_indices = @transform_11, window_bounds = array<i64: 32, 32, 2>}, {transform_indices = @transform_12, window_bounds = array<i64: 32, 32, 2>}]} {
    %c0 = arith.constant 0 : index
    %c0_0 = arith.constant 0 : index
    %c0_1 = arith.constant 0 : index
    %0 = vector.load %arg4[%c0, %c0_0, %c0_1] : memref<32x32x2xf32, #tpu.memory_space<vmem>>, vector<32x32x2xf32>
    %c0_2 = arith.constant 0 : index
    %c0_3 = arith.constant 0 : index
    %c0_4 = arith.constant 0 : index
    %1 = vector.load %arg5[%c0_2, %c0_3, %c0_4] : memref<32x32x2xf32, #tpu.memory_space<vmem>>, vector<32x32x2xf32>
    %c0_5 = arith.constant 0 : index
    %c0_6 = arith.constant 0 : index
    %2 = vector.load %arg1[%c0_5, %c0_6] : memref<32x2xf32, #tpu.memory_space<vmem>>, vector<32x2xf32>
    %c0_7 = arith.constant 0 : index
    %c0_8 = arith.constant 0 : index
    %c0_9 = arith.constant 0 : index
    %3 = vector.load %arg6[%c0_7, %c0_8, %c0_9] : memref<32x32x1xf32, #tpu.memory_space<vmem>>, vector<32x32x1xf32>
    %4 = vector.shape_cast %3 : vector<32x32x1xf32> to vector<32x32x1xf32>
    %5 = vector.broadcast %4 : vector<32x32x1xf32> to vector<32x32x2xf32>
    %c0_10 = arith.constant 0 : index
    %c0_11 = arith.constant 0 : index
    %c0_12 = arith.constant 0 : index
    %6 = vector.load %arg7[%c0_10, %c0_11, %c0_12] : memref<32x32x1xf32, #tpu.memory_space<vmem>>, vector<32x32x1xf32>
    %7 = vector.shape_cast %6 : vector<32x32x1xf32> to vector<32x32x1xf32>
    %8 = vector.broadcast %7 : vector<32x32x1xf32> to vector<32x32x2xf32>
    %c0_13 = arith.constant 0 : index
    %c0_14 = arith.constant 0 : index
    %c0_15 = arith.constant 0 : index
    %9 = vector.load %arg8[%c0_13, %c0_14, %c0_15] : memref<32x32x1xf32, #tpu.memory_space<vmem>>, vector<32x32x1xf32>
    %10 = vector.shape_cast %9 : vector<32x32x1xf32> to vector<32x32x1xf32>
    %11 = vector.broadcast %10 : vector<32x32x1xf32> to vector<32x32x2xf32>
    %c0_16 = arith.constant 0 : index
    %c0_17 = arith.constant 0 : index
    %c0_18 = arith.constant 0 : index
    %12 = vector.load %arg9[%c0_16, %c0_17, %c0_18] : memref<32x32x1xf32, #tpu.memory_space<vmem>>, vector<32x32x1xf32>
    %13 = vector.shape_cast %12 : vector<32x32x1xf32> to vector<32x32x1xf32>
    %14 = vector.broadcast %13 : vector<32x32x1xf32> to vector<32x32x2xf32>
    %c0_19 = arith.constant 0 : index
    %c0_20 = arith.constant 0 : index
    %c0_21 = arith.constant 0 : index
    %15 = vector.load %arg2[%c0_19, %c0_20, %c0_21] : memref<32x1x2xf32, #tpu.memory_space<vmem>>, vector<32x1x2xf32>
    %16 = vector.shape_cast %15 : vector<32x1x2xf32> to vector<32x1x2xf32>
    %17 = vector.broadcast %16 : vector<32x1x2xf32> to vector<32x32x2xf32>
    %18 = vector.shape_cast %2 : vector<32x2xf32> to vector<1x32x2xf32>
    %19 = vector.shape_cast %18 : vector<1x32x2xf32> to vector<1x32x2xf32>
    %20 = vector.broadcast %19 : vector<1x32x2xf32> to vector<32x32x2xf32>
    %cst = arith.constant 1.000000e+00 : f32
    %21 = vector.broadcast %cst : f32 to vector<32x32x2xf32>
    %22 = arith.subf %21, %5 : vector<32x32x2xf32>
    %23 = arith.mulf %22, %0 : vector<32x32x2xf32>
    %24 = arith.addf %5, %23 : vector<32x32x2xf32>
    %25 = arith.mulf %1, %0 : vector<32x32x2xf32>
    %26 = arith.mulf %25, %17 : vector<32x32x2xf32>
    %cst_22 = arith.constant 1.000000e+00 : f32
    %27 = vector.broadcast %cst_22 : f32 to vector<32x32x2xf32>
    %28 = arith.mulf %27, %26 : vector<32x32x2xf32>
    %29 = arith.subf %24, %28 : vector<32x32x2xf32>
    %30 = arith.mulf %11, %8 : vector<32x32x2xf32>
    %cst_23 = arith.constant 1.000000e+00 : f32
    %31 = vector.broadcast %cst_23 : f32 to vector<32x32x2xf32>
    %32 = arith.subf %31, %8 : vector<32x32x2xf32>
    %33 = arith.mulf %32, %1 : vector<32x32x2xf32>
    %34 = arith.addf %30, %33 : vector<32x32x2xf32>
    %cst_24 = arith.constant 1.000000e+00 : f32
    %35 = vector.broadcast %cst_24 : f32 to vector<32x32x2xf32>
    %36 = arith.mulf %35, %11 : vector<32x32x2xf32>
    %cst_25 = arith.constant 1.000000e+00 : f32
    %37 = vector.broadcast %cst_25 : f32 to vector<32x32x2xf32>
    %38 = arith.subf %37, %1 : vector<32x32x2xf32>
    %39 = arith.mulf %38, %17 : vector<32x32x2xf32>
    %40 = arith.mulf %36, %39 : vector<32x32x2xf32>
    %41 = arith.addf %34, %40 : vector<32x32x2xf32>
    %cst_26 = arith.constant 1.000000e+00 : f32
    %42 = arith.maximumf %11, %41 : vector<32x32x2xf32>
    %43 = vector.broadcast %cst_26 : f32 to vector<32x32x2xf32>
    %44 = arith.minimumf %43, %42 : vector<32x32x2xf32>
    %45 = arith.mulf %14, %44 : vector<32x32x2xf32>
    %46 = arith.mulf %45, %29 : vector<32x32x2xf32>
    %47 = arith.mulf %46, %20 : vector<32x32x2xf32>
    %cst_27 = arith.constant dense<0.000000e+00> : vector<32x2xf32>
    %48 = vector.multi_reduction <add>, %47, %cst_27 [1] : vector<32x32x2xf32> to vector<32x2xf32>
    %c0_28 = arith.constant 0 : index
    %c0_29 = arith.constant 0 : index
    %49 = vector.load %arg10[%c0_28, %c0_29] : memref<32x1xf32, #tpu.memory_space<vmem>>, vector<32x1xf32>
    %cst_30 = arith.constant 1.000000e+00 : f32
    %50 = vector.broadcast %cst_30 : f32 to vector<32x1xf32>
    %51 = arith.subf %50, %49 : vector<32x1xf32>
    %52 = vector.broadcast %51 : vector<32x1xf32> to vector<32x2xf32>
    %53 = arith.mulf %52, %2 : vector<32x2xf32>
    %c0_31 = arith.constant 0 : index
    %c0_32 = arith.constant 0 : index
    %54 = vector.load %arg3[%c0_31, %c0_32] : memref<32x2xf32, #tpu.memory_space<vmem>>, vector<32x2xf32>
    %55 = arith.addf %48, %54 : vector<32x2xf32>
    %56 = arith.negf %55 : vector<32x2xf32>
    %57 = math.exp %56 : vector<32x2xf32>
    %cst_33 = arith.constant 1.000000e+00 : f32
    %58 = vector.broadcast %cst_33 : f32 to vector<32x2xf32>
    %59 = arith.addf %58, %57 : vector<32x2xf32>
    %60 = arith.divf %58, %59 : vector<32x2xf32>
    %61 = vector.broadcast %49 : vector<32x1xf32> to vector<32x2xf32>
    %62 = arith.mulf %61, %60 : vector<32x2xf32>
    %63 = arith.addf %53, %62 : vector<32x2xf32>
    %c0_34 = arith.constant 0 : index
    %c0_35 = arith.constant 0 : index
    %64 = vector.load %arg11[%c0_34, %c0_35] : memref<32x2xf32, #tpu.memory_space<vmem>>, vector<32x2xf32>
    tpu.vector_store %arg11[%c0_34, %c0_35], %63 {strides = array<i32>} : memref<32x2xf32, #tpu.memory_space<vmem>>, vector<32x2xf32>,
    %c0_36 = arith.constant 0 : index
    %c0_37 = arith.constant 0 : index
    %c0_38 = arith.constant 0 : index
    %65 = vector.load %arg12[%c0_36, %c0_37, %c0_38] : memref<32x32x2xf32, #tpu.memory_space<vmem>>, vector<32x32x2xf32>
    tpu.vector_store %arg12[%c0_36, %c0_37, %c0_38], %29 {strides = array<i32>} : memref<32x32x2xf32, #tpu.memory_space<vmem>>, vector<32x32x2xf32>,
    %c0_39 = arith.constant 0 : index
    %c0_40 = arith.constant 0 : index
    %c0_41 = arith.constant 0 : index
    %66 = vector.load %arg13[%c0_39, %c0_40, %c0_41] : memref<32x32x2xf32, #tpu.memory_space<vmem>>, vector<32x32x2xf32>
    tpu.vector_store %arg13[%c0_39, %c0_40, %c0_41], %44 {strides = array<i32>} : memref<32x32x2xf32, #tpu.memory_space<vmem>>, vector<32x32x2xf32>,
    return
  }
  func.func @transform_0(%arg0: i32) -> (i32, i32) {
    %c0_i32 = arith.constant 0 : i32
    %c0_i32_0 = arith.constant 0 : i32
    return %c0_i32, %arg0 : i32, i32
  }
  func.func @transform_1(%arg0: i32) -> (i32, i32, i32) {
    %c0_i32 = arith.constant 0 : i32
    %c0_i32_0 = arith.constant 0 : i32
    %c0_i32_1 = arith.constant 0 : i32
    return %c0_i32, %c0_i32_0, %arg0 : i32, i32, i32
  }
  func.func @transform_2(%arg0: i32) -> (i32, i32) {
    %c0_i32 = arith.constant 0 : i32
    %c0_i32_0 = arith.constant 0 : i32
    return %c0_i32, %arg0 : i32, i32
  }
  func.func @transform_3(%arg0: i32) -> (i32, i32, i32) {
    %c0_i32 = arith.constant 0 : i32
    %c0_i32_0 = arith.constant 0 : i32
    %c0_i32_1 = arith.constant 0 : i32
    return %c0_i32, %c0_i32_0, %arg0 : i32, i32, i32
  }
  func.func @transform_4(%arg0: i32) -> (i32, i32, i32) {
    %c0_i32 = arith.constant 0 : i32
    %c0_i32_0 = arith.constant 0 : i32
    %c0_i32_1 = arith.constant 0 : i32
    return %c0_i32, %c0_i32_0, %arg0 : i32, i32, i32
  }
  func.func @transform_5(%arg0: i32) -> (i32, i32, i32) {
    %c0_i32 = arith.constant 0 : i32
    %c0_i32_0 = arith.constant 0 : i32
    %c0_i32_1 = arith.constant 0 : i32
    %c0_i32_2 = arith.constant 0 : i32
    return %c0_i32, %c0_i32_0, %c0_i32_1 : i32, i32, i32
  }
  func.func @transform_6(%arg0: i32) -> (i32, i32, i32) {
    %c0_i32 = arith.constant 0 : i32
    %c0_i32_0 = arith.constant 0 : i32
    %c0_i32_1 = arith.constant 0 : i32
    %c0_i32_2 = arith.constant 0 : i32
    return %c0_i32, %c0_i32_0, %c0_i32_1 : i32, i32, i32
  }
  func.func @transform_7(%arg0: i32) -> (i32, i32, i32) {
    %c0_i32 = arith.constant 0 : i32
    %c0_i32_0 = arith.constant 0 : i32
    %c0_i32_1 = arith.constant 0 : i32
    %c0_i32_2 = arith.constant 0 : i32
    return %c0_i32, %c0_i32_0, %c0_i32_1 : i32, i32, i32
  }
  func.func @transform_8(%arg0: i32) -> (i32, i32, i32) {
    %c0_i32 = arith.constant 0 : i32
    %c0_i32_0 = arith.constant 0 : i32
    %c0_i32_1 = arith.constant 0 : i32
    %c0_i32_2 = arith.constant 0 : i32
    return %c0_i32, %c0_i32_0, %c0_i32_1 : i32, i32, i32
  }
  func.func @transform_9(%arg0: i32) -> (i32, i32) {
    %c0_i32 = arith.constant 0 : i32
    %c0_i32_0 = arith.constant 0 : i32
    %c0_i32_1 = arith.constant 0 : i32
    return %c0_i32, %c0_i32_0 : i32, i32
  }
  func.func @transform_10(%arg0: i32) -> (i32, i32) {
    %c0_i32 = arith.constant 0 : i32
    %c0_i32_0 = arith.constant 0 : i32
    return %c0_i32, %arg0 : i32, i32
  }
  func.func @transform_11(%arg0: i32) -> (i32, i32, i32) {
    %c0_i32 = arith.constant 0 : i32
    %c0_i32_0 = arith.constant 0 : i32
    %c0_i32_1 = arith.constant 0 : i32
    return %c0_i32, %c0_i32_0, %arg0 : i32, i32, i32
  }
  func.func @transform_12(%arg0: i32) -> (i32, i32, i32) {
    %c0_i32 = arith.constant 0 : i32
    %c0_i32_0 = arith.constant 0 : i32
    %c0_i32_1 = arith.constant 0 : i32
    return %c0_i32, %c0_i32_0, %arg0 : i32, i32, i32
  }
}

</mosaic_0001>

<llo_original>
// kernel: stp_cell_forward.1
$region0: #{stp_cell_forward.1}
  #allocation0 [shape = 'u32[]', space=smem, size = 0x4, offset = 0x4, fixed_abs, tag = 'smem constant byte address 0x4 - core index']
  #allocation1 [shape = 'u32[144,128]{1,0:T(1,128)}', space=vmem, size = 0x12000, scoped, tag = 'internal scratch']
  %s0 = inlined_call_operand.vmem [shape: f32[32,2], index: 0, kind: input, shape index: {}, may-alias: {0,1}]
  %s1 = inlined_call_operand.vmem [shape: f32[32,1,2], index: 1, kind: input, shape index: {}, may-alias: {0,1}]
  %s2 = inlined_call_operand.vmem [shape: f32[32,2], index: 2, kind: input, shape index: {}]
  %s3 = inlined_call_operand.vmem [shape: f32[32,32,2], index: 3, kind: input, shape index: {}]
  %s4 = inlined_call_operand.vmem [shape: f32[32,32,2], index: 4, kind: input, shape index: {}]
  %s5 = inlined_call_operand.vmem [shape: f32[32,32,1], index: 5, kind: input, shape index: {}]
  %s6 = inlined_call_operand.vmem [shape: f32[32,32,1], index: 6, kind: input, shape index: {}]
  %s7 = inlined_call_operand.vmem [shape: f32[32,32,1], index: 7, kind: input, shape index: {}]
  %s8 = inlined_call_operand.vmem [shape: f32[32,32,1], index: 8, kind: input, shape index: {}]
  %s9 = inlined_call_operand.vmem [shape: f32[32,1], index: 9, kind: input, shape index: {}]
  %s10 = inlined_call_operand.vmem [shape: f32[32,2], index: 10, kind: output, shape index: {0}]
  %s11 = inlined_call_operand.vmem [shape: f32[32,32,2], index: 11, kind: output, shape index: {1}]
  %s12 = inlined_call_operand.vmem [shape: f32[32,32,2], index: 12, kind: output, shape index: {2}]
  %13 = xla_tuple %s10, %s11, %s12
  %s14 = sld [smem:[#allocation0]]
  $region66: #{stp_cell_forward.1} parent=0
    _
  %s16 = ssub.s32 1, %s14
  %s17 = scalar_select 0, %s16, %s14
  // Predicated region
  $region2: #{stp_cell_forward.1} parent=0 // pred_check
    _
  $region3: #{stp_cell_forward.1} parent=0 // pred_check_branch
    %19 = sbr.rel (0) target = $region5
  $region4: #{stp_cell_forward.1} parent=0 // pred_region
    _
  $region5: #{stp_cell_forward.1} parent=0 // pred_fallthru
    _
  // Predicated region
  $region6: #{stp_cell_forward.1} parent=0 // pred_check
    _
  $region7: #{stp_cell_forward.1} parent=0 // pred_check_branch
    %21 = sbr.rel (0) target = $region9
  $region8: #{stp_cell_forward.1} parent=0 // pred_region
    _
  $region9: #{stp_cell_forward.1} parent=0 // pred_fallthru
    _
  // Predicated region
  $region10: #{stp_cell_forward.1} parent=0 // pred_check
    _
  $region11: #{stp_cell_forward.1} parent=0 // pred_check_branch
    %23 = sbr.rel (0) target = $region13
  $region12: #{stp_cell_forward.1} parent=0 // pred_region
    _
  $region13: #{stp_cell_forward.1} parent=0 // pred_fallthru
    _
  // Predicated region
  $region14: #{stp_cell_forward.1} parent=0 // pred_check
    _
  $region15: #{stp_cell_forward.1} parent=0 // pred_check_branch
    %25 = sbr.rel (0) target = $region17
  $region16: #{stp_cell_forward.1} parent=0 // pred_region
    _
  $region17: #{stp_cell_forward.1} parent=0 // pred_fallthru
    _
  // Predicated region
  $region18: #{stp_cell_forward.1} parent=0 // pred_check
    _
  $region19: #{stp_cell_forward.1} parent=0 // pred_check_branch
    %27 = sbr.rel (0) target = $region21
  $region20: #{stp_cell_forward.1} parent=0 // pred_region
    _
  $region21: #{stp_cell_forward.1} parent=0 // pred_fallthru
    _
  // Predicated region
  $region22: #{stp_cell_forward.1} parent=0 // pred_check
    _
  $region23: #{stp_cell_forward.1} parent=0 // pred_check_branch
    %29 = sbr.rel (0) target = $region25
  $region24: #{stp_cell_forward.1} parent=0 // pred_region
    _
  $region25: #{stp_cell_forward.1} parent=0 // pred_fallthru
    _
  // Predicated region
  $region26: #{stp_cell_forward.1} parent=0 // pred_check
    _
  $region27: #{stp_cell_forward.1} parent=0 // pred_check_branch
    %31 = sbr.rel (0) target = $region29
  $region28: #{stp_cell_forward.1} parent=0 // pred_region
    _
  $region29: #{stp_cell_forward.1} parent=0 // pred_fallthru
    _
  // Predicated region
  $region30: #{stp_cell_forward.1} parent=0 // pred_check
    _
  $region31: #{stp_cell_forward.1} parent=0 // pred_check_branch
    %33 = sbr.rel (0) target = $region33
  $region32: #{stp_cell_forward.1} parent=0 // pred_region
    _
  $region33: #{stp_cell_forward.1} parent=0 // pred_fallthru
    _
  // Predicated region
  $region34: #{stp_cell_forward.1} parent=0 // pred_check
    _
  $region35: #{stp_cell_forward.1} parent=0 // pred_check_branch
    %35 = sbr.rel (0) target = $region37
  $region36: #{stp_cell_forward.1} parent=0 // pred_region
    _
  $region37: #{stp_cell_forward.1} parent=0 // pred_fallthru
    _
  // Predicated region
  $region38: #{stp_cell_forward.1} parent=0 // pred_check
    _
  $region39: #{stp_cell_forward.1} parent=0 // pred_check_branch
    %37 = sbr.rel (0) target = $region41
  $region40: #{stp_cell_forward.1} parent=0 // pred_region
    _
  $region41: #{stp_cell_forward.1} parent=0 // pred_fallthru
    _
  %v38 = vld [vmem:[%s3] sm:$0xff]
  %v39 = vld [vmem:[%s3 + $0x8] sm:$0xff]
  %v40 = vld [vmem:[%s3 + $0x10] sm:$0xff]
  %v41 = vld [vmem:[%s3 + $0x18] sm:$0xff]
  %v42 = vld [vmem:[%s3 + $0x20] sm:$0xff]
  %v43 = vld [vmem:[%s3 + $0x28] sm:$0xff]
  %v44 = vld [vmem:[%s3 + $0x30] sm:$0xff]
  %v45 = vld [vmem:[%s3 + $0x38] sm:$0xff]
  %v46 = vld [vmem:[%s3 + $0x40] sm:$0xff]
  %v47 = vld [vmem:[%s3 + $0x48] sm:$0xff]
  %v48 = vld [vmem:[%s3 + $0x50] sm:$0xff]
  %v49 = vld [vmem:[%s3 + $0x58] sm:$0xff]
  %v50 = vld [vmem:[%s3 + $0x60] sm:$0xff]
  %v51 = vld [vmem:[%s3 + $0x68] sm:$0xff]
  %v52 = vld [vmem:[%s3 + $0x70] sm:$0xff]
  %v53 = vld [vmem:[%s3 + $0x78] sm:$0xff]
  %v54 = vld [vmem:[%s3 + $0x80] sm:$0xff]
  %v55 = vld [vmem:[%s3 + $0x88] sm:$0xff]
  %v56 = vld [vmem:[%s3 + $0x90] sm:$0xff]
  %v57 = vld [vmem:[%s3 + $0x98] sm:$0xff]
  %v58 = vld [vmem:[%s3 + $0xa0] sm:$0xff]
  %v59 = vld [vmem:[%s3 + $0xa8] sm:$0xff]
  %v60 = vld [vmem:[%s3 + $0xb0] sm:$0xff]
  %v61 = vld [vmem:[%s3 + $0xb8] sm:$0xff]
  %v62 = vld [vmem:[%s3 + $0xc0] sm:$0xff]
  %v63 = vld [vmem:[%s3 + $0xc8] sm:$0xff]
  %v64 = vld [vmem:[%s3 + $0xd0] sm:$0xff]
  %v65 = vld [vmem:[%s3 + $0xd8] sm:$0xff]
  %v66 = vld [vmem:[%s3 + $0xe0] sm:$0xff]
  %v67 = vld [vmem:[%s3 + $0xe8] sm:$0xff]
  %v68 = vld [vmem:[%s3 + $0xf0] sm:$0xff]
  %v69 = vld [vmem:[%s3 + $0xf8] sm:$0xff]
  %v70 = vld [vmem:[%s3 + $0x100] sm:$0xff]
  %v71 = vld [vmem:[%s3 + $0x108] sm:$0xff]
  %v72 = vld [vmem:[%s3 + $0x110] sm:$0xff]
  %v73 = vld [vmem:[%s3 + $0x118] sm:$0xff]
  %v74 = vld [vmem:[%s3 + $0x120] sm:$0xff]
  %v75 = vld [vmem:[%s3 + $0x128] sm:$0xff]
  %v76 = vld [vmem:[%s3 + $0x130] sm:$0xff]
  %v77 = vld [vmem:[%s3 + $0x138] sm:$0xff]
  %v78 = vld [vmem:[%s3 + $0x140] sm:$0xff]
  %v79 = vld [vmem:[%s3 + $0x148] sm:$0xff]
  %v80 = vld [vmem:[%s3 + $0x150] sm:$0xff]
  %v81 = vld [vmem:[%s3 + $0x158] sm:$0xff]
  %v82 = vld [vmem:[%s3 + $0x160] sm:$0xff]
  %v83 = vld [vmem:[%s3 + $0x168] sm:$0xff]
  %v84 = vld [vmem:[%s3 + $0x170] sm:$0xff]
  %v85 = vld [vmem:[%s3 + $0x178] sm:$0xff]
  %v86 = vld [vmem:[%s3 + $0x180] sm:$0xff]
  %v87 = vld [vmem:[%s3 + $0x188] sm:$0xff]
  %v88 = vld [vmem:[%s3 + $0x190] sm:$0xff]
  %v89 = vld [vmem:[%s3 + $0x198] sm:$0xff]
  %v90 = vld [vmem:[%s3 + $0x1a0] sm:$0xff]
  %v91 = vld [vmem:[%s3 + $0x1a8] sm:$0xff]
  %v92 = vld [vmem:[%s3 + $0x1b0] sm:$0xff]
  %v93 = vld [vmem:[%s3 + $0x1b8] sm:$0xff]
  %v94 = vld [vmem:[%s3 + $0x1c0] sm:$0xff]
  %v95 = vld [vmem:[%s3 + $0x1c8] sm:$0xff]
  %v96 = vld [vmem:[%s3 + $0x1d0] sm:$0xff]
  %v97 = vld [vmem:[%s3 + $0x1d8] sm:$0xff]
  %v98 = vld [vmem:[%s3 + $0x1e0] sm:$0xff]
  %v99 = vld [vmem:[%s3 + $0x1e8] sm:$0xff]
  %v100 = vld [vmem:[%s3 + $0x1f0] sm:$0xff]
  %v101 = vld [vmem:[%s3 + $0x1f8] sm:$0xff]
  %v102 = vld [vmem:[%s3 + $0x200] sm:$0xff]
  %v103 = vld [vmem:[%s3 + $0x208] sm:$0xff]
  %v104 = vld [vmem:[%s3 + $0x210] sm:$0xff]
  %v105 = vld [vmem:[%s3 + $0x218] sm:$0xff]
  %v106 = vld [vmem:[%s3 + $0x220] sm:$0xff]
  %v107 = vld [vmem:[%s3 + $0x228] sm:$0xff]
  %v108 = vld [vmem:[%s3 + $0x230] sm:$0xff]
  %v109 = vld [vmem:[%s3 + $0x238] sm:$0xff]
  %v110 = vld [vmem:[%s3 + $0x240] sm:$0xff]
  %v111 = vld [vmem:[%s3 + $0x248] sm:$0xff]
  %v112 = vld [vmem:[%s3 + $0x250] sm:$0xff]
  %v113 = vld [vmem:[%s3 + $0x258] sm:$0xff]
  %v114 = vld [vmem:[%s3 + $0x260] sm:$0xff]
  %v115 = vld [vmem:[%s3 + $0x268] sm:$0xff]
  %v116 = vld [vmem:[%s3 + $0x270] sm:$0xff]
  %v117 = vld [vmem:[%s3 + $0x278] sm:$0xff]
  %v118 = vld [vmem:[%s3 + $0x280] sm:$0xff]
  %v119 = vld [vmem:[%s3 + $0x288] sm:$0xff]
  %v120 = vld [vmem:[%s3 + $0x290] sm:$0xff]
  %v121 = vld [vmem:[%s3 + $0x298] sm:$0xff]
  %v122 = vld [vmem:[%s3 + $0x2a0] sm:$0xff]
  %v123 = vld [vmem:[%s3 + $0x2a8] sm:$0xff]
  %v124 = vld [vmem:[%s3 + $0x2b0] sm:$0xff]
  %v125 = vld [vmem:[%s3 + $0x2b8] sm:$0xff]
  %v126 = vld [vmem:[%s3 + $0x2c0] sm:$0xff]
  %v127 = vld [vmem:[%s3 + $0x2c8] sm:$0xff]
  %v128 = vld [vmem:[%s3 + $0x2d0] sm:$0xff]
  %v129 = vld [vmem:[%s3 + $0x2d8] sm:$0xff]
  %v130 = vld [vmem:[%s3 + $0x2e0] sm:$0xff]
  %v131 = vld [vmem:[%s3 + $0x2e8] sm:$0xff]
  %v132 = vld [vmem:[%s3 + $0x2f0] sm:$0xff]
  %v133 = vld [vmem:[%s3 + $0x2f8] sm:$0xff]
  %v134 = vld [vmem:[%s3 + $0x300] sm:$0xff]
  %v135 = vld [vmem:[%s3 + $0x308] sm:$0xff]
  %v136 = vld [vmem:[%s3 + $0x310] sm:$0xff]
  %v137 = vld [vmem:[%s3 + $0x318] sm:$0xff]
  %v138 = vld [vmem:[%s3 + $0x320] sm:$0xff]
  %v139 = vld [vmem:[%s3 + $0x328] sm:$0xff]
  %v140 = vld [vmem:[%s3 + $0x330] sm:$0xff]
  %v141 = vld [vmem:[%s3 + $0x338] sm:$0xff]
  %v142 = vld [vmem:[%s3 + $0x340] sm:$0xff]
  %v143 = vld [vmem:[%s3 + $0x348] sm:$0xff]
  %v144 = vld [vmem:[%s3 + $0x350] sm:$0xff]
  %v145 = vld [vmem:[%s3 + $0x358] sm:$0xff]
  %v146 = vld [vmem:[%s3 + $0x360] sm:$0xff]
  %v147 = vld [vmem:[%s3 + $0x368] sm:$0xff]
  %v148 = vld [vmem:[%s3 + $0x370] sm:$0xff]
  %v149 = vld [vmem:[%s3 + $0x378] sm:$0xff]
  %v150 = vld [vmem:[%s3 + $0x380] sm:$0xff]
  %v151 = vld [vmem:[%s3 + $0x388] sm:$0xff]
  %v152 = vld [vmem:[%s3 + $0x390] sm:$0xff]
  %v153 = vld [vmem:[%s3 + $0x398] sm:$0xff]
  %v154 = vld [vmem:[%s3 + $0x3a0] sm:$0xff]
  %v155 = vld [vmem:[%s3 + $0x3a8] sm:$0xff]
  %v156 = vld [vmem:[%s3 + $0x3b0] sm:$0xff]
  %v157 = vld [vmem:[%s3 + $0x3b8] sm:$0xff]
  %v158 = vld [vmem:[%s3 + $0x3c0] sm:$0xff]
  %v159 = vld [vmem:[%s3 + $0x3c8] sm:$0xff]
  %v160 = vld [vmem:[%s3 + $0x3d0] sm:$0xff]
  %v161 = vld [vmem:[%s3 + $0x3d8] sm:$0xff]
  %v162 = vld [vmem:[%s3 + $0x3e0] sm:$0xff]
  %v163 = vld [vmem:[%s3 + $0x3e8] sm:$0xff]
  %v164 = vld [vmem:[%s3 + $0x3f0] sm:$0xff]
  %v165 = vld [vmem:[%s3 + $0x3f8] sm:$0xff]
  %v166 = vld [vmem:[%s4] sm:$0xff]
  %v167 = vld [vmem:[%s4 + $0x8] sm:$0xff]
  %v168 = vld [vmem:[%s4 + $0x10] sm:$0xff]
  %v169 = vld [vmem:[%s4 + $0x18] sm:$0xff]
  %v170 = vld [vmem:[%s4 + $0x20] sm:$0xff]
  %v171 = vld [vmem:[%s4 + $0x28] sm:$0xff]
  %v172 = vld [vmem:[%s4 + $0x30] sm:$0xff]
  %v173 = vld [vmem:[%s4 + $0x38] sm:$0xff]
  %v174 = vld [vmem:[%s4 + $0x40] sm:$0xff]
  %v175 = vld [vmem:[%s4 + $0x48] sm:$0xff]
  %v176 = vld [vmem:[%s4 + $0x50] sm:$0xff]
  %v177 = vld [vmem:[%s4 + $0x58] sm:$0xff]
  %v178 = vld [vmem:[%s4 + $0x60] sm:$0xff]
  %v179 = vld [vmem:[%s4 + $0x68] sm:$0xff]
  %v180 = vld [vmem:[%s4 + $0x70] sm:$0xff]
  %v181 = vld [vmem:[%s4 + $0x78] sm:$0xff]
  %v182 = vld [vmem:[%s4 + $0x80] sm:$0xff]
  %v183 = vld [vmem:[%s4 + $0x88] sm:$0xff]
  %v184 = vld [vmem:[%s4 + $0x90] sm:$0xff]
  %v185 = vld [vmem:[%s4 + $0x98] sm:$0xff]
  %v186 = vld [vmem:[%s4 + $0xa0] sm:$0xff]
  %v187 = vld [vmem:[%s4 + $0xa8] sm:$0xff]
  %v188 = vld [vmem:[%s4 + $0xb0] sm:$0xff]
  %v189 = vld [vmem:[%s4 + $0xb8] sm:$0xff]
  %v190 = vld [vmem:[%s4 + $0xc0] sm:$0xff]
  %v191 = vld [vmem:[%s4 + $0xc8] sm:$0xff]
  %v192 = vld [vmem:[%s4 + $0xd0] sm:$0xff]
  %v193 = vld [vmem:[%s4 + $0xd8] sm:$0xff]
  %v194 = vld [vmem:[%s4 + $0xe0] sm:$0xff]
  %v195 = vld [vmem:[%s4 + $0xe8] sm:$0xff]
  %v196 = vld [vmem:[%s4 + $0xf0] sm:$0xff]
  %v197 = vld [vmem:[%s4 + $0xf8] sm:$0xff]
  %v198 = vld [vmem:[%s4 + $0x100] sm:$0xff]
  %v199 = vld [vmem:[%s4 + $0x108] sm:$0xff]
  %v200 = vld [vmem:[%s4 + $0x110] sm:$0xff]
  %v201 = vld [vmem:[%s4 + $0x118] sm:$0xff]
  %v202 = vld [vmem:[%s4 + $0x120] sm:$0xff]
  %v203 = vld [vmem:[%s4 + $0x128] sm:$0xff]
  %v204 = vld [vmem:[%s4 + $0x130] sm:$0xff]
  %v205 = vld [vmem:[%s4 + $0x138] sm:$0xff]
  %v206 = vld [vmem:[%s4 + $0x140] sm:$0xff]
  %v207 = vld [vmem:[%s4 + $0x148] sm:$0xff]
  %v208 = vld [vmem:[%s4 + $0x150] sm:$0xff]
  %v209 = vld [vmem:[%s4 + $0x158] sm:$0xff]
  %v210 = vld [vmem:[%s4 + $0x160] sm:$0xff]
  %v211 = vld [vmem:[%s4 + $0x168] sm:$0xff]
  %v212 = vld [vmem:[%s4 + $0x170] sm:$0xff]
  %v213 = vld [vmem:[%s4 + $0x178] sm:$0xff]
  %v214 = vld [vmem:[%s4 + $0x180] sm:$0xff]
  %v215 = vld [vmem:[%s4 + $0x188] sm:$0xff]
  %v216 = vld [vmem:[%s4 + $0x190] sm:$0xff]
  %v217 = vld [vmem:[%s4 + $0x198] sm:$0xff]
  %v218 = vld [vmem:[%s4 + $0x1a0] sm:$0xff]
  %v219 = vld [vmem:[%s4 + $0x1a8] sm:$0xff]
  %v220 = vld [vmem:[%s4 + $0x1b0] sm:$0xff]
  %v221 = vld [vmem:[%s4 + $0x1b8] sm:$0xff]
  %v222 = vld [vmem:[%s4 + $0x1c0] sm:$0xff]
  %v223 = vld [vmem:[%s4 + $0x1c8] sm:$0xff]
  %v224 = vld [vmem:[%s4 + $0x1d0] sm:$0xff]
  %v225 = vld [vmem:[%s4 + $0x1d8] sm:$0xff]
  %v226 = vld [vmem:[%s4 + $0x1e0] sm:$0xff]
  %v227 = vld [vmem:[%s4 + $0x1e8] sm:$0xff]
  %v228 = vld [vmem:[%s4 + $0x1f0] sm:$0xff]
  %v229 = vld [vmem:[%s4 + $0x1f8] sm:$0xff]
  %v230 = vld [vmem:[%s4 + $0x200] sm:$0xff]
  %v231 = vld [vmem:[%s4 + $0x208] sm:$0xff]
  %v232 = vld [vmem:[%s4 + $0x210] sm:$0xff]
  %v233 = vld [vmem:[%s4 + $0x218] sm:$0xff]
  %v234 = vld [vmem:[%s4 + $0x220] sm:$0xff]
  %v235 = vld [vmem:[%s4 + $0x228] sm:$0xff]
  %v236 = vld [vmem:[%s4 + $0x230] sm:$0xff]
  %v237 = vld [vmem:[%s4 + $0x238] sm:$0xff]
  %v238 = vld [vmem:[%s4 + $0x240] sm:$0xff]
  %v239 = vld [vmem:[%s4 + $0x248] sm:$0xff]
  %v240 = vld [vmem:[%s4 + $0x250] sm:$0xff]
  %v241 = vld [vmem:[%s4 + $0x258] sm:$0xff]
  %v242 = vld [vmem:[%s4 + $0x260] sm:$0xff]
  %v243 = vld [vmem:[%s4 + $0x268] sm:$0xff]
  %v244 = vld [vmem:[%s4 + $0x270] sm:$0xff]
  %v245 = vld [vmem:[%s4 + $0x278] sm:$0xff]
  %v246 = vld [vmem:[%s4 + $0x280] sm:$0xff]
  %v247 = vld [vmem:[%s4 + $0x288] sm:$0xff]
  %v248 = vld [vmem:[%s4 + $0x290] sm:$0xff]
  %v249 = vld [vmem:[%s4 + $0x298] sm:$0xff]
  %v250 = vld [vmem:[%s4 + $0x2a0] sm:$0xff]
  %v251 = vld [vmem:[%s4 + $0x2a8] sm:$0xff]
  %v252 = vld [vmem:[%s4 + $0x2b0] sm:$0xff]
  %v253 = vld [vmem:[%s4 + $0x2b8] sm:$0xff]
  %v254 = vld [vmem:[%s4 + $0x2c0] sm:$0xff]
  %v255 = vld [vmem:[%s4 + $0x2c8] sm:$0xff]
  %v256 = vld [vmem:[%s4 + $0x2d0] sm:$0xff]
  %v257 = vld [vmem:[%s4 + $0x2d8] sm:$0xff]
  %v258 = vld [vmem:[%s4 + $0x2e0] sm:$0xff]
  %v259 = vld [vmem:[%s4 + $0x2e8] sm:$0xff]
  %v260 = vld [vmem:[%s4 + $0x2f0] sm:$0xff]
  %v261 = vld [vmem:[%s4 + $0x2f8] sm:$0xff]
  %v262 = vld [vmem:[%s4 + $0x300] sm:$0xff]
  %v263 = vld [vmem:[%s4 + $0x308] sm:$0xff]
  %v264 = vld [vmem:[%s4 + $0x310] sm:$0xff]
  %v265 = vld [vmem:[%s4 + $0x318] sm:$0xff]
  %v266 = vld [vmem:[%s4 + $0x320] sm:$0xff]
  %v267 = vld [vmem:[%s4 + $0x328] sm:$0xff]
  %v268 = vld [vmem:[%s4 + $0x330] sm:$0xff]
  %v269 = vld [vmem:[%s4 + $0x338] sm:$0xff]
  %v270 = vld [vmem:[%s4 + $0x340] sm:$0xff]
  %v271 = vld [vmem:[%s4 + $0x348] sm:$0xff]
  %v272 = vld [vmem:[%s4 + $0x350] sm:$0xff]
  %v273 = vld [vmem:[%s4 + $0x358] sm:$0xff]
  %v274 = vld [vmem:[%s4 + $0x360] sm:$0xff]
  %v275 = vld [vmem:[%s4 + $0x368] sm:$0xff]
  %v276 = vld [vmem:[%s4 + $0x370] sm:$0xff]
  %v277 = vld [vmem:[%s4 + $0x378] sm:$0xff]
  %v278 = vld [vmem:[%s4 + $0x380] sm:$0xff]
  %v279 = vld [vmem:[%s4 + $0x388] sm:$0xff]
  %v280 = vld [vmem:[%s4 + $0x390] sm:$0xff]
  %v281 = vld [vmem:[%s4 + $0x398] sm:$0xff]
  %v282 = vld [vmem:[%s4 + $0x3a0] sm:$0xff]
  %v283 = vld [vmem:[%s4 + $0x3a8] sm:$0xff]
  %v284 = vld [vmem:[%s4 + $0x3b0] sm:$0xff]
  %v285 = vld [vmem:[%s4 + $0x3b8] sm:$0xff]
  %v286 = vld [vmem:[%s4 + $0x3c0] sm:$0xff]
  %v287 = vld [vmem:[%s4 + $0x3c8] sm:$0xff]
  %v288 = vld [vmem:[%s4 + $0x3d0] sm:$0xff]
  %v289 = vld [vmem:[%s4 + $0x3d8] sm:$0xff]
  %v290 = vld [vmem:[%s4 + $0x3e0] sm:$0xff]
  %v291 = vld [vmem:[%s4 + $0x3e8] sm:$0xff]
  %v292 = vld [vmem:[%s4 + $0x3f0] sm:$0xff]
  %v293 = vld [vmem:[%s4 + $0x3f8] sm:$0xff]
  %v294 = vld [vmem:[%s0] sm:$0xff]
  %v295 = vld [vmem:[%s0 + $0x8] sm:$0xff]
  %v296 = vld [vmem:[%s0 + $0x10] sm:$0xff]
  %v297 = vld [vmem:[%s0 + $0x18] sm:$0xff]
  %v298 = vld [vmem:[%s5] sm:$0xff]
  %v299 = vld [vmem:[%s5 + $0x8] sm:$0xff]
  %v300 = vld [vmem:[%s5 + $0x10] sm:$0xff]
  %v301 = vld [vmem:[%s5 + $0x18] sm:$0xff]
  %v302 = vld [vmem:[%s5 + $0x20] sm:$0xff]
  %v303 = vld [vmem:[%s5 + $0x28] sm:$0xff]
  %v304 = vld [vmem:[%s5 + $0x30] sm:$0xff]
  %v305 = vld [vmem:[%s5 + $0x38] sm:$0xff]
  %v306 = vld [vmem:[%s5 + $0x40] sm:$0xff]
  %v307 = vld [vmem:[%s5 + $0x48] sm:$0xff]
  %v308 = vld [vmem:[%s5 + $0x50] sm:$0xff]
  %v309 = vld [vmem:[%s5 + $0x58] sm:$0xff]
  %v310 = vld [vmem:[%s5 + $0x60] sm:$0xff]
  %v311 = vld [vmem:[%s5 + $0x68] sm:$0xff]
  %v312 = vld [vmem:[%s5 + $0x70] sm:$0xff]
  %v313 = vld [vmem:[%s5 + $0x78] sm:$0xff]
  %v314 = vld [vmem:[%s5 + $0x80] sm:$0xff]
  %v315 = vld [vmem:[%s5 + $0x88] sm:$0xff]
  %v316 = vld [vmem:[%s5 + $0x90] sm:$0xff]
  %v317 = vld [vmem:[%s5 + $0x98] sm:$0xff]
  %v318 = vld [vmem:[%s5 + $0xa0] sm:$0xff]
  %v319 = vld [vmem:[%s5 + $0xa8] sm:$0xff]
  %v320 = vld [vmem:[%s5 + $0xb0] sm:$0xff]
  %v321 = vld [vmem:[%s5 + $0xb8] sm:$0xff]
  %v322 = vld [vmem:[%s5 + $0xc0] sm:$0xff]
  %v323 = vld [vmem:[%s5 + $0xc8] sm:$0xff]
  %v324 = vld [vmem:[%s5 + $0xd0] sm:$0xff]
  %v325 = vld [vmem:[%s5 + $0xd8] sm:$0xff]
  %v326 = vld [vmem:[%s5 + $0xe0] sm:$0xff]
  %v327 = vld [vmem:[%s5 + $0xe8] sm:$0xff]
  %v328 = vld [vmem:[%s5 + $0xf0] sm:$0xff]
  %v329 = vld [vmem:[%s5 + $0xf8] sm:$0xff]
  %v330 = vld [vmem:[%s5 + $0x100] sm:$0xff]
  %v331 = vld [vmem:[%s5 + $0x108] sm:$0xff]
  %v332 = vld [vmem:[%s5 + $0x110] sm:$0xff]
  %v333 = vld [vmem:[%s5 + $0x118] sm:$0xff]
  %v334 = vld [vmem:[%s5 + $0x120] sm:$0xff]
  %v335 = vld [vmem:[%s5 + $0x128] sm:$0xff]
  %v336 = vld [vmem:[%s5 + $0x130] sm:$0xff]
  %v337 = vld [vmem:[%s5 + $0x138] sm:$0xff]
  %v338 = vld [vmem:[%s5 + $0x140] sm:$0xff]
  %v339 = vld [vmem:[%s5 + $0x148] sm:$0xff]
  %v340 = vld [vmem:[%s5 + $0x150] sm:$0xff]
  %v341 = vld [vmem:[%s5 + $0x158] sm:$0xff]
  %v342 = vld [vmem:[%s5 + $0x160] sm:$0xff]
  %v343 = vld [vmem:[%s5 + $0x168] sm:$0xff]
  %v344 = vld [vmem:[%s5 + $0x170] sm:$0xff]
  %v345 = vld [vmem:[%s5 + $0x178] sm:$0xff]
  %v346 = vld [vmem:[%s5 + $0x180] sm:$0xff]
  %v347 = vld [vmem:[%s5 + $0x188] sm:$0xff]
  %v348 = vld [vmem:[%s5 + $0x190] sm:$0xff]
  %v349 = vld [vmem:[%s5 + $0x198] sm:$0xff]
  %v350 = vld [vmem:[%s5 + $0x1a0] sm:$0xff]
  %v351 = vld [vmem:[%s5 + $0x1a8] sm:$0xff]
  %v352 = vld [vmem:[%s5 + $0x1b0] sm:$0xff]
  %v353 = vld [vmem:[%s5 + $0x1b8] sm:$0xff]
  %v354 = vld [vmem:[%s5 + $0x1c0] sm:$0xff]
  %v355 = vld [vmem:[%s5 + $0x1c8] sm:$0xff]
  %v356 = vld [vmem:[%s5 + $0x1d0] sm:$0xff]
  %v357 = vld [vmem:[%s5 + $0x1d8] sm:$0xff]
  %v358 = vld [vmem:[%s5 + $0x1e0] sm:$0xff]
  %v359 = vld [vmem:[%s5 + $0x1e8] sm:$0xff]
  %v360 = vld [vmem:[%s5 + $0x1f0] sm:$0xff]
  %v361 = vld [vmem:[%s5 + $0x1f8] sm:$0xff]
  %v362 = vld [vmem:[%s5 + $0x200] sm:$0xff]
  %v363 = vld [vmem:[%s5 + $0x208] sm:$0xff]
  %v364 = vld [vmem:[%s5 + $0x210] sm:$0xff]
  %v365 = vld [vmem:[%s5 + $0x218] sm:$0xff]
  %v366 = vld [vmem:[%s5 + $0x220] sm:$0xff]
  %v367 = vld [vmem:[%s5 + $0x228] sm:$0xff]
  %v368 = vld [vmem:[%s5 + $0x230] sm:$0xff]
  %v369 = vld [vmem:[%s5 + $0x238] sm:$0xff]
  %v370 = vld [vmem:[%s5 + $0x240] sm:$0xff]
  %v371 = vld [vmem:[%s5 + $0x248] sm:$0xff]
  %v372 = vld [vmem:[%s5 + $0x250] sm:$0xff]
  %v373 = vld [vmem:[%s5 + $0x258] sm:$0xff]
  %v374 = vld [vmem:[%s5 + $0x260] sm:$0xff]
  %v375 = vld [vmem:[%s5 + $0x268] sm:$0xff]
  %v376 = vld [vmem:[%s5 + $0x270] sm:$0xff]
  %v377 = vld [vmem:[%s5 + $0x278] sm:$0xff]
  %v378 = vld [vmem:[%s5 + $0x280] sm:$0xff]
  %v379 = vld [vmem:[%s5 + $0x288] sm:$0xff]
  %v380 = vld [vmem:[%s5 + $0x290] sm:$0xff]
  %v381 = vld [vmem:[%s5 + $0x298] sm:$0xff]
  %v382 = vld [vmem:[%s5 + $0x2a0] sm:$0xff]
  %v383 = vld [vmem:[%s5 + $0x2a8] sm:$0xff]
  %v384 = vld [vmem:[%s5 + $0x2b0] sm:$0xff]
  %v385 = vld [vmem:[%s5 + $0x2b8] sm:$0xff]
  %v386 = vld [vmem:[%s5 + $0x2c0] sm:$0xff]
  %v387 = vld [vmem:[%s5 + $0x2c8] sm:$0xff]
  %v388 = vld [vmem:[%s5 + $0x2d0] sm:$0xff]
  %v389 = vld [vmem:[%s5 + $0x2d8] sm:$0xff]
  %v390 = vld [vmem:[%s5 + $0x2e0] sm:$0xff]
  %v391 = vld [vmem:[%s5 + $0x2e8] sm:$0xff]
  %v392 = vld [vmem:[%s5 + $0x2f0] sm:$0xff]
  %v393 = vld [vmem:[%s5 + $0x2f8] sm:$0xff]
  %v394 = vld [vmem:[%s5 + $0x300] sm:$0xff]
  %v395 = vld [vmem:[%s5 + $0x308] sm:$0xff]
  %v396 = vld [vmem:[%s5 + $0x310] sm:$0xff]
  %v397 = vld [vmem:[%s5 + $0x318] sm:$0xff]
  %v398 = vld [vmem:[%s5 + $0x320] sm:$0xff]
  %v399 = vld [vmem:[%s5 + $0x328] sm:$0xff]
  %v400 = vld [vmem:[%s5 + $0x330] sm:$0xff]
  %v401 = vld [vmem:[%s5 + $0x338] sm:$0xff]
  %v402 = vld [vmem:[%s5 + $0x340] sm:$0xff]
  %v403 = vld [vmem:[%s5 + $0x348] sm:$0xff]
  %v404 = vld [vmem:[%s5 + $0x350] sm:$0xff]
  %v405 = vld [vmem:[%s5 + $0x358] sm:$0xff]
  %v406 = vld [vmem:[%s5 + $0x360] sm:$0xff]
  %v407 = vld [vmem:[%s5 + $0x368] sm:$0xff]
  %v408 = vld [vmem:[%s5 + $0x370] sm:$0xff]
  %v409 = vld [vmem:[%s5 + $0x378] sm:$0xff]
  %v410 = vld [vmem:[%s5 + $0x380] sm:$0xff]
  %v411 = vld [vmem:[%s5 + $0x388] sm:$0xff]
  %v412 = vld [vmem:[%s5 + $0x390] sm:$0xff]
  %v413 = vld [vmem:[%s5 + $0x398] sm:$0xff]
  %v414 = vld [vmem:[%s5 + $0x3a0] sm:$0xff]
  %v415 = vld [vmem:[%s5 + $0x3a8] sm:$0xff]
  %v416 = vld [vmem:[%s5 + $0x3b0] sm:$0xff]
  %v417 = vld [vmem:[%s5 + $0x3b8] sm:$0xff]
  %v418 = vld [vmem:[%s5 + $0x3c0] sm:$0xff]
  %v419 = vld [vmem:[%s5 + $0x3c8] sm:$0xff]
  %v420 = vld [vmem:[%s5 + $0x3d0] sm:$0xff]
  %v421 = vld [vmem:[%s5 + $0x3d8] sm:$0xff]
  %v422 = vld [vmem:[%s5 + $0x3e0] sm:$0xff]
  %v423 = vld [vmem:[%s5 + $0x3e8] sm:$0xff]
  %v424 = vld [vmem:[%s5 + $0x3f0] sm:$0xff]
  %v425 = vld [vmem:[%s5 + $0x3f8] sm:$0xff]
  %427 = vset.pattern.permute.xlu0 0
  %428 = vperm.xlu0 %427, %v298
  %v429 = vpop.permute.xlu0 %428
  %432 = vset.pattern.permute.xlu0 0
  %433 = vperm.xlu0 %432, %v299
  %v434 = vpop.permute.xlu0 %433
  %437 = vset.pattern.permute.xlu0 0
  %438 = vperm.xlu0 %437, %v300
  %v439 = vpop.permute.xlu0 %438
  %442 = vset.pattern.permute.xlu0 0
  %443 = vperm.xlu0 %442, %v301
  %v444 = vpop.permute.xlu0 %443
  %447 = vset.pattern.permute.xlu0 0
  %448 = vperm.xlu0 %447, %v302
  %v449 = vpop.permute.xlu0 %448
  %452 = vset.pattern.permute.xlu0 0
  %453 = vperm.xlu0 %452, %v303
  %v454 = vpop.permute.xlu0 %453
  %457 = vset.pattern.permute.xlu0 0
  %458 = vperm.xlu0 %457, %v304
  %v459 = vpop.permute.xlu0 %458
  %462 = vset.pattern.permute.xlu0 0
  %463 = vperm.xlu0 %462, %v305
  %v464 = vpop.permute.xlu0 %463
  %467 = vset.pattern.permute.xlu0 0
  %468 = vperm.xlu0 %467, %v306
  %v469 = vpop.permute.xlu0 %468
  %472 = vset.pattern.permute.xlu0 0
  %473 = vperm.xlu0 %472, %v307
  %v474 = vpop.permute.xlu0 %473
  %477 = vset.pattern.permute.xlu0 0
  %478 = vperm.xlu0 %477, %v308
  %v479 = vpop.permute.xlu0 %478
  %482 = vset.pattern.permute.xlu0 0
  %483 = vperm.xlu0 %482, %v309
  %v484 = vpop.permute.xlu0 %483
  %487 = vset.pattern.permute.xlu0 0
  %488 = vperm.xlu0 %487, %v310
  %v489 = vpop.permute.xlu0 %488
  %492 = vset.pattern.permute.xlu0 0
  %493 = vperm.xlu0 %492, %v311
  %v494 = vpop.permute.xlu0 %493
  %497 = vset.pattern.permute.xlu0 0
  %498 = vperm.xlu0 %497, %v312
  %v499 = vpop.permute.xlu0 %498
  %502 = vset.pattern.permute.xlu0 0
  %503 = vperm.xlu0 %502, %v313
  %v504 = vpop.permute.xlu0 %503
  %507 = vset.pattern.permute.xlu0 0
  %508 = vperm.xlu0 %507, %v314
  %v509 = vpop.permute.xlu0 %508
  %512 = vset.pattern.permute.xlu0 0
  %513 = vperm.xlu0 %512, %v315
  %v514 = vpop.permute.xlu0 %513
  %517 = vset.pattern.permute.xlu0 0
  %518 = vperm.xlu0 %517, %v316
  %v519 = vpop.permute.xlu0 %518
  %522 = vset.pattern.permute.xlu0 0
  %523 = vperm.xlu0 %522, %v317
  %v524 = vpop.permute.xlu0 %523
  %527 = vset.pattern.permute.xlu0 0
  %528 = vperm.xlu0 %527, %v318
  %v529 = vpop.permute.xlu0 %528
  %532 = vset.pattern.permute.xlu0 0
  %533 = vperm.xlu0 %532, %v319
  %v534 = vpop.permute.xlu0 %533
  %537 = vset.pattern.permute.xlu0 0
  %538 = vperm.xlu0 %537, %v320
  %v539 = vpop.permute.xlu0 %538
  %542 = vset.pattern.permute.xlu0 0
  %543 = vperm.xlu0 %542, %v321
  %v544 = vpop.permute.xlu0 %543
  %547 = vset.pattern.permute.xlu0 0
  %548 = vperm.xlu0 %547, %v322
  %v549 = vpop.permute.xlu0 %548
  %552 = vset.pattern.permute.xlu0 0
  %553 = vperm.xlu0 %552, %v323
  %v554 = vpop.permute.xlu0 %553
  %557 = vset.pattern.permute.xlu0 0
  %558 = vperm.xlu0 %557, %v324
  %v559 = vpop.permute.xlu0 %558
  %562 = vset.pattern.permute.xlu0 0
  %563 = vperm.xlu0 %562, %v325
  %v564 = vpop.permute.xlu0 %563
  %567 = vset.pattern.permute.xlu0 0
  %568 = vperm.xlu0 %567, %v326
  %v569 = vpop.permute.xlu0 %568
  %572 = vset.pattern.permute.xlu0 0
  %573 = vperm.xlu0 %572, %v327
  %v574 = vpop.permute.xlu0 %573
  %577 = vset.pattern.permute.xlu0 0
  %578 = vperm.xlu0 %577, %v328
  %v579 = vpop.permute.xlu0 %578
  %582 = vset.pattern.permute.xlu0 0
  %583 = vperm.xlu0 %582, %v329
  %v584 = vpop.permute.xlu0 %583
  %587 = vset.pattern.permute.xlu0 0
  %588 = vperm.xlu0 %587, %v330
  %v589 = vpop.permute.xlu0 %588
  %592 = vset.pattern.permute.xlu0 0
  %593 = vperm.xlu0 %592, %v331
  %v594 = vpop.permute.xlu0 %593
  %597 = vset.pattern.permute.xlu0 0
  %598 = vperm.xlu0 %597, %v332
  %v599 = vpop.permute.xlu0 %598
  %602 = vset.pattern.permute.xlu0 0
  %603 = vperm.xlu0 %602, %v333
  %v604 = vpop.permute.xlu0 %603
  %607 = vset.pattern.permute.xlu0 0
  %608 = vperm.xlu0 %607, %v334
  %v609 = vpop.permute.xlu0 %608
  %612 = vset.pattern.permute.xlu0 0
  %613 = vperm.xlu0 %612, %v335
  %v614 = vpop.permute.xlu0 %613
  %617 = vset.pattern.permute.xlu0 0
  %618 = vperm.xlu0 %617, %v336
  %v619 = vpop.permute.xlu0 %618
  %622 = vset.pattern.permute.xlu0 0
  %623 = vperm.xlu0 %622, %v337
  %v624 = vpop.permute.xlu0 %623
  %627 = vset.pattern.permute.xlu0 0
  %628 = vperm.xlu0 %627, %v338
  %v629 = vpop.permute.xlu0 %628
  %632 = vset.pattern.permute.xlu0 0
  %633 = vperm.xlu0 %632, %v339
  %v634 = vpop.permute.xlu0 %633
  %637 = vset.pattern.permute.xlu0 0
  %638 = vperm.xlu0 %637, %v340
  %v639 = vpop.permute.xlu0 %638
  %642 = vset.pattern.permute.xlu0 0
  %643 = vperm.xlu0 %642, %v341
  %v644 = vpop.permute.xlu0 %643
  %647 = vset.pattern.permute.xlu0 0
  %648 = vperm.xlu0 %647, %v342
  %v649 = vpop.permute.xlu0 %648
  %652 = vset.pattern.permute.xlu0 0
  %653 = vperm.xlu0 %652, %v343
  %v654 = vpop.permute.xlu0 %653
  %657 = vset.pattern.permute.xlu0 0
  %658 = vperm.xlu0 %657, %v344
  %v659 = vpop.permute.xlu0 %658
  %662 = vset.pattern.permute.xlu0 0
  %663 = vperm.xlu0 %662, %v345
  %v664 = vpop.permute.xlu0 %663
  %667 = vset.pattern.permute.xlu0 0
  %668 = vperm.xlu0 %667, %v346
  %v669 = vpop.permute.xlu0 %668
  %672 = vset.pattern.permute.xlu0 0
  %673 = vperm.xlu0 %672, %v347
  %v674 = vpop.permute.xlu0 %673
  %677 = vset.pattern.permute.xlu0 0
  %678 = vperm.xlu0 %677, %v348
  %v679 = vpop.permute.xlu0 %678
  %682 = vset.pattern.permute.xlu0 0
  %683 = vperm.xlu0 %682, %v349
  %v684 = vpop.permute.xlu0 %683
  %687 = vset.pattern.permute.xlu0 0
  %688 = vperm.xlu0 %687, %v350
  %v689 = vpop.permute.xlu0 %688
  %692 = vset.pattern.permute.xlu0 0
  %693 = vperm.xlu0 %692, %v351
  %v694 = vpop.permute.xlu0 %693
  %697 = vset.pattern.permute.xlu0 0
  %698 = vperm.xlu0 %697, %v352
  %v699 = vpop.permute.xlu0 %698
  %702 = vset.pattern.permute.xlu0 0
  %703 = vperm.xlu0 %702, %v353
  %v704 = vpop.permute.xlu0 %703
  %707 = vset.pattern.permute.xlu0 0
  %708 = vperm.xlu0 %707, %v354
  %v709 = vpop.permute.xlu0 %708
  %712 = vset.pattern.permute.xlu0 0
  %713 = vperm.xlu0 %712, %v355
  %v714 = vpop.permute.xlu0 %713
  %717 = vset.pattern.permute.xlu0 0
  %718 = vperm.xlu0 %717, %v356
  %v719 = vpop.permute.xlu0 %718
  %722 = vset.pattern.permute.xlu0 0
  %723 = vperm.xlu0 %722, %v357
  %v724 = vpop.permute.xlu0 %723
  %727 = vset.pattern.permute.xlu0 0
  %728 = vperm.xlu0 %727, %v358
  %v729 = vpop.permute.xlu0 %728
  %732 = vset.pattern.permute.xlu0 0
  %733 = vperm.xlu0 %732, %v359
  %v734 = vpop.permute.xlu0 %733
  %737 = vset.pattern.permute.xlu0 0
  %738 = vperm.xlu0 %737, %v360
  %v739 = vpop.permute.xlu0 %738
  %742 = vset.pattern.permute.xlu0 0
  %743 = vperm.xlu0 %742, %v361
  %v744 = vpop.permute.xlu0 %743
  %747 = vset.pattern.permute.xlu0 0
  %748 = vperm.xlu0 %747, %v362
  %v749 = vpop.permute.xlu0 %748
  %752 = vset.pattern.permute.xlu0 0
  %753 = vperm.xlu0 %752, %v363
  %v754 = vpop.permute.xlu0 %753
  %757 = vset.pattern.permute.xlu0 0
  %758 = vperm.xlu0 %757, %v364
  %v759 = vpop.permute.xlu0 %758
  %762 = vset.pattern.permute.xlu0 0
  %763 = vperm.xlu0 %762, %v365
  %v764 = vpop.permute.xlu0 %763
  %767 = vset.pattern.permute.xlu0 0
  %768 = vperm.xlu0 %767, %v366
  %v769 = vpop.permute.xlu0 %768
  %772 = vset.pattern.permute.xlu0 0
  %773 = vperm.xlu0 %772, %v367
  %v774 = vpop.permute.xlu0 %773
  %777 = vset.pattern.permute.xlu0 0
  %778 = vperm.xlu0 %777, %v368
  %v779 = vpop.permute.xlu0 %778
  %782 = vset.pattern.permute.xlu0 0
  %783 = vperm.xlu0 %782, %v369
  %v784 = vpop.permute.xlu0 %783
  %787 = vset.pattern.permute.xlu0 0
  %788 = vperm.xlu0 %787, %v370
  %v789 = vpop.permute.xlu0 %788
  %792 = vset.pattern.permute.xlu0 0
  %793 = vperm.xlu0 %792, %v371
  %v794 = vpop.permute.xlu0 %793
  %797 = vset.pattern.permute.xlu0 0
  %798 = vperm.xlu0 %797, %v372
  %v799 = vpop.permute.xlu0 %798
  %802 = vset.pattern.permute.xlu0 0
  %803 = vperm.xlu0 %802, %v373
  %v804 = vpop.permute.xlu0 %803
  %807 = vset.pattern.permute.xlu0 0
  %808 = vperm.xlu0 %807, %v374
  %v809 = vpop.permute.xlu0 %808
  %812 = vset.pattern.permute.xlu0 0
  %813 = vperm.xlu0 %812, %v375
  %v814 = vpop.permute.xlu0 %813
  %817 = vset.pattern.permute.xlu0 0
  %818 = vperm.xlu0 %817, %v376
  %v819 = vpop.permute.xlu0 %818
  %822 = vset.pattern.permute.xlu0 0
  %823 = vperm.xlu0 %822, %v377
  %v824 = vpop.permute.xlu0 %823
  %827 = vset.pattern.permute.xlu0 0
  %828 = vperm.xlu0 %827, %v378
  %v829 = vpop.permute.xlu0 %828
  %832 = vset.pattern.permute.xlu0 0
  %833 = vperm.xlu0 %832, %v379
  %v834 = vpop.permute.xlu0 %833
  %837 = vset.pattern.permute.xlu0 0
  %838 = vperm.xlu0 %837, %v380
  %v839 = vpop.permute.xlu0 %838
  %842 = vset.pattern.permute.xlu0 0
  %843 = vperm.xlu0 %842, %v381
  %v844 = vpop.permute.xlu0 %843
  %847 = vset.pattern.permute.xlu0 0
  %848 = vperm.xlu0 %847, %v382
  %v849 = vpop.permute.xlu0 %848
  %852 = vset.pattern.permute.xlu0 0
  %853 = vperm.xlu0 %852, %v383
  %v854 = vpop.permute.xlu0 %853
  %857 = vset.pattern.permute.xlu0 0
  %858 = vperm.xlu0 %857, %v384
  %v859 = vpop.permute.xlu0 %858
  %862 = vset.pattern.permute.xlu0 0
  %863 = vperm.xlu0 %862, %v385
  %v864 = vpop.permute.xlu0 %863
  %867 = vset.pattern.permute.xlu0 0
  %868 = vperm.xlu0 %867, %v386
  %v869 = vpop.permute.xlu0 %868
  %872 = vset.pattern.permute.xlu0 0
  %873 = vperm.xlu0 %872, %v387
  %v874 = vpop.permute.xlu0 %873
  %877 = vset.pattern.permute.xlu0 0
  %878 = vperm.xlu0 %877, %v388
  %v879 = vpop.permute.xlu0 %878
  %882 = vset.pattern.permute.xlu0 0
  %883 = vperm.xlu0 %882, %v389
  %v884 = vpop.permute.xlu0 %883
  %887 = vset.pattern.permute.xlu0 0
  %888 = vperm.xlu0 %887, %v390
  %v889 = vpop.permute.xlu0 %888
  %892 = vset.pattern.permute.xlu0 0
  %893 = vperm.xlu0 %892, %v391
  %v894 = vpop.permute.xlu0 %893
  %897 = vset.pattern.permute.xlu0 0
  %898 = vperm.xlu0 %897, %v392
  %v899 = vpop.permute.xlu0 %898
  %902 = vset.pattern.permute.xlu0 0
  %903 = vperm.xlu0 %902, %v393
  %v904 = vpop.permute.xlu0 %903
  %907 = vset.pattern.permute.xlu0 0
  %908 = vperm.xlu0 %907, %v394
  %v909 = vpop.permute.xlu0 %908
  %912 = vset.pattern.permute.xlu0 0
  %913 = vperm.xlu0 %912, %v395
  %v914 = vpop.permute.xlu0 %913
  %917 = vset.pattern.permute.xlu0 0
  %918 = vperm.xlu0 %917, %v396
  %v919 = vpop.permute.xlu0 %918
  %922 = vset.pattern.permute.xlu0 0
  %923 = vperm.xlu0 %922, %v397
  %v924 = vpop.permute.xlu0 %923
  %927 = vset.pattern.permute.xlu0 0
  %928 = vperm.xlu0 %927, %v398
  %v929 = vpop.permute.xlu0 %928
  %932 = vset.pattern.permute.xlu0 0
  %933 = vperm.xlu0 %932, %v399
  %v934 = vpop.permute.xlu0 %933
  %937 = vset.pattern.permute.xlu0 0
  %938 = vperm.xlu0 %937, %v400
  %v939 = vpop.permute.xlu0 %938
  %942 = vset.pattern.permute.xlu0 0
  %943 = vperm.xlu0 %942, %v401
  %v944 = vpop.permute.xlu0 %943
  %947 = vset.pattern.permute.xlu0 0
  %948 = vperm.xlu0 %947, %v402
  %v949 = vpop.permute.xlu0 %948
  %952 = vset.pattern.permute.xlu0 0
  %953 = vperm.xlu0 %952, %v403
  %v954 = vpop.permute.xlu0 %953
  %957 = vset.pattern.permute.xlu0 0
  %958 = vperm.xlu0 %957, %v404
  %v959 = vpop.permute.xlu0 %958
  %962 = vset.pattern.permute.xlu0 0
  %963 = vperm.xlu0 %962, %v405
  %v964 = vpop.permute.xlu0 %963
  %967 = vset.pattern.permute.xlu0 0
  %968 = vperm.xlu0 %967, %v406
  %v969 = vpop.permute.xlu0 %968
  %972 = vset.pattern.permute.xlu0 0
  %973 = vperm.xlu0 %972, %v407
  %v974 = vpop.permute.xlu0 %973
  %977 = vset.pattern.permute.xlu0 0
  %978 = vperm.xlu0 %977, %v408
  %v979 = vpop.permute.xlu0 %978
  %982 = vset.pattern.permute.xlu0 0
  %983 = vperm.xlu0 %982, %v409
  %v984 = vpop.permute.xlu0 %983
  %987 = vset.pattern.permute.xlu0 0
  %988 = vperm.xlu0 %987, %v410
  %v989 = vpop.permute.xlu0 %988
  %992 = vset.pattern.permute.xlu0 0
  %993 = vperm.xlu0 %992, %v411
  %v994 = vpop.permute.xlu0 %993
  %997 = vset.pattern.permute.xlu0 0
  %998 = vperm.xlu0 %997, %v412
  %v999 = vpop.permute.xlu0 %998
  %1002 = vset.pattern.permute.xlu0 0
  %1003 = vperm.xlu0 %1002, %v413
  %v1004 = vpop.permute.xlu0 %1003
  %1007 = vset.pattern.permute.xlu0 0
  %1008 = vperm.xlu0 %1007, %v414
  %v1009 = vpop.permute.xlu0 %1008
  %1012 = vset.pattern.permute.xlu0 0
  %1013 = vperm.xlu0 %1012, %v415
  %v1014 = vpop.permute.xlu0 %1013
  %1017 = vset.pattern.permute.xlu0 0
  %1018 = vperm.xlu0 %1017, %v416
  %v1019 = vpop.permute.xlu0 %1018
  %1022 = vset.pattern.permute.xlu0 0
  %1023 = vperm.xlu0 %1022, %v417
  %v1024 = vpop.permute.xlu0 %1023
  %1027 = vset.pattern.permute.xlu0 0
  %1028 = vperm.xlu0 %1027, %v418
  %v1029 = vpop.permute.xlu0 %1028
  %1032 = vset.pattern.permute.xlu0 0
  %1033 = vperm.xlu0 %1032, %v419
  %v1034 = vpop.permute.xlu0 %1033
  %1037 = vset.pattern.permute.xlu0 0
  %1038 = vperm.xlu0 %1037, %v420
  %v1039 = vpop.permute.xlu0 %1038
  %1042 = vset.pattern.permute.xlu0 0
  %1043 = vperm.xlu0 %1042, %v421
  %v1044 = vpop.permute.xlu0 %1043
  %1047 = vset.pattern.permute.xlu0 0
  %1048 = vperm.xlu0 %1047, %v422
  %v1049 = vpop.permute.xlu0 %1048
  %1052 = vset.pattern.permute.xlu0 0
  %1053 = vperm.xlu0 %1052, %v423
  %v1054 = vpop.permute.xlu0 %1053
  %1057 = vset.pattern.permute.xlu0 0
  %1058 = vperm.xlu0 %1057, %v424
  %v1059 = vpop.permute.xlu0 %1058
  %1062 = vset.pattern.permute.xlu0 0
  %1063 = vperm.xlu0 %1062, %v425
  %v1064 = vpop.permute.xlu0 %1063
  %v1066 = vld [vmem:[%s6] sm:$0xff]
  %v1067 = vld [vmem:[%s6 + $0x8] sm:$0xff]
  %v1068 = vld [vmem:[%s6 + $0x10] sm:$0xff]
  %v1069 = vld [vmem:[%s6 + $0x18] sm:$0xff]
  %v1070 = vld [vmem:[%s6 + $0x20] sm:$0xff]
  %v1071 = vld [vmem:[%s6 + $0x28] sm:$0xff]
  %v1072 = vld [vmem:[%s6 + $0x30] sm:$0xff]
  %v1073 = vld [vmem:[%s6 + $0x38] sm:$0xff]
  %v1074 = vld [vmem:[%s6 + $0x40] sm:$0xff]
  %v1075 = vld [vmem:[%s6 + $0x48] sm:$0xff]
  %v1076 = vld [vmem:[%s6 + $0x50] sm:$0xff]
  %v1077 = vld [vmem:[%s6 + $0x58] sm:$0xff]
  %v1078 = vld [vmem:[%s6 + $0x60] sm:$0xff]
  %v1079 = vld [vmem:[%s6 + $0x68] sm:$0xff]
  %v1080 = vld [vmem:[%s6 + $0x70] sm:$0xff]
  %v1081 = vld [vmem:[%s6 + $0x78] sm:$0xff]
  %v1082 = vld [vmem:[%s6 + $0x80] sm:$0xff]
  %v1083 = vld [vmem:[%s6 + $0x88] sm:$0xff]
  %v1084 = vld [vmem:[%s6 + $0x90] sm:$0xff]
  %v1085 = vld [vmem:[%s6 + $0x98] sm:$0xff]
  %v1086 = vld [vmem:[%s6 + $0xa0] sm:$0xff]
  %v1087 = vld [vmem:[%s6 + $0xa8] sm:$0xff]
  %v1088 = vld [vmem:[%s6 + $0xb0] sm:$0xff]
  %v1089 = vld [vmem:[%s6 + $0xb8] sm:$0xff]
  %v1090 = vld [vmem:[%s6 + $0xc0] sm:$0xff]
  %v1091 = vld [vmem:[%s6 + $0xc8] sm:$0xff]
  %v1092 = vld [vmem:[%s6 + $0xd0] sm:$0xff]
  %v1093 = vld [vmem:[%s6 + $0xd8] sm:$0xff]
  %v1094 = vld [vmem:[%s6 + $0xe0] sm:$0xff]
  %v1095 = vld [vmem:[%s6 + $0xe8] sm:$0xff]
  %v1096 = vld [vmem:[%s6 + $0xf0] sm:$0xff]
  %v1097 = vld [vmem:[%s6 + $0xf8] sm:$0xff]
  %v1098 = vld [vmem:[%s6 + $0x100] sm:$0xff]
  %v1099 = vld [vmem:[%s6 + $0x108] sm:$0xff]
  %v1100 = vld [vmem:[%s6 + $0x110] sm:$0xff]
  %v1101 = vld [vmem:[%s6 + $0x118] sm:$0xff]
  %v1102 = vld [vmem:[%s6 + $0x120] sm:$0xff]
  %v1103 = vld [vmem:[%s6 + $0x128] sm:$0xff]
  %v1104 = vld [vmem:[%s6 + $0x130] sm:$0xff]
  %v1105 = vld [vmem:[%s6 + $0x138] sm:$0xff]
  %v1106 = vld [vmem:[%s6 + $0x140] sm:$0xff]
  %v1107 = vld [vmem:[%s6 + $0x148] sm:$0xff]
  %v1108 = vld [vmem:[%s6 + $0x150] sm:$0xff]
  %v1109 = vld [vmem:[%s6 + $0x158] sm:$0xff]
  %v1110 = vld [vmem:[%s6 + $0x160] sm:$0xff]
  %v1111 = vld [vmem:[%s6 + $0x168] sm:$0xff]
  %v1112 = vld [vmem:[%s6 + $0x170] sm:$0xff]
  %v1113 = vld [vmem:[%s6 + $0x178] sm:$0xff]
  %v1114 = vld [vmem:[%s6 + $0x180] sm:$0xff]
  %v1115 = vld [vmem:[%s6 + $0x188] sm:$0xff]
  %v1116 = vld [vmem:[%s6 + $0x190] sm:$0xff]
  %v1117 = vld [vmem:[%s6 + $0x198] sm:$0xff]
  %v1118 = vld [vmem:[%s6 + $0x1a0] sm:$0xff]
  %v1119 = vld [vmem:[%s6 + $0x1a8] sm:$0xff]
  %v1120 = vld [vmem:[%s6 + $0x1b0] sm:$0xff]
  %v1121 = vld [vmem:[%s6 + $0x1b8] sm:$0xff]
  %v1122 = vld [vmem:[%s6 + $0x1c0] sm:$0xff]
  %v1123 = vld [vmem:[%s6 + $0x1c8] sm:$0xff]
  %v1124 = vld [vmem:[%s6 + $0x1d0] sm:$0xff]
  %v1125 = vld [vmem:[%s6 + $0x1d8] sm:$0xff]
  %v1126 = vld [vmem:[%s6 + $0x1e0] sm:$0xff]
  %v1127 = vld [vmem:[%s6 + $0x1e8] sm:$0xff]
  %v1128 = vld [vmem:[%s6 + $0x1f0] sm:$0xff]
  %v1129 = vld [vmem:[%s6 + $0x1f8] sm:$0xff]
  %v1130 = vld [vmem:[%s6 + $0x200] sm:$0xff]
  %v1131 = vld [vmem:[%s6 + $0x208] sm:$0xff]
  %v1132 = vld [vmem:[%s6 + $0x210] sm:$0xff]
  %v1133 = vld [vmem:[%s6 + $0x218] sm:$0xff]
  %v1134 = vld [vmem:[%s6 + $0x220] sm:$0xff]
  %v1135 = vld [vmem:[%s6 + $0x228] sm:$0xff]
  %v1136 = vld [vmem:[%s6 + $0x230] sm:$0xff]
  %v1137 = vld [vmem:[%s6 + $0x238] sm:$0xff]
  %v1138 = vld [vmem:[%s6 + $0x240] sm:$0xff]
  %v1139 = vld [vmem:[%s6 + $0x248] sm:$0xff]
  %v1140 = vld [vmem:[%s6 + $0x250] sm:$0xff]
  %v1141 = vld [vmem:[%s6 + $0x258] sm:$0xff]
  %v1142 = vld [vmem:[%s6 + $0x260] sm:$0xff]
  %v1143 = vld [vmem:[%s6 + $0x268] sm:$0xff]
  %v1144 = vld [vmem:[%s6 + $0x270] sm:$0xff]
  %v1145 = vld [vmem:[%s6 + $0x278] sm:$0xff]
  %v1146 = vld [vmem:[%s6 + $0x280] sm:$0xff]
  %v1147 = vld [vmem:[%s6 + $0x288] sm:$0xff]
  %v1148 = vld [vmem:[%s6 + $0x290] sm:$0xff]
  %v1149 = vld [vmem:[%s6 + $0x298] sm:$0xff]
  %v1150 = vld [vmem:[%s6 + $0x2a0] sm:$0xff]
  %v1151 = vld [vmem:[%s6 + $0x2a8] sm:$0xff]
  %v1152 = vld [vmem:[%s6 + $0x2b0] sm:$0xff]
  %v1153 = vld [vmem:[%s6 + $0x2b8] sm:$0xff]
  %v1154 = vld [vmem:[%s6 + $0x2c0] sm:$0xff]
  %v1155 = vld [vmem:[%s6 + $0x2c8] sm:$0xff]
  %v1156 = vld [vmem:[%s6 + $0x2d0] sm:$0xff]
  %v1157 = vld [vmem:[%s6 + $0x2d8] sm:$0xff]
  %v1158 = vld [vmem:[%s6 + $0x2e0] sm:$0xff]
  %v1159 = vld [vmem:[%s6 + $0x2e8] sm:$0xff]
  %v1160 = vld [vmem:[%s6 + $0x2f0] sm:$0xff]
  %v1161 = vld [vmem:[%s6 + $0x2f8] sm:$0xff]
  %v1162 = vld [vmem:[%s6 + $0x300] sm:$0xff]
  %v1163 = vld [vmem:[%s6 + $0x308] sm:$0xff]
  %v1164 = vld [vmem:[%s6 + $0x310] sm:$0xff]
  %v1165 = vld [vmem:[%s6 + $0x318] sm:$0xff]
  %v1166 = vld [vmem:[%s6 + $0x320] sm:$0xff]
  %v1167 = vld [vmem:[%s6 + $0x328] sm:$0xff]
  %v1168 = vld [vmem:[%s6 + $0x330] sm:$0xff]
  %v1169 = vld [vmem:[%s6 + $0x338] sm:$0xff]
  %v1170 = vld [vmem:[%s6 + $0x340] sm:$0xff]
  %v1171 = vld [vmem:[%s6 + $0x348] sm:$0xff]
  %v1172 = vld [vmem:[%s6 + $0x350] sm:$0xff]
  %v1173 = vld [vmem:[%s6 + $0x358] sm:$0xff]
  %v1174 = vld [vmem:[%s6 + $0x360] sm:$0xff]
  %v1175 = vld [vmem:[%s6 + $0x368] sm:$0xff]
  %v1176 = vld [vmem:[%s6 + $0x370] sm:$0xff]
  %v1177 = vld [vmem:[%s6 + $0x378] sm:$0xff]
  %v1178 = vld [vmem:[%s6 + $0x380] sm:$0xff]
  %v1179 = vld [vmem:[%s6 + $0x388] sm:$0xff]
  %v1180 = vld [vmem:[%s6 + $0x390] sm:$0xff]
  %v1181 = vld [vmem:[%s6 + $0x398] sm:$0xff]
  %v1182 = vld [vmem:[%s6 + $0x3a0] sm:$0xff]
  %v1183 = vld [vmem:[%s6 + $0x3a8] sm:$0xff]
  %v1184 = vld [vmem:[%s6 + $0x3b0] sm:$0xff]
  %v1185 = vld [vmem:[%s6 + $0x3b8] sm:$0xff]
  %v1186 = vld [vmem:[%s6 + $0x3c0] sm:$0xff]
  %v1187 = vld [vmem:[%s6 + $0x3c8] sm:$0xff]
  %v1188 = vld [vmem:[%s6 + $0x3d0] sm:$0xff]
  %v1189 = vld [vmem:[%s6 + $0x3d8] sm:$0xff]
  %v1190 = vld [vmem:[%s6 + $0x3e0] sm:$0xff]
  %v1191 = vld [vmem:[%s6 + $0x3e8] sm:$0xff]
  %v1192 = vld [vmem:[%s6 + $0x3f0] sm:$0xff]
  %v1193 = vld [vmem:[%s6 + $0x3f8] sm:$0xff]
  %1195 = vset.pattern.permute.xlu0 0
  %1196 = vperm.xlu0 %1195, %v1066
  %v1197 = vpop.permute.xlu0 %1196
  %1200 = vset.pattern.permute.xlu0 0
  %1201 = vperm.xlu0 %1200, %v1067
  %v1202 = vpop.permute.xlu0 %1201
  %1205 = vset.pattern.permute.xlu0 0
  %1206 = vperm.xlu0 %1205, %v1068
  %v1207 = vpop.permute.xlu0 %1206
  %1210 = vset.pattern.permute.xlu0 0
  %1211 = vperm.xlu0 %1210, %v1069
  %v1212 = vpop.permute.xlu0 %1211
  %1215 = vset.pattern.permute.xlu0 0
  %1216 = vperm.xlu0 %1215, %v1070
  %v1217 = vpop.permute.xlu0 %1216
  %1220 = vset.pattern.permute.xlu0 0
  %1221 = vperm.xlu0 %1220, %v1071
  %v1222 = vpop.permute.xlu0 %1221
  %1225 = vset.pattern.permute.xlu0 0
  %1226 = vperm.xlu0 %1225, %v1072
  %v1227 = vpop.permute.xlu0 %1226
  %1230 = vset.pattern.permute.xlu0 0
  %1231 = vperm.xlu0 %1230, %v1073
  %v1232 = vpop.permute.xlu0 %1231
  %1235 = vset.pattern.permute.xlu0 0
  %1236 = vperm.xlu0 %1235, %v1074
  %v1237 = vpop.permute.xlu0 %1236
  %1240 = vset.pattern.permute.xlu0 0
  %1241 = vperm.xlu0 %1240, %v1075
  %v1242 = vpop.permute.xlu0 %1241
  %1245 = vset.pattern.permute.xlu0 0
  %1246 = vperm.xlu0 %1245, %v1076
  %v1247 = vpop.permute.xlu0 %1246
  %1250 = vset.pattern.permute.xlu0 0
  %1251 = vperm.xlu0 %1250, %v1077
  %v1252 = vpop.permute.xlu0 %1251
  %1255 = vset.pattern.permute.xlu0 0
  %1256 = vperm.xlu0 %1255, %v1078
  %v1257 = vpop.permute.xlu0 %1256
  %1260 = vset.pattern.permute.xlu0 0
  %1261 = vperm.xlu0 %1260, %v1079
  %v1262 = vpop.permute.xlu0 %1261
  %1265 = vset.pattern.permute.xlu0 0
  %1266 = vperm.xlu0 %1265, %v1080
  %v1267 = vpop.permute.xlu0 %1266
  %1270 = vset.pattern.permute.xlu0 0
  %1271 = vperm.xlu0 %1270, %v1081
  %v1272 = vpop.permute.xlu0 %1271
  %1275 = vset.pattern.permute.xlu0 0
  %1276 = vperm.xlu0 %1275, %v1082
  %v1277 = vpop.permute.xlu0 %1276
  %1280 = vset.pattern.permute.xlu0 0
  %1281 = vperm.xlu0 %1280, %v1083
  %v1282 = vpop.permute.xlu0 %1281
  %1285 = vset.pattern.permute.xlu0 0
  %1286 = vperm.xlu0 %1285, %v1084
  %v1287 = vpop.permute.xlu0 %1286
  %1290 = vset.pattern.permute.xlu0 0
  %1291 = vperm.xlu0 %1290, %v1085
  %v1292 = vpop.permute.xlu0 %1291
  %1295 = vset.pattern.permute.xlu0 0
  %1296 = vperm.xlu0 %1295, %v1086
  %v1297 = vpop.permute.xlu0 %1296
  %1300 = vset.pattern.permute.xlu0 0
  %1301 = vperm.xlu0 %1300, %v1087
  %v1302 = vpop.permute.xlu0 %1301
  %1305 = vset.pattern.permute.xlu0 0
  %1306 = vperm.xlu0 %1305, %v1088
  %v1307 = vpop.permute.xlu0 %1306
  %1310 = vset.pattern.permute.xlu0 0
  %1311 = vperm.xlu0 %1310, %v1089
  %v1312 = vpop.permute.xlu0 %1311
  %1315 = vset.pattern.permute.xlu0 0
  %1316 = vperm.xlu0 %1315, %v1090
  %v1317 = vpop.permute.xlu0 %1316
  %1320 = vset.pattern.permute.xlu0 0
  %1321 = vperm.xlu0 %1320, %v1091
  %v1322 = vpop.permute.xlu0 %1321
  %1325 = vset.pattern.permute.xlu0 0
  %1326 = vperm.xlu0 %1325, %v1092
  %v1327 = vpop.permute.xlu0 %1326
  %1330 = vset.pattern.permute.xlu0 0
  %1331 = vperm.xlu0 %1330, %v1093
  %v1332 = vpop.permute.xlu0 %1331
  %1335 = vset.pattern.permute.xlu0 0
  %1336 = vperm.xlu0 %1335, %v1094
  %v1337 = vpop.permute.xlu0 %1336
  %1340 = vset.pattern.permute.xlu0 0
  %1341 = vperm.xlu0 %1340, %v1095
  %v1342 = vpop.permute.xlu0 %1341
  %1345 = vset.pattern.permute.xlu0 0
  %1346 = vperm.xlu0 %1345, %v1096
  %v1347 = vpop.permute.xlu0 %1346
  %1350 = vset.pattern.permute.xlu0 0
  %1351 = vperm.xlu0 %1350, %v1097
  %v1352 = vpop.permute.xlu0 %1351
  %1355 = vset.pattern.permute.xlu0 0
  %1356 = vperm.xlu0 %1355, %v1098
  %v1357 = vpop.permute.xlu0 %1356
  %1360 = vset.pattern.permute.xlu0 0
  %1361 = vperm.xlu0 %1360, %v1099
  %v1362 = vpop.permute.xlu0 %1361
  %1365 = vset.pattern.permute.xlu0 0
  %1366 = vperm.xlu0 %1365, %v1100
  %v1367 = vpop.permute.xlu0 %1366
  %1370 = vset.pattern.permute.xlu0 0
  %1371 = vperm.xlu0 %1370, %v1101
  %v1372 = vpop.permute.xlu0 %1371
  %1375 = vset.pattern.permute.xlu0 0
  %1376 = vperm.xlu0 %1375, %v1102
  %v1377 = vpop.permute.xlu0 %1376
  %1380 = vset.pattern.permute.xlu0 0
  %1381 = vperm.xlu0 %1380, %v1103
  %v1382 = vpop.permute.xlu0 %1381
  %1385 = vset.pattern.permute.xlu0 0
  %1386 = vperm.xlu0 %1385, %v1104
  %v1387 = vpop.permute.xlu0 %1386
  %1390 = vset.pattern.permute.xlu0 0
  %1391 = vperm.xlu0 %1390, %v1105
  %v1392 = vpop.permute.xlu0 %1391
  %1395 = vset.pattern.permute.xlu0 0
  %1396 = vperm.xlu0 %1395, %v1106
  %v1397 = vpop.permute.xlu0 %1396
  %1400 = vset.pattern.permute.xlu0 0
  %1401 = vperm.xlu0 %1400, %v1107
  %v1402 = vpop.permute.xlu0 %1401
  %1405 = vset.pattern.permute.xlu0 0
  %1406 = vperm.xlu0 %1405, %v1108
  %v1407 = vpop.permute.xlu0 %1406
  %1410 = vset.pattern.permute.xlu0 0
  %1411 = vperm.xlu0 %1410, %v1109
  %v1412 = vpop.permute.xlu0 %1411
  %1415 = vset.pattern.permute.xlu0 0
  %1416 = vperm.xlu0 %1415, %v1110
  %v1417 = vpop.permute.xlu0 %1416
  %1420 = vset.pattern.permute.xlu0 0
  %1421 = vperm.xlu0 %1420, %v1111
  %v1422 = vpop.permute.xlu0 %1421
  %1425 = vset.pattern.permute.xlu0 0
  %1426 = vperm.xlu0 %1425, %v1112
  %v1427 = vpop.permute.xlu0 %1426
  %1430 = vset.pattern.permute.xlu0 0
  %1431 = vperm.xlu0 %1430, %v1113
  %v1432 = vpop.permute.xlu0 %1431
  %1435 = vset.pattern.permute.xlu0 0
  %1436 = vperm.xlu0 %1435, %v1114
  %v1437 = vpop.permute.xlu0 %1436
  %1440 = vset.pattern.permute.xlu0 0
  %1441 = vperm.xlu0 %1440, %v1115
  %v1442 = vpop.permute.xlu0 %1441
  %1445 = vset.pattern.permute.xlu0 0
  %1446 = vperm.xlu0 %1445, %v1116
  %v1447 = vpop.permute.xlu0 %1446
  %1450 = vset.pattern.permute.xlu0 0
  %1451 = vperm.xlu0 %1450, %v1117
  %v1452 = vpop.permute.xlu0 %1451
  %1455 = vset.pattern.permute.xlu0 0
  %1456 = vperm.xlu0 %1455, %v1118
  %v1457 = vpop.permute.xlu0 %1456
  %1460 = vset.pattern.permute.xlu0 0
  %1461 = vperm.xlu0 %1460, %v1119
  %v1462 = vpop.permute.xlu0 %1461
  %1465 = vset.pattern.permute.xlu0 0
  %1466 = vperm.xlu0 %1465, %v1120
  %v1467 = vpop.permute.xlu0 %1466
  %1470 = vset.pattern.permute.xlu0 0
  %1471 = vperm.xlu0 %1470, %v1121
  %v1472 = vpop.permute.xlu0 %1471
  %1475 = vset.pattern.permute.xlu0 0
  %1476 = vperm.xlu0 %1475, %v1122
  %v1477 = vpop.permute.xlu0 %1476
  %1480 = vset.pattern.permute.xlu0 0
  %1481 = vperm.xlu0 %1480, %v1123
  %v1482 = vpop.permute.xlu0 %1481
  %1485 = vset.pattern.permute.xlu0 0
  %1486 = vperm.xlu0 %1485, %v1124
  %v1487 = vpop.permute.xlu0 %1486
  %1490 = vset.pattern.permute.xlu0 0
  %1491 = vperm.xlu0 %1490, %v1125
  %v1492 = vpop.permute.xlu0 %1491
  %1495 = vset.pattern.permute.xlu0 0
  %1496 = vperm.xlu0 %1495, %v1126
  %v1497 = vpop.permute.xlu0 %1496
  %1500 = vset.pattern.permute.xlu0 0
  %1501 = vperm.xlu0 %1500, %v1127
  %v1502 = vpop.permute.xlu0 %1501
  %1505 = vset.pattern.permute.xlu0 0
  %1506 = vperm.xlu0 %1505, %v1128
  %v1507 = vpop.permute.xlu0 %1506
  %1510 = vset.pattern.permute.xlu0 0
  %1511 = vperm.xlu0 %1510, %v1129
  %v1512 = vpop.permute.xlu0 %1511
  %1515 = vset.pattern.permute.xlu0 0
  %1516 = vperm.xlu0 %1515, %v1130
  %v1517 = vpop.permute.xlu0 %1516
  %1520 = vset.pattern.permute.xlu0 0
  %1521 = vperm.xlu0 %1520, %v1131
  %v1522 = vpop.permute.xlu0 %1521
  %1525 = vset.pattern.permute.xlu0 0
  %1526 = vperm.xlu0 %1525, %v1132
  %v1527 = vpop.permute.xlu0 %1526
  %1530 = vset.pattern.permute.xlu0 0
  %1531 = vperm.xlu0 %1530, %v1133
  %v1532 = vpop.permute.xlu0 %1531
  %1535 = vset.pattern.permute.xlu0 0
  %1536 = vperm.xlu0 %1535, %v1134
  %v1537 = vpop.permute.xlu0 %1536
  %1540 = vset.pattern.permute.xlu0 0
  %1541 = vperm.xlu0 %1540, %v1135
  %v1542 = vpop.permute.xlu0 %1541
  %1545 = vset.pattern.permute.xlu0 0
  %1546 = vperm.xlu0 %1545, %v1136
  %v1547 = vpop.permute.xlu0 %1546
  %1550 = vset.pattern.permute.xlu0 0
  %1551 = vperm.xlu0 %1550, %v1137
  %v1552 = vpop.permute.xlu0 %1551
  %1555 = vset.pattern.permute.xlu0 0
  %1556 = vperm.xlu0 %1555, %v1138
  %v1557 = vpop.permute.xlu0 %1556
  %1560 = vset.pattern.permute.xlu0 0
  %1561 = vperm.xlu0 %1560, %v1139
  %v1562 = vpop.permute.xlu0 %1561
  %1565 = vset.pattern.permute.xlu0 0
  %1566 = vperm.xlu0 %1565, %v1140
  %v1567 = vpop.permute.xlu0 %1566
  %1570 = vset.pattern.permute.xlu0 0
  %1571 = vperm.xlu0 %1570, %v1141
  %v1572 = vpop.permute.xlu0 %1571
  %1575 = vset.pattern.permute.xlu0 0
  %1576 = vperm.xlu0 %1575, %v1142
  %v1577 = vpop.permute.xlu0 %1576
  %1580 = vset.pattern.permute.xlu0 0
  %1581 = vperm.xlu0 %1580, %v1143
  %v1582 = vpop.permute.xlu0 %1581
  %1585 = vset.pattern.permute.xlu0 0
  %1586 = vperm.xlu0 %1585, %v1144
  %v1587 = vpop.permute.xlu0 %1586
  %1590 = vset.pattern.permute.xlu0 0
  %1591 = vperm.xlu0 %1590, %v1145
  %v1592 = vpop.permute.xlu0 %1591
  %1595 = vset.pattern.permute.xlu0 0
  %1596 = vperm.xlu0 %1595, %v1146
  %v1597 = vpop.permute.xlu0 %1596
  %1600 = vset.pattern.permute.xlu0 0
  %1601 = vperm.xlu0 %1600, %v1147
  %v1602 = vpop.permute.xlu0 %1601
  %1605 = vset.pattern.permute.xlu0 0
  %1606 = vperm.xlu0 %1605, %v1148
  %v1607 = vpop.permute.xlu0 %1606
  %1610 = vset.pattern.permute.xlu0 0
  %1611 = vperm.xlu0 %1610, %v1149
  %v1612 = vpop.permute.xlu0 %1611
  %1615 = vset.pattern.permute.xlu0 0
  %1616 = vperm.xlu0 %1615, %v1150
  %v1617 = vpop.permute.xlu0 %1616
  %1620 = vset.pattern.permute.xlu0 0
  %1621 = vperm.xlu0 %1620, %v1151
  %v1622 = vpop.permute.xlu0 %1621
  %1625 = vset.pattern.permute.xlu0 0
  %1626 = vperm.xlu0 %1625, %v1152
  %v1627 = vpop.permute.xlu0 %1626
  %1630 = vset.pattern.permute.xlu0 0
  %1631 = vperm.xlu0 %1630, %v1153
  %v1632 = vpop.permute.xlu0 %1631
  %1635 = vset.pattern.permute.xlu0 0
  %1636 = vperm.xlu0 %1635, %v1154
  %v1637 = vpop.permute.xlu0 %1636
  %1640 = vset.pattern.permute.xlu0 0
  %1641 = vperm.xlu0 %1640, %v1155
  %v1642 = vpop.permute.xlu0 %1641
  %1645 = vset.pattern.permute.xlu0 0
  %1646 = vperm.xlu0 %1645, %v1156
  %v1647 = vpop.permute.xlu0 %1646
  %1650 = vset.pattern.permute.xlu0 0
  %1651 = vperm.xlu0 %1650, %v1157
  %v1652 = vpop.permute.xlu0 %1651
  %1655 = vset.pattern.permute.xlu0 0
  %1656 = vperm.xlu0 %1655, %v1158
  %v1657 = vpop.permute.xlu0 %1656
  %1660 = vset.pattern.permute.xlu0 0
  %1661 = vperm.xlu0 %1660, %v1159
  %v1662 = vpop.permute.xlu0 %1661
  %1665 = vset.pattern.permute.xlu0 0
  %1666 = vperm.xlu0 %1665, %v1160
  %v1667 = vpop.permute.xlu0 %1666
  %1670 = vset.pattern.permute.xlu0 0
  %1671 = vperm.xlu0 %1670, %v1161
  %v1672 = vpop.permute.xlu0 %1671
  %1675 = vset.pattern.permute.xlu0 0
  %1676 = vperm.xlu0 %1675, %v1162
  %v1677 = vpop.permute.xlu0 %1676
  %1680 = vset.pattern.permute.xlu0 0
  %1681 = vperm.xlu0 %1680, %v1163
  %v1682 = vpop.permute.xlu0 %1681
  %1685 = vset.pattern.permute.xlu0 0
  %1686 = vperm.xlu0 %1685, %v1164
  %v1687 = vpop.permute.xlu0 %1686
  %1690 = vset.pattern.permute.xlu0 0
  %1691 = vperm.xlu0 %1690, %v1165
  %v1692 = vpop.permute.xlu0 %1691
  %1695 = vset.pattern.permute.xlu0 0
  %1696 = vperm.xlu0 %1695, %v1166
  %v1697 = vpop.permute.xlu0 %1696
  %1700 = vset.pattern.permute.xlu0 0
  %1701 = vperm.xlu0 %1700, %v1167
  %v1702 = vpop.permute.xlu0 %1701
  %1705 = vset.pattern.permute.xlu0 0
  %1706 = vperm.xlu0 %1705, %v1168
  %v1707 = vpop.permute.xlu0 %1706
  %1710 = vset.pattern.permute.xlu0 0
  %1711 = vperm.xlu0 %1710, %v1169
  %v1712 = vpop.permute.xlu0 %1711
  %1715 = vset.pattern.permute.xlu0 0
  %1716 = vperm.xlu0 %1715, %v1170
  %v1717 = vpop.permute.xlu0 %1716
  %1720 = vset.pattern.permute.xlu0 0
  %1721 = vperm.xlu0 %1720, %v1171
  %v1722 = vpop.permute.xlu0 %1721
  %1725 = vset.pattern.permute.xlu0 0
  %1726 = vperm.xlu0 %1725, %v1172
  %v1727 = vpop.permute.xlu0 %1726
  %1730 = vset.pattern.permute.xlu0 0
  %1731 = vperm.xlu0 %1730, %v1173
  %v1732 = vpop.permute.xlu0 %1731
  %1735 = vset.pattern.permute.xlu0 0
  %1736 = vperm.xlu0 %1735, %v1174
  %v1737 = vpop.permute.xlu0 %1736
  %1740 = vset.pattern.permute.xlu0 0
  %1741 = vperm.xlu0 %1740, %v1175
  %v1742 = vpop.permute.xlu0 %1741
  %1745 = vset.pattern.permute.xlu0 0
  %1746 = vperm.xlu0 %1745, %v1176
  %v1747 = vpop.permute.xlu0 %1746
  %1750 = vset.pattern.permute.xlu0 0
  %1751 = vperm.xlu0 %1750, %v1177
  %v1752 = vpop.permute.xlu0 %1751
  %1755 = vset.pattern.permute.xlu0 0
  %1756 = vperm.xlu0 %1755, %v1178
  %v1757 = vpop.permute.xlu0 %1756
  %1760 = vset.pattern.permute.xlu0 0
  %1761 = vperm.xlu0 %1760, %v1179
  %v1762 = vpop.permute.xlu0 %1761
  %1765 = vset.pattern.permute.xlu0 0
  %1766 = vperm.xlu0 %1765, %v1180
  %v1767 = vpop.permute.xlu0 %1766
  %1770 = vset.pattern.permute.xlu0 0
  %1771 = vperm.xlu0 %1770, %v1181
  %v1772 = vpop.permute.xlu0 %1771
  %1775 = vset.pattern.permute.xlu0 0
  %1776 = vperm.xlu0 %1775, %v1182
  %v1777 = vpop.permute.xlu0 %1776
  %1780 = vset.pattern.permute.xlu0 0
  %1781 = vperm.xlu0 %1780, %v1183
  %v1782 = vpop.permute.xlu0 %1781
  %1785 = vset.pattern.permute.xlu0 0
  %1786 = vperm.xlu0 %1785, %v1184
  %v1787 = vpop.permute.xlu0 %1786
  %1790 = vset.pattern.permute.xlu0 0
  %1791 = vperm.xlu0 %1790, %v1185
  %v1792 = vpop.permute.xlu0 %1791
  %1795 = vset.pattern.permute.xlu0 0
  %1796 = vperm.xlu0 %1795, %v1186
  %v1797 = vpop.permute.xlu0 %1796
  %1800 = vset.pattern.permute.xlu0 0
  %1801 = vperm.xlu0 %1800, %v1187
  %v1802 = vpop.permute.xlu0 %1801
  %1805 = vset.pattern.permute.xlu0 0
  %1806 = vperm.xlu0 %1805, %v1188
  %v1807 = vpop.permute.xlu0 %1806
  %1810 = vset.pattern.permute.xlu0 0
  %1811 = vperm.xlu0 %1810, %v1189
  %v1812 = vpop.permute.xlu0 %1811
  %1815 = vset.pattern.permute.xlu0 0
  %1816 = vperm.xlu0 %1815, %v1190
  %v1817 = vpop.permute.xlu0 %1816
  %1820 = vset.pattern.permute.xlu0 0
  %1821 = vperm.xlu0 %1820, %v1191
  %v1822 = vpop.permute.xlu0 %1821
  %1825 = vset.pattern.permute.xlu0 0
  %1826 = vperm.xlu0 %1825, %v1192
  %v1827 = vpop.permute.xlu0 %1826
  %1830 = vset.pattern.permute.xlu0 0
  %1831 = vperm.xlu0 %1830, %v1193
  %v1832 = vpop.permute.xlu0 %1831
  %v1834 = vld [vmem:[%s7] sm:$0xff]
  %v1835 = vld [vmem:[%s7 + $0x8] sm:$0xff]
  %v1836 = vld [vmem:[%s7 + $0x10] sm:$0xff]
  %v1837 = vld [vmem:[%s7 + $0x18] sm:$0xff]
  %v1838 = vld [vmem:[%s7 + $0x20] sm:$0xff]
  %v1839 = vld [vmem:[%s7 + $0x28] sm:$0xff]
  %v1840 = vld [vmem:[%s7 + $0x30] sm:$0xff]
  %v1841 = vld [vmem:[%s7 + $0x38] sm:$0xff]
  %v1842 = vld [vmem:[%s7 + $0x40] sm:$0xff]
  %v1843 = vld [vmem:[%s7 + $0x48] sm:$0xff]
  %v1844 = vld [vmem:[%s7 + $0x50] sm:$0xff]
  %v1845 = vld [vmem:[%s7 + $0x58] sm:$0xff]
  %v1846 = vld [vmem:[%s7 + $0x60] sm:$0xff]
  %v1847 = vld [vmem:[%s7 + $0x68] sm:$0xff]
  %v1848 = vld [vmem:[%s7 + $0x70] sm:$0xff]
  %v1849 = vld [vmem:[%s7 + $0x78] sm:$0xff]
  %v1850 = vld [vmem:[%s7 + $0x80] sm:$0xff]
  %v1851 = vld [vmem:[%s7 + $0x88] sm:$0xff]
  %v1852 = vld [vmem:[%s7 + $0x90] sm:$0xff]
  %v1853 = vld [vmem:[%s7 + $0x98] sm:$0xff]
  %v1854 = vld [vmem:[%s7 + $0xa0] sm:$0xff]
  %v1855 = vld [vmem:[%s7 + $0xa8] sm:$0xff]
  %v1856 = vld [vmem:[%s7 + $0xb0] sm:$0xff]
  %v1857 = vld [vmem:[%s7 + $0xb8] sm:$0xff]
  %v1858 = vld [vmem:[%s7 + $0xc0] sm:$0xff]
  %v1859 = vld [vmem:[%s7 + $0xc8] sm:$0xff]
  %v1860 = vld [vmem:[%s7 + $0xd0] sm:$0xff]
  %v1861 = vld [vmem:[%s7 + $0xd8] sm:$0xff]
  %v1862 = vld [vmem:[%s7 + $0xe0] sm:$0xff]
  %v1863 = vld [vmem:[%s7 + $0xe8] sm:$0xff]
  %v1864 = vld [vmem:[%s7 + $0xf0] sm:$0xff]
  %v1865 = vld [vmem:[%s7 + $0xf8] sm:$0xff]
  %v1866 = vld [vmem:[%s7 + $0x100] sm:$0xff]
  %v1867 = vld [vmem:[%s7 + $0x108] sm:$0xff]
  %v1868 = vld [vmem:[%s7 + $0x110] sm:$0xff]
  %v1869 = vld [vmem:[%s7 + $0x118] sm:$0xff]
  %v1870 = vld [vmem:[%s7 + $0x120] sm:$0xff]
  %v1871 = vld [vmem:[%s7 + $0x128] sm:$0xff]
  %v1872 = vld [vmem:[%s7 + $0x130] sm:$0xff]
  %v1873 = vld [vmem:[%s7 + $0x138] sm:$0xff]
  %v1874 = vld [vmem:[%s7 + $0x140] sm:$0xff]
  %v1875 = vld [vmem:[%s7 + $0x148] sm:$0xff]
  %v1876 = vld [vmem:[%s7 + $0x150] sm:$0xff]
  %v1877 = vld [vmem:[%s7 + $0x158] sm:$0xff]
  %v1878 = vld [vmem:[%s7 + $0x160] sm:$0xff]
  %v1879 = vld [vmem:[%s7 + $0x168] sm:$0xff]
  %v1880 = vld [vmem:[%s7 + $0x170] sm:$0xff]
  %v1881 = vld [vmem:[%s7 + $0x178] sm:$0xff]
  %v1882 = vld [vmem:[%s7 + $0x180] sm:$0xff]
  %v1883 = vld [vmem:[%s7 + $0x188] sm:$0xff]
  %v1884 = vld [vmem:[%s7 + $0x190] sm:$0xff]
  %v1885 = vld [vmem:[%s7 + $0x198] sm:$0xff]
  %v1886 = vld [vmem:[%s7 + $0x1a0] sm:$0xff]
  %v1887 = vld [vmem:[%s7 + $0x1a8] sm:$0xff]
  %v1888 = vld [vmem:[%s7 + $0x1b0] sm:$0xff]
  %v1889 = vld [vmem:[%s7 + $0x1b8] sm:$0xff]
  %v1890 = vld [vmem:[%s7 + $0x1c0] sm:$0xff]
  %v1891 = vld [vmem:[%s7 + $0x1c8] sm:$0xff]
  %v1892 = vld [vmem:[%s7 + $0x1d0] sm:$0xff]
  %v1893 = vld [vmem:[%s7 + $0x1d8] sm:$0xff]
  %v1894 = vld [vmem:[%s7 + $0x1e0] sm:$0xff]
  %v1895 = vld [vmem:[%s7 + $0x1e8] sm:$0xff]
  %v1896 = vld [vmem:[%s7 + $0x1f0] sm:$0xff]
  %v1897 = vld [vmem:[%s7 + $0x1f8] sm:$0xff]
  %v1898 = vld [vmem:[%s7 + $0x200] sm:$0xff]
  %v1899 = vld [vmem:[%s7 + $0x208] sm:$0xff]
  %v1900 = vld [vmem:[%s7 + $0x210] sm:$0xff]
  %v1901 = vld [vmem:[%s7 + $0x218] sm:$0xff]
  %v1902 = vld [vmem:[%s7 + $0x220] sm:$0xff]
  %v1903 = vld [vmem:[%s7 + $0x228] sm:$0xff]
  %v1904 = vld [vmem:[%s7 + $0x230] sm:$0xff]
  %v1905 = vld [vmem:[%s7 + $0x238] sm:$0xff]
  %v1906 = vld [vmem:[%s7 + $0x240] sm:$0xff]
  %v1907 = vld [vmem:[%s7 + $0x248] sm:$0xff]
  %v1908 = vld [vmem:[%s7 + $0x250] sm:$0xff]
  %v1909 = vld [vmem:[%s7 + $0x258] sm:$0xff]
  %v1910 = vld [vmem:[%s7 + $0x260] sm:$0xff]
  %v1911 = vld [vmem:[%s7 + $0x268] sm:$0xff]
  %v1912 = vld [vmem:[%s7 + $0x270] sm:$0xff]
  %v1913 = vld [vmem:[%s7 + $0x278] sm:$0xff]
  %v1914 = vld [vmem:[%s7 + $0x280] sm:$0xff]
  %v1915 = vld [vmem:[%s7 + $0x288] sm:$0xff]
  %v1916 = vld [vmem:[%s7 + $0x290] sm:$0xff]
  %v1917 = vld [vmem:[%s7 + $0x298] sm:$0xff]
  %v1918 = vld [vmem:[%s7 + $0x2a0] sm:$0xff]
  %v1919 = vld [vmem:[%s7 + $0x2a8] sm:$0xff]
  %v1920 = vld [vmem:[%s7 + $0x2b0] sm:$0xff]
  %v1921 = vld [vmem:[%s7 + $0x2b8] sm:$0xff]
  %v1922 = vld [vmem:[%s7 + $0x2c0] sm:$0xff]
  %v1923 = vld [vmem:[%s7 + $0x2c8] sm:$0xff]
  %v1924 = vld [vmem:[%s7 + $0x2d0] sm:$0xff]
  %v1925 = vld [vmem:[%s7 + $0x2d8] sm:$0xff]
  %v1926 = vld [vmem:[%s7 + $0x2e0] sm:$0xff]
  %v1927 = vld [vmem:[%s7 + $0x2e8] sm:$0xff]
  %v1928 = vld [vmem:[%s7 + $0x2f0] sm:$0xff]
  %v1929 = vld [vmem:[%s7 + $0x2f8] sm:$0xff]
  %v1930 = vld [vmem:[%s7 + $0x300] sm:$0xff]
  %v1931 = vld [vmem:[%s7 + $0x308] sm:$0xff]
  %v1932 = vld [vmem:[%s7 + $0x310] sm:$0xff]
  %v1933 = vld [vmem:[%s7 + $0x318] sm:$0xff]
  %v1934 = vld [vmem:[%s7 + $0x320] sm:$0xff]
  %v1935 = vld [vmem:[%s7 + $0x328] sm:$0xff]
  %v1936 = vld [vmem:[%s7 + $0x330] sm:$0xff]
  %v1937 = vld [vmem:[%s7 + $0x338] sm:$0xff]
  %v1938 = vld [vmem:[%s7 + $0x340] sm:$0xff]
  %v1939 = vld [vmem:[%s7 + $0x348] sm:$0xff]
  %v1940 = vld [vmem:[%s7 + $0x350] sm:$0xff]
  %v1941 = vld [vmem:[%s7 + $0x358] sm:$0xff]
  %v1942 = vld [vmem:[%s7 + $0x360] sm:$0xff]
  %v1943 = vld [vmem:[%s7 + $0x368] sm:$0xff]
  %v1944 = vld [vmem:[%s7 + $0x370] sm:$0xff]
  %v1945 = vld [vmem:[%s7 + $0x378] sm:$0xff]
  %v1946 = vld [vmem:[%s7 + $0x380] sm:$0xff]
  %v1947 = vld [vmem:[%s7 + $0x388] sm:$0xff]
  %v1948 = vld [vmem:[%s7 + $0x390] sm:$0xff]
  %v1949 = vld [vmem:[%s7 + $0x398] sm:$0xff]
  %v1950 = vld [vmem:[%s7 + $0x3a0] sm:$0xff]
  %v1951 = vld [vmem:[%s7 + $0x3a8] sm:$0xff]
  %v1952 = vld [vmem:[%s7 + $0x3b0] sm:$0xff]
  %v1953 = vld [vmem:[%s7 + $0x3b8] sm:$0xff]
  %v1954 = vld [vmem:[%s7 + $0x3c0] sm:$0xff]
  %v1955 = vld [vmem:[%s7 + $0x3c8] sm:$0xff]
  %v1956 = vld [vmem:[%s7 + $0x3d0] sm:$0xff]
  %v1957 = vld [vmem:[%s7 + $0x3d8] sm:$0xff]
  %v1958 = vld [vmem:[%s7 + $0x3e0] sm:$0xff]
  %v1959 = vld [vmem:[%s7 + $0x3e8] sm:$0xff]
  %v1960 = vld [vmem:[%s7 + $0x3f0] sm:$0xff]
  %v1961 = vld [vmem:[%s7 + $0x3f8] sm:$0xff]
  %1963 = vset.pattern.permute.xlu0 0
  %1964 = vperm.xlu0 %1963, %v1834
  %v1965 = vpop.permute.xlu0 %1964
  %1968 = vset.pattern.permute.xlu0 0
  %1969 = vperm.xlu0 %1968, %v1835
  %v1970 = vpop.permute.xlu0 %1969
  %1973 = vset.pattern.permute.xlu0 0
  %1974 = vperm.xlu0 %1973, %v1836
  %v1975 = vpop.permute.xlu0 %1974
  %1978 = vset.pattern.permute.xlu0 0
  %1979 = vperm.xlu0 %1978, %v1837
  %v1980 = vpop.permute.xlu0 %1979
  %1983 = vset.pattern.permute.xlu0 0
  %1984 = vperm.xlu0 %1983, %v1838
  %v1985 = vpop.permute.xlu0 %1984
  %1988 = vset.pattern.permute.xlu0 0
  %1989 = vperm.xlu0 %1988, %v1839
  %v1990 = vpop.permute.xlu0 %1989
  %1993 = vset.pattern.permute.xlu0 0
  %1994 = vperm.xlu0 %1993, %v1840
  %v1995 = vpop.permute.xlu0 %1994
  %1998 = vset.pattern.permute.xlu0 0
  %1999 = vperm.xlu0 %1998, %v1841
  %v2000 = vpop.permute.xlu0 %1999
  %2003 = vset.pattern.permute.xlu0 0
  %2004 = vperm.xlu0 %2003, %v1842
  %v2005 = vpop.permute.xlu0 %2004
  %2008 = vset.pattern.permute.xlu0 0
  %2009 = vperm.xlu0 %2008, %v1843
  %v2010 = vpop.permute.xlu0 %2009
  %2013 = vset.pattern.permute.xlu0 0
  %2014 = vperm.xlu0 %2013, %v1844
  %v2015 = vpop.permute.xlu0 %2014
  %2018 = vset.pattern.permute.xlu0 0
  %2019 = vperm.xlu0 %2018, %v1845
  %v2020 = vpop.permute.xlu0 %2019
  %2023 = vset.pattern.permute.xlu0 0
  %2024 = vperm.xlu0 %2023, %v1846
  %v2025 = vpop.permute.xlu0 %2024
  %2028 = vset.pattern.permute.xlu0 0
  %2029 = vperm.xlu0 %2028, %v1847
  %v2030 = vpop.permute.xlu0 %2029
  %2033 = vset.pattern.permute.xlu0 0
  %2034 = vperm.xlu0 %2033, %v1848
  %v2035 = vpop.permute.xlu0 %2034
  %2038 = vset.pattern.permute.xlu0 0
  %2039 = vperm.xlu0 %2038, %v1849
  %v2040 = vpop.permute.xlu0 %2039
  %2043 = vset.pattern.permute.xlu0 0
  %2044 = vperm.xlu0 %2043, %v1850
  %v2045 = vpop.permute.xlu0 %2044
  %2048 = vset.pattern.permute.xlu0 0
  %2049 = vperm.xlu0 %2048, %v1851
  %v2050 = vpop.permute.xlu0 %2049
  %2053 = vset.pattern.permute.xlu0 0
  %2054 = vperm.xlu0 %2053, %v1852
  %v2055 = vpop.permute.xlu0 %2054
  %2058 = vset.pattern.permute.xlu0 0
  %2059 = vperm.xlu0 %2058, %v1853
  %v2060 = vpop.permute.xlu0 %2059
  %2063 = vset.pattern.permute.xlu0 0
  %2064 = vperm.xlu0 %2063, %v1854
  %v2065 = vpop.permute.xlu0 %2064
  %2068 = vset.pattern.permute.xlu0 0
  %2069 = vperm.xlu0 %2068, %v1855
  %v2070 = vpop.permute.xlu0 %2069
  %2073 = vset.pattern.permute.xlu0 0
  %2074 = vperm.xlu0 %2073, %v1856
  %v2075 = vpop.permute.xlu0 %2074
  %2078 = vset.pattern.permute.xlu0 0
  %2079 = vperm.xlu0 %2078, %v1857
  %v2080 = vpop.permute.xlu0 %2079
  %2083 = vset.pattern.permute.xlu0 0
  %2084 = vperm.xlu0 %2083, %v1858
  %v2085 = vpop.permute.xlu0 %2084
  %2088 = vset.pattern.permute.xlu0 0
  %2089 = vperm.xlu0 %2088, %v1859
  %v2090 = vpop.permute.xlu0 %2089
  %2093 = vset.pattern.permute.xlu0 0
  %2094 = vperm.xlu0 %2093, %v1860
  %v2095 = vpop.permute.xlu0 %2094
  %2098 = vset.pattern.permute.xlu0 0
  %2099 = vperm.xlu0 %2098, %v1861
  %v2100 = vpop.permute.xlu0 %2099
  %2103 = vset.pattern.permute.xlu0 0
  %2104 = vperm.xlu0 %2103, %v1862
  %v2105 = vpop.permute.xlu0 %2104
  %2108 = vset.pattern.permute.xlu0 0
  %2109 = vperm.xlu0 %2108, %v1863
  %v2110 = vpop.permute.xlu0 %2109
  %2113 = vset.pattern.permute.xlu0 0
  %2114 = vperm.xlu0 %2113, %v1864
  %v2115 = vpop.permute.xlu0 %2114
  %2118 = vset.pattern.permute.xlu0 0
  %2119 = vperm.xlu0 %2118, %v1865
  %v2120 = vpop.permute.xlu0 %2119
  %2123 = vset.pattern.permute.xlu0 0
  %2124 = vperm.xlu0 %2123, %v1866
  %v2125 = vpop.permute.xlu0 %2124
  %2128 = vset.pattern.permute.xlu0 0
  %2129 = vperm.xlu0 %2128, %v1867
  %v2130 = vpop.permute.xlu0 %2129
  %2133 = vset.pattern.permute.xlu0 0
  %2134 = vperm.xlu0 %2133, %v1868
  %v2135 = vpop.permute.xlu0 %2134
  %2138 = vset.pattern.permute.xlu0 0
  %2139 = vperm.xlu0 %2138, %v1869
  %v2140 = vpop.permute.xlu0 %2139
  %2143 = vset.pattern.permute.xlu0 0
  %2144 = vperm.xlu0 %2143, %v1870
  %v2145 = vpop.permute.xlu0 %2144
  %2148 = vset.pattern.permute.xlu0 0
  %2149 = vperm.xlu0 %2148, %v1871
  %v2150 = vpop.permute.xlu0 %2149
  %2153 = vset.pattern.permute.xlu0 0
  %2154 = vperm.xlu0 %2153, %v1872
  %v2155 = vpop.permute.xlu0 %2154
  %2158 = vset.pattern.permute.xlu0 0
  %2159 = vperm.xlu0 %2158, %v1873
  %v2160 = vpop.permute.xlu0 %2159
  %2163 = vset.pattern.permute.xlu0 0
  %2164 = vperm.xlu0 %2163, %v1874
  %v2165 = vpop.permute.xlu0 %2164
  %2168 = vset.pattern.permute.xlu0 0
  %2169 = vperm.xlu0 %2168, %v1875
  %v2170 = vpop.permute.xlu0 %2169
  %2173 = vset.pattern.permute.xlu0 0
  %2174 = vperm.xlu0 %2173, %v1876
  %v2175 = vpop.permute.xlu0 %2174
  %2178 = vset.pattern.permute.xlu0 0
  %2179 = vperm.xlu0 %2178, %v1877
  %v2180 = vpop.permute.xlu0 %2179
  %2183 = vset.pattern.permute.xlu0 0
  %2184 = vperm.xlu0 %2183, %v1878
  %v2185 = vpop.permute.xlu0 %2184
  %2188 = vset.pattern.permute.xlu0 0
  %2189 = vperm.xlu0 %2188, %v1879
  %v2190 = vpop.permute.xlu0 %2189
  %2193 = vset.pattern.permute.xlu0 0
  %2194 = vperm.xlu0 %2193, %v1880
  %v2195 = vpop.permute.xlu0 %2194
  %2198 = vset.pattern.permute.xlu0 0
  %2199 = vperm.xlu0 %2198, %v1881
  %v2200 = vpop.permute.xlu0 %2199
  %2203 = vset.pattern.permute.xlu0 0
  %2204 = vperm.xlu0 %2203, %v1882
  %v2205 = vpop.permute.xlu0 %2204
  %2208 = vset.pattern.permute.xlu0 0
  %2209 = vperm.xlu0 %2208, %v1883
  %v2210 = vpop.permute.xlu0 %2209
  %2213 = vset.pattern.permute.xlu0 0
  %2214 = vperm.xlu0 %2213, %v1884
  %v2215 = vpop.permute.xlu0 %2214
  %2218 = vset.pattern.permute.xlu0 0
  %2219 = vperm.xlu0 %2218, %v1885
  %v2220 = vpop.permute.xlu0 %2219
  %2223 = vset.pattern.permute.xlu0 0
  %2224 = vperm.xlu0 %2223, %v1886
  %v2225 = vpop.permute.xlu0 %2224
  %2228 = vset.pattern.permute.xlu0 0
  %2229 = vperm.xlu0 %2228, %v1887
  %v2230 = vpop.permute.xlu0 %2229
  %2233 = vset.pattern.permute.xlu0 0
  %2234 = vperm.xlu0 %2233, %v1888
  %v2235 = vpop.permute.xlu0 %2234
  %2238 = vset.pattern.permute.xlu0 0
  %2239 = vperm.xlu0 %2238, %v1889
  %v2240 = vpop.permute.xlu0 %2239
  %2243 = vset.pattern.permute.xlu0 0
  %2244 = vperm.xlu0 %2243, %v1890
  %v2245 = vpop.permute.xlu0 %2244
  %2248 = vset.pattern.permute.xlu0 0
  %2249 = vperm.xlu0 %2248, %v1891
  %v2250 = vpop.permute.xlu0 %2249
  %2253 = vset.pattern.permute.xlu0 0
  %2254 = vperm.xlu0 %2253, %v1892
  %v2255 = vpop.permute.xlu0 %2254
  %2258 = vset.pattern.permute.xlu0 0
  %2259 = vperm.xlu0 %2258, %v1893
  %v2260 = vpop.permute.xlu0 %2259
  %2263 = vset.pattern.permute.xlu0 0
  %2264 = vperm.xlu0 %2263, %v1894
  %v2265 = vpop.permute.xlu0 %2264
  %2268 = vset.pattern.permute.xlu0 0
  %2269 = vperm.xlu0 %2268, %v1895
  %v2270 = vpop.permute.xlu0 %2269
  %2273 = vset.pattern.permute.xlu0 0
  %2274 = vperm.xlu0 %2273, %v1896
  %v2275 = vpop.permute.xlu0 %2274
  %2278 = vset.pattern.permute.xlu0 0
  %2279 = vperm.xlu0 %2278, %v1897
  %v2280 = vpop.permute.xlu0 %2279
  %2283 = vset.pattern.permute.xlu0 0
  %2284 = vperm.xlu0 %2283, %v1898
  %v2285 = vpop.permute.xlu0 %2284
  %2288 = vset.pattern.permute.xlu0 0
  %2289 = vperm.xlu0 %2288, %v1899
  %v2290 = vpop.permute.xlu0 %2289
  %2293 = vset.pattern.permute.xlu0 0
  %2294 = vperm.xlu0 %2293, %v1900
  %v2295 = vpop.permute.xlu0 %2294
  %2298 = vset.pattern.permute.xlu0 0
  %2299 = vperm.xlu0 %2298, %v1901
  %v2300 = vpop.permute.xlu0 %2299
  %2303 = vset.pattern.permute.xlu0 0
  %2304 = vperm.xlu0 %2303, %v1902
  %v2305 = vpop.permute.xlu0 %2304
  %2308 = vset.pattern.permute.xlu0 0
  %2309 = vperm.xlu0 %2308, %v1903
  %v2310 = vpop.permute.xlu0 %2309
  %2313 = vset.pattern.permute.xlu0 0
  %2314 = vperm.xlu0 %2313, %v1904
  %v2315 = vpop.permute.xlu0 %2314
  %2318 = vset.pattern.permute.xlu0 0
  %2319 = vperm.xlu0 %2318, %v1905
  %v2320 = vpop.permute.xlu0 %2319
  %2323 = vset.pattern.permute.xlu0 0
  %2324 = vperm.xlu0 %2323, %v1906
  %v2325 = vpop.permute.xlu0 %2324
  %2328 = vset.pattern.permute.xlu0 0
  %2329 = vperm.xlu0 %2328, %v1907
  %v2330 = vpop.permute.xlu0 %2329
  %2333 = vset.pattern.permute.xlu0 0
  %2334 = vperm.xlu0 %2333, %v1908
  %v2335 = vpop.permute.xlu0 %2334
  %2338 = vset.pattern.permute.xlu0 0
  %2339 = vperm.xlu0 %2338, %v1909
  %v2340 = vpop.permute.xlu0 %2339
  %2343 = vset.pattern.permute.xlu0 0
  %2344 = vperm.xlu0 %2343, %v1910
  %v2345 = vpop.permute.xlu0 %2344
  %2348 = vset.pattern.permute.xlu0 0
  %2349 = vperm.xlu0 %2348, %v1911
  %v2350 = vpop.permute.xlu0 %2349
  %2353 = vset.pattern.permute.xlu0 0
  %2354 = vperm.xlu0 %2353, %v1912
  %v2355 = vpop.permute.xlu0 %2354
  %2358 = vset.pattern.permute.xlu0 0
  %2359 = vperm.xlu0 %2358, %v1913
  %v2360 = vpop.permute.xlu0 %2359
  %2363 = vset.pattern.permute.xlu0 0
  %2364 = vperm.xlu0 %2363, %v1914
  %v2365 = vpop.permute.xlu0 %2364
  %2368 = vset.pattern.permute.xlu0 0
  %2369 = vperm.xlu0 %2368, %v1915
  %v2370 = vpop.permute.xlu0 %2369
  %2373 = vset.pattern.permute.xlu0 0
  %2374 = vperm.xlu0 %2373, %v1916
  %v2375 = vpop.permute.xlu0 %2374
  %2378 = vset.pattern.permute.xlu0 0
  %2379 = vperm.xlu0 %2378, %v1917
  %v2380 = vpop.permute.xlu0 %2379
  %2383 = vset.pattern.permute.xlu0 0
  %2384 = vperm.xlu0 %2383, %v1918
  %v2385 = vpop.permute.xlu0 %2384
  %2388 = vset.pattern.permute.xlu0 0
  %2389 = vperm.xlu0 %2388, %v1919
  %v2390 = vpop.permute.xlu0 %2389
  %2393 = vset.pattern.permute.xlu0 0
  %2394 = vperm.xlu0 %2393, %v1920
  %v2395 = vpop.permute.xlu0 %2394
  %2398 = vset.pattern.permute.xlu0 0
  %2399 = vperm.xlu0 %2398, %v1921
  %v2400 = vpop.permute.xlu0 %2399
  %2403 = vset.pattern.permute.xlu0 0
  %2404 = vperm.xlu0 %2403, %v1922
  %v2405 = vpop.permute.xlu0 %2404
  %2408 = vset.pattern.permute.xlu0 0
  %2409 = vperm.xlu0 %2408, %v1923
  %v2410 = vpop.permute.xlu0 %2409
  %2413 = vset.pattern.permute.xlu0 0
  %2414 = vperm.xlu0 %2413, %v1924
  %v2415 = vpop.permute.xlu0 %2414
  %2418 = vset.pattern.permute.xlu0 0
  %2419 = vperm.xlu0 %2418, %v1925
  %v2420 = vpop.permute.xlu0 %2419
  %2423 = vset.pattern.permute.xlu0 0
  %2424 = vperm.xlu0 %2423, %v1926
  %v2425 = vpop.permute.xlu0 %2424
  %2428 = vset.pattern.permute.xlu0 0
  %2429 = vperm.xlu0 %2428, %v1927
  %v2430 = vpop.permute.xlu0 %2429
  %2433 = vset.pattern.permute.xlu0 0
  %2434 = vperm.xlu0 %2433, %v1928
  %v2435 = vpop.permute.xlu0 %2434
  %2438 = vset.pattern.permute.xlu0 0
  %2439 = vperm.xlu0 %2438, %v1929
  %v2440 = vpop.permute.xlu0 %2439
  %2443 = vset.pattern.permute.xlu0 0
  %2444 = vperm.xlu0 %2443, %v1930
  %v2445 = vpop.permute.xlu0 %2444
  %2448 = vset.pattern.permute.xlu0 0
  %2449 = vperm.xlu0 %2448, %v1931
  %v2450 = vpop.permute.xlu0 %2449
  %2453 = vset.pattern.permute.xlu0 0
  %2454 = vperm.xlu0 %2453, %v1932
  %v2455 = vpop.permute.xlu0 %2454
  %2458 = vset.pattern.permute.xlu0 0
  %2459 = vperm.xlu0 %2458, %v1933
  %v2460 = vpop.permute.xlu0 %2459
  %2463 = vset.pattern.permute.xlu0 0
  %2464 = vperm.xlu0 %2463, %v1934
  %v2465 = vpop.permute.xlu0 %2464
  %2468 = vset.pattern.permute.xlu0 0
  %2469 = vperm.xlu0 %2468, %v1935
  %v2470 = vpop.permute.xlu0 %2469
  %2473 = vset.pattern.permute.xlu0 0
  %2474 = vperm.xlu0 %2473, %v1936
  %v2475 = vpop.permute.xlu0 %2474
  %2478 = vset.pattern.permute.xlu0 0
  %2479 = vperm.xlu0 %2478, %v1937
  %v2480 = vpop.permute.xlu0 %2479
  %2483 = vset.pattern.permute.xlu0 0
  %2484 = vperm.xlu0 %2483, %v1938
  %v2485 = vpop.permute.xlu0 %2484
  %2488 = vset.pattern.permute.xlu0 0
  %2489 = vperm.xlu0 %2488, %v1939
  %v2490 = vpop.permute.xlu0 %2489
  %2493 = vset.pattern.permute.xlu0 0
  %2494 = vperm.xlu0 %2493, %v1940
  %v2495 = vpop.permute.xlu0 %2494
  %2498 = vset.pattern.permute.xlu0 0
  %2499 = vperm.xlu0 %2498, %v1941
  %v2500 = vpop.permute.xlu0 %2499
  %2503 = vset.pattern.permute.xlu0 0
  %2504 = vperm.xlu0 %2503, %v1942
  %v2505 = vpop.permute.xlu0 %2504
  %2508 = vset.pattern.permute.xlu0 0
  %2509 = vperm.xlu0 %2508, %v1943
  %v2510 = vpop.permute.xlu0 %2509
  %2513 = vset.pattern.permute.xlu0 0
  %2514 = vperm.xlu0 %2513, %v1944
  %v2515 = vpop.permute.xlu0 %2514
  %2518 = vset.pattern.permute.xlu0 0
  %2519 = vperm.xlu0 %2518, %v1945
  %v2520 = vpop.permute.xlu0 %2519
  %2523 = vset.pattern.permute.xlu0 0
  %2524 = vperm.xlu0 %2523, %v1946
  %v2525 = vpop.permute.xlu0 %2524
  %2528 = vset.pattern.permute.xlu0 0
  %2529 = vperm.xlu0 %2528, %v1947
  %v2530 = vpop.permute.xlu0 %2529
  %2533 = vset.pattern.permute.xlu0 0
  %2534 = vperm.xlu0 %2533, %v1948
  %v2535 = vpop.permute.xlu0 %2534
  %2538 = vset.pattern.permute.xlu0 0
  %2539 = vperm.xlu0 %2538, %v1949
  %v2540 = vpop.permute.xlu0 %2539
  %2543 = vset.pattern.permute.xlu0 0
  %2544 = vperm.xlu0 %2543, %v1950
  %v2545 = vpop.permute.xlu0 %2544
  %2548 = vset.pattern.permute.xlu0 0
  %2549 = vperm.xlu0 %2548, %v1951
  %v2550 = vpop.permute.xlu0 %2549
  %2553 = vset.pattern.permute.xlu0 0
  %2554 = vperm.xlu0 %2553, %v1952
  %v2555 = vpop.permute.xlu0 %2554
  %2558 = vset.pattern.permute.xlu0 0
  %2559 = vperm.xlu0 %2558, %v1953
  %v2560 = vpop.permute.xlu0 %2559
  %2563 = vset.pattern.permute.xlu0 0
  %2564 = vperm.xlu0 %2563, %v1954
  %v2565 = vpop.permute.xlu0 %2564
  %2568 = vset.pattern.permute.xlu0 0
  %2569 = vperm.xlu0 %2568, %v1955
  %v2570 = vpop.permute.xlu0 %2569
  %2573 = vset.pattern.permute.xlu0 0
  %2574 = vperm.xlu0 %2573, %v1956
  %v2575 = vpop.permute.xlu0 %2574
  %2578 = vset.pattern.permute.xlu0 0
  %2579 = vperm.xlu0 %2578, %v1957
  %v2580 = vpop.permute.xlu0 %2579
  %2583 = vset.pattern.permute.xlu0 0
  %2584 = vperm.xlu0 %2583, %v1958
  %v2585 = vpop.permute.xlu0 %2584
  %2588 = vset.pattern.permute.xlu0 0
  %2589 = vperm.xlu0 %2588, %v1959
  %v2590 = vpop.permute.xlu0 %2589
  %2593 = vset.pattern.permute.xlu0 0
  %2594 = vperm.xlu0 %2593, %v1960
  %v2595 = vpop.permute.xlu0 %2594
  %2598 = vset.pattern.permute.xlu0 0
  %2599 = vperm.xlu0 %2598, %v1961
  %v2600 = vpop.permute.xlu0 %2599
  %v2602 = vld [vmem:[%s8] sm:$0xff]
  %v2603 = vld [vmem:[%s8 + $0x8] sm:$0xff]
  %v2604 = vld [vmem:[%s8 + $0x10] sm:$0xff]
  %v2605 = vld [vmem:[%s8 + $0x18] sm:$0xff]
  %v2606 = vld [vmem:[%s8 + $0x20] sm:$0xff]
  %v2607 = vld [vmem:[%s8 + $0x28] sm:$0xff]
  %v2608 = vld [vmem:[%s8 + $0x30] sm:$0xff]
  %v2609 = vld [vmem:[%s8 + $0x38] sm:$0xff]
  %v2610 = vld [vmem:[%s8 + $0x40] sm:$0xff]
  %v2611 = vld [vmem:[%s8 + $0x48] sm:$0xff]
  %v2612 = vld [vmem:[%s8 + $0x50] sm:$0xff]
  %v2613 = vld [vmem:[%s8 + $0x58] sm:$0xff]
  %v2614 = vld [vmem:[%s8 + $0x60] sm:$0xff]
  %v2615 = vld [vmem:[%s8 + $0x68] sm:$0xff]
  %v2616 = vld [vmem:[%s8 + $0x70] sm:$0xff]
  %v2617 = vld [vmem:[%s8 + $0x78] sm:$0xff]
  %v2618 = vld [vmem:[%s8 + $0x80] sm:$0xff]
  %v2619 = vld [vmem:[%s8 + $0x88] sm:$0xff]
  %v2620 = vld [vmem:[%s8 + $0x90] sm:$0xff]
  %v2621 = vld [vmem:[%s8 + $0x98] sm:$0xff]
  %v2622 = vld [vmem:[%s8 + $0xa0] sm:$0xff]
  %v2623 = vld [vmem:[%s8 + $0xa8] sm:$0xff]
  %v2624 = vld [vmem:[%s8 + $0xb0] sm:$0xff]
  %v2625 = vld [vmem:[%s8 + $0xb8] sm:$0xff]
  %v2626 = vld [vmem:[%s8 + $0xc0] sm:$0xff]
  %v2627 = vld [vmem:[%s8 + $0xc8] sm:$0xff]
  %v2628 = vld [vmem:[%s8 + $0xd0] sm:$0xff]
  %v2629 = vld [vmem:[%s8 + $0xd8] sm:$0xff]
  %v2630 = vld [vmem:[%s8 + $0xe0] sm:$0xff]
  %v2631 = vld [vmem:[%s8 + $0xe8] sm:$0xff]
  %v2632 = vld [vmem:[%s8 + $0xf0] sm:$0xff]
  %v2633 = vld [vmem:[%s8 + $0xf8] sm:$0xff]
  %v2634 = vld [vmem:[%s8 + $0x100] sm:$0xff]
  %v2635 = vld [vmem:[%s8 + $0x108] sm:$0xff]
  %v2636 = vld [vmem:[%s8 + $0x110] sm:$0xff]
  %v2637 = vld [vmem:[%s8 + $0x118] sm:$0xff]
  %v2638 = vld [vmem:[%s8 + $0x120] sm:$0xff]
  %v2639 = vld [vmem:[%s8 + $0x128] sm:$0xff]
  %v2640 = vld [vmem:[%s8 + $0x130] sm:$0xff]
  %v2641 = vld [vmem:[%s8 + $0x138] sm:$0xff]
  %v2642 = vld [vmem:[%s8 + $0x140] sm:$0xff]
  %v2643 = vld [vmem:[%s8 + $0x148] sm:$0xff]
  %v2644 = vld [vmem:[%s8 + $0x150] sm:$0xff]
  %v2645 = vld [vmem:[%s8 + $0x158] sm:$0xff]
  %v2646 = vld [vmem:[%s8 + $0x160] sm:$0xff]
  %v2647 = vld [vmem:[%s8 + $0x168] sm:$0xff]
  %v2648 = vld [vmem:[%s8 + $0x170] sm:$0xff]
  %v2649 = vld [vmem:[%s8 + $0x178] sm:$0xff]
  %v2650 = vld [vmem:[%s8 + $0x180] sm:$0xff]
  %v2651 = vld [vmem:[%s8 + $0x188] sm:$0xff]
  %v2652 = vld [vmem:[%s8 + $0x190] sm:$0xff]
  %v2653 = vld [vmem:[%s8 + $0x198] sm:$0xff]
  %v2654 = vld [vmem:[%s8 + $0x1a0] sm:$0xff]
  %v2655 = vld [vmem:[%s8 + $0x1a8] sm:$0xff]
  %v2656 = vld [vmem:[%s8 + $0x1b0] sm:$0xff]
  %v2657 = vld [vmem:[%s8 + $0x1b8] sm:$0xff]
  %v2658 = vld [vmem:[%s8 + $0x1c0] sm:$0xff]
  %v2659 = vld [vmem:[%s8 + $0x1c8] sm:$0xff]
  %v2660 = vld [vmem:[%s8 + $0x1d0] sm:$0xff]
  %v2661 = vld [vmem:[%s8 + $0x1d8] sm:$0xff]
  %v2662 = vld [vmem:[%s8 + $0x1e0] sm:$0xff]
  %v2663 = vld [vmem:[%s8 + $0x1e8] sm:$0xff]
  %v2664 = vld [vmem:[%s8 + $0x1f0] sm:$0xff]
  %v2665 = vld [vmem:[%s8 + $0x1f8] sm:$0xff]
  %v2666 = vld [vmem:[%s8 + $0x200] sm:$0xff]
  %v2667 = vld [vmem:[%s8 + $0x208] sm:$0xff]
  %v2668 = vld [vmem:[%s8 + $0x210] sm:$0xff]
  %v2669 = vld [vmem:[%s8 + $0x218] sm:$0xff]
  %v2670 = vld [vmem:[%s8 + $0x220] sm:$0xff]
  %v2671 = vld [vmem:[%s8 + $0x228] sm:$0xff]
  %v2672 = vld [vmem:[%s8 + $0x230] sm:$0xff]
  %v2673 = vld [vmem:[%s8 + $0x238] sm:$0xff]
  %v2674 = vld [vmem:[%s8 + $0x240] sm:$0xff]
  %v2675 = vld [vmem:[%s8 + $0x248] sm:$0xff]
  %v2676 = vld [vmem:[%s8 + $0x250] sm:$0xff]
  %v2677 = vld [vmem:[%s8 + $0x258] sm:$0xff]
  %v2678 = vld [vmem:[%s8 + $0x260] sm:$0xff]
  %v2679 = vld [vmem:[%s8 + $0x268] sm:$0xff]
  %v2680 = vld [vmem:[%s8 + $0x270] sm:$0xff]
  %v2681 = vld [vmem:[%s8 + $0x278] sm:$0xff]
  %v2682 = vld [vmem:[%s8 + $0x280] sm:$0xff]
  %v2683 = vld [vmem:[%s8 + $0x288] sm:$0xff]
  %v2684 = vld [vmem:[%s8 + $0x290] sm:$0xff]
  %v2685 = vld [vmem:[%s8 + $0x298] sm:$0xff]
  %v2686 = vld [vmem:[%s8 + $0x2a0] sm:$0xff]
  %v2687 = vld [vmem:[%s8 + $0x2a8] sm:$0xff]
  %v2688 = vld [vmem:[%s8 + $0x2b0] sm:$0xff]
  %v2689 = vld [vmem:[%s8 + $0x2b8] sm:$0xff]
  %v2690 = vld [vmem:[%s8 + $0x2c0] sm:$0xff]
  %v2691 = vld [vmem:[%s8 + $0x2c8] sm:$0xff]
  %v2692 = vld [vmem:[%s8 + $0x2d0] sm:$0xff]
  %v2693 = vld [vmem:[%s8 + $0x2d8] sm:$0xff]
  %v2694 = vld [vmem:[%s8 + $0x2e0] sm:$0xff]
  %v2695 = vld [vmem:[%s8 + $0x2e8] sm:$0xff]
  %v2696 = vld [vmem:[%s8 + $0x2f0] sm:$0xff]
  %v2697 = vld [vmem:[%s8 + $0x2f8] sm:$0xff]
  %v2698 = vld [vmem:[%s8 + $0x300] sm:$0xff]
  %v2699 = vld [vmem:[%s8 + $0x308] sm:$0xff]
  %v2700 = vld [vmem:[%s8 + $0x310] sm:$0xff]
  %v2701 = vld [vmem:[%s8 + $0x318] sm:$0xff]
  %v2702 = vld [vmem:[%s8 + $0x320] sm:$0xff]
  %v2703 = vld [vmem:[%s8 + $0x328] sm:$0xff]
  %v2704 = vld [vmem:[%s8 + $0x330] sm:$0xff]
  %v2705 = vld [vmem:[%s8 + $0x338] sm:$0xff]
  %v2706 = vld [vmem:[%s8 + $0x340] sm:$0xff]
  %v2707 = vld [vmem:[%s8 + $0x348] sm:$0xff]
  %v2708 = vld [vmem:[%s8 + $0x350] sm:$0xff]
  %v2709 = vld [vmem:[%s8 + $0x358] sm:$0xff]
  %v2710 = vld [vmem:[%s8 + $0x360] sm:$0xff]
  %v2711 = vld [vmem:[%s8 + $0x368] sm:$0xff]
  %v2712 = vld [vmem:[%s8 + $0x370] sm:$0xff]
  %v2713 = vld [vmem:[%s8 + $0x378] sm:$0xff]
  %v2714 = vld [vmem:[%s8 + $0x380] sm:$0xff]
  %v2715 = vld [vmem:[%s8 + $0x388] sm:$0xff]
  %v2716 = vld [vmem:[%s8 + $0x390] sm:$0xff]
  %v2717 = vld [vmem:[%s8 + $0x398] sm:$0xff]
  %v2718 = vld [vmem:[%s8 + $0x3a0] sm:$0xff]
  %v2719 = vld [vmem:[%s8 + $0x3a8] sm:$0xff]
  %v2720 = vld [vmem:[%s8 + $0x3b0] sm:$0xff]
  %v2721 = vld [vmem:[%s8 + $0x3b8] sm:$0xff]
  %v2722 = vld [vmem:[%s8 + $0x3c0] sm:$0xff]
  %v2723 = vld [vmem:[%s8 + $0x3c8] sm:$0xff]
  %v2724 = vld [vmem:[%s8 + $0x3d0] sm:$0xff]
  %v2725 = vld [vmem:[%s8 + $0x3d8] sm:$0xff]
  %v2726 = vld [vmem:[%s8 + $0x3e0] sm:$0xff]
  %v2727 = vld [vmem:[%s8 + $0x3e8] sm:$0xff]
  %v2728 = vld [vmem:[%s8 + $0x3f0] sm:$0xff]
  %v2729 = vld [vmem:[%s8 + $0x3f8] sm:$0xff]
  %2731 = vset.pattern.permute.xlu0 0
  %2732 = vperm.xlu0 %2731, %v2602
  %v2733 = vpop.permute.xlu0 %2732
  %2736 = vset.pattern.permute.xlu0 0
  %2737 = vperm.xlu0 %2736, %v2603
  %v2738 = vpop.permute.xlu0 %2737
  %2741 = vset.pattern.permute.xlu0 0
  %2742 = vperm.xlu0 %2741, %v2604
  %v2743 = vpop.permute.xlu0 %2742
  %2746 = vset.pattern.permute.xlu0 0
  %2747 = vperm.xlu0 %2746, %v2605
  %v2748 = vpop.permute.xlu0 %2747
  %2751 = vset.pattern.permute.xlu0 0
  %2752 = vperm.xlu0 %2751, %v2606
  %v2753 = vpop.permute.xlu0 %2752
  %2756 = vset.pattern.permute.xlu0 0
  %2757 = vperm.xlu0 %2756, %v2607
  %v2758 = vpop.permute.xlu0 %2757
  %2761 = vset.pattern.permute.xlu0 0
  %2762 = vperm.xlu0 %2761, %v2608
  %v2763 = vpop.permute.xlu0 %2762
  %2766 = vset.pattern.permute.xlu0 0
  %2767 = vperm.xlu0 %2766, %v2609
  %v2768 = vpop.permute.xlu0 %2767
  %2771 = vset.pattern.permute.xlu0 0
  %2772 = vperm.xlu0 %2771, %v2610
  %v2773 = vpop.permute.xlu0 %2772
  %2776 = vset.pattern.permute.xlu0 0
  %2777 = vperm.xlu0 %2776, %v2611
  %v2778 = vpop.permute.xlu0 %2777
  %2781 = vset.pattern.permute.xlu0 0
  %2782 = vperm.xlu0 %2781, %v2612
  %v2783 = vpop.permute.xlu0 %2782
  %2786 = vset.pattern.permute.xlu0 0
  %2787 = vperm.xlu0 %2786, %v2613
  %v2788 = vpop.permute.xlu0 %2787
  %2791 = vset.pattern.permute.xlu0 0
  %2792 = vperm.xlu0 %2791, %v2614
  %v2793 = vpop.permute.xlu0 %2792
  %2796 = vset.pattern.permute.xlu0 0
  %2797 = vperm.xlu0 %2796, %v2615
  %v2798 = vpop.permute.xlu0 %2797
  %2801 = vset.pattern.permute.xlu0 0
  %2802 = vperm.xlu0 %2801, %v2616
  %v2803 = vpop.permute.xlu0 %2802
  %2806 = vset.pattern.permute.xlu0 0
  %2807 = vperm.xlu0 %2806, %v2617
  %v2808 = vpop.permute.xlu0 %2807
  %2811 = vset.pattern.permute.xlu0 0
  %2812 = vperm.xlu0 %2811, %v2618
  %v2813 = vpop.permute.xlu0 %2812
  %2816 = vset.pattern.permute.xlu0 0
  %2817 = vperm.xlu0 %2816, %v2619
  %v2818 = vpop.permute.xlu0 %2817
  %2821 = vset.pattern.permute.xlu0 0
  %2822 = vperm.xlu0 %2821, %v2620
  %v2823 = vpop.permute.xlu0 %2822
  %2826 = vset.pattern.permute.xlu0 0
  %2827 = vperm.xlu0 %2826, %v2621
  %v2828 = vpop.permute.xlu0 %2827
  %2831 = vset.pattern.permute.xlu0 0
  %2832 = vperm.xlu0 %2831, %v2622
  %v2833 = vpop.permute.xlu0 %2832
  %2836 = vset.pattern.permute.xlu0 0
  %2837 = vperm.xlu0 %2836, %v2623
  %v2838 = vpop.permute.xlu0 %2837
  %2841 = vset.pattern.permute.xlu0 0
  %2842 = vperm.xlu0 %2841, %v2624
  %v2843 = vpop.permute.xlu0 %2842
  %2846 = vset.pattern.permute.xlu0 0
  %2847 = vperm.xlu0 %2846, %v2625
  %v2848 = vpop.permute.xlu0 %2847
  %2851 = vset.pattern.permute.xlu0 0
  %2852 = vperm.xlu0 %2851, %v2626
  %v2853 = vpop.permute.xlu0 %2852
  %2856 = vset.pattern.permute.xlu0 0
  %2857 = vperm.xlu0 %2856, %v2627
  %v2858 = vpop.permute.xlu0 %2857
  %2861 = vset.pattern.permute.xlu0 0
  %2862 = vperm.xlu0 %2861, %v2628
  %v2863 = vpop.permute.xlu0 %2862
  %2866 = vset.pattern.permute.xlu0 0
  %2867 = vperm.xlu0 %2866, %v2629
  %v2868 = vpop.permute.xlu0 %2867
  %2871 = vset.pattern.permute.xlu0 0
  %2872 = vperm.xlu0 %2871, %v2630
  %v2873 = vpop.permute.xlu0 %2872
  %2876 = vset.pattern.permute.xlu0 0
  %2877 = vperm.xlu0 %2876, %v2631
  %v2878 = vpop.permute.xlu0 %2877
  %2881 = vset.pattern.permute.xlu0 0
  %2882 = vperm.xlu0 %2881, %v2632
  %v2883 = vpop.permute.xlu0 %2882
  %2886 = vset.pattern.permute.xlu0 0
  %2887 = vperm.xlu0 %2886, %v2633
  %v2888 = vpop.permute.xlu0 %2887
  %2891 = vset.pattern.permute.xlu0 0
  %2892 = vperm.xlu0 %2891, %v2634
  %v2893 = vpop.permute.xlu0 %2892
  %2896 = vset.pattern.permute.xlu0 0
  %2897 = vperm.xlu0 %2896, %v2635
  %v2898 = vpop.permute.xlu0 %2897
  %2901 = vset.pattern.permute.xlu0 0
  %2902 = vperm.xlu0 %2901, %v2636
  %v2903 = vpop.permute.xlu0 %2902
  %2906 = vset.pattern.permute.xlu0 0
  %2907 = vperm.xlu0 %2906, %v2637
  %v2908 = vpop.permute.xlu0 %2907
  %2911 = vset.pattern.permute.xlu0 0
  %2912 = vperm.xlu0 %2911, %v2638
  %v2913 = vpop.permute.xlu0 %2912
  %2916 = vset.pattern.permute.xlu0 0
  %2917 = vperm.xlu0 %2916, %v2639
  %v2918 = vpop.permute.xlu0 %2917
  %2921 = vset.pattern.permute.xlu0 0
  %2922 = vperm.xlu0 %2921, %v2640
  %v2923 = vpop.permute.xlu0 %2922
  %2926 = vset.pattern.permute.xlu0 0
  %2927 = vperm.xlu0 %2926, %v2641
  %v2928 = vpop.permute.xlu0 %2927
  %2931 = vset.pattern.permute.xlu0 0
  %2932 = vperm.xlu0 %2931, %v2642
  %v2933 = vpop.permute.xlu0 %2932
  %2936 = vset.pattern.permute.xlu0 0
  %2937 = vperm.xlu0 %2936, %v2643
  %v2938 = vpop.permute.xlu0 %2937
  %2941 = vset.pattern.permute.xlu0 0
  %2942 = vperm.xlu0 %2941, %v2644
  %v2943 = vpop.permute.xlu0 %2942
  %2946 = vset.pattern.permute.xlu0 0
  %2947 = vperm.xlu0 %2946, %v2645
  %v2948 = vpop.permute.xlu0 %2947
  %2951 = vset.pattern.permute.xlu0 0
  %2952 = vperm.xlu0 %2951, %v2646
  %v2953 = vpop.permute.xlu0 %2952
  %2956 = vset.pattern.permute.xlu0 0
  %2957 = vperm.xlu0 %2956, %v2647
  %v2958 = vpop.permute.xlu0 %2957
  %2961 = vset.pattern.permute.xlu0 0
  %2962 = vperm.xlu0 %2961, %v2648
  %v2963 = vpop.permute.xlu0 %2962
  %2966 = vset.pattern.permute.xlu0 0
  %2967 = vperm.xlu0 %2966, %v2649
  %v2968 = vpop.permute.xlu0 %2967
  %2971 = vset.pattern.permute.xlu0 0
  %2972 = vperm.xlu0 %2971, %v2650
  %v2973 = vpop.permute.xlu0 %2972
  %2976 = vset.pattern.permute.xlu0 0
  %2977 = vperm.xlu0 %2976, %v2651
  %v2978 = vpop.permute.xlu0 %2977
  %2981 = vset.pattern.permute.xlu0 0
  %2982 = vperm.xlu0 %2981, %v2652
  %v2983 = vpop.permute.xlu0 %2982
  %2986 = vset.pattern.permute.xlu0 0
  %2987 = vperm.xlu0 %2986, %v2653
  %v2988 = vpop.permute.xlu0 %2987
  %2991 = vset.pattern.permute.xlu0 0
  %2992 = vperm.xlu0 %2991, %v2654
  %v2993 = vpop.permute.xlu0 %2992
  %2996 = vset.pattern.permute.xlu0 0
  %2997 = vperm.xlu0 %2996, %v2655
  %v2998 = vpop.permute.xlu0 %2997
  %3001 = vset.pattern.permute.xlu0 0
  %3002 = vperm.xlu0 %3001, %v2656
  %v3003 = vpop.permute.xlu0 %3002
  %3006 = vset.pattern.permute.xlu0 0
  %3007 = vperm.xlu0 %3006, %v2657
  %v3008 = vpop.permute.xlu0 %3007
  %3011 = vset.pattern.permute.xlu0 0
  %3012 = vperm.xlu0 %3011, %v2658
  %v3013 = vpop.permute.xlu0 %3012
  %3016 = vset.pattern.permute.xlu0 0
  %3017 = vperm.xlu0 %3016, %v2659
  %v3018 = vpop.permute.xlu0 %3017
  %3021 = vset.pattern.permute.xlu0 0
  %3022 = vperm.xlu0 %3021, %v2660
  %v3023 = vpop.permute.xlu0 %3022
  %3026 = vset.pattern.permute.xlu0 0
  %3027 = vperm.xlu0 %3026, %v2661
  %v3028 = vpop.permute.xlu0 %3027
  %3031 = vset.pattern.permute.xlu0 0
  %3032 = vperm.xlu0 %3031, %v2662
  %v3033 = vpop.permute.xlu0 %3032
  %3036 = vset.pattern.permute.xlu0 0
  %3037 = vperm.xlu0 %3036, %v2663
  %v3038 = vpop.permute.xlu0 %3037
  %3041 = vset.pattern.permute.xlu0 0
  %3042 = vperm.xlu0 %3041, %v2664
  %v3043 = vpop.permute.xlu0 %3042
  %3046 = vset.pattern.permute.xlu0 0
  %3047 = vperm.xlu0 %3046, %v2665
  %v3048 = vpop.permute.xlu0 %3047
  %3051 = vset.pattern.permute.xlu0 0
  %3052 = vperm.xlu0 %3051, %v2666
  %v3053 = vpop.permute.xlu0 %3052
  %3056 = vset.pattern.permute.xlu0 0
  %3057 = vperm.xlu0 %3056, %v2667
  %v3058 = vpop.permute.xlu0 %3057
  %3061 = vset.pattern.permute.xlu0 0
  %3062 = vperm.xlu0 %3061, %v2668
  %v3063 = vpop.permute.xlu0 %3062
  %3066 = vset.pattern.permute.xlu0 0
  %3067 = vperm.xlu0 %3066, %v2669
  %v3068 = vpop.permute.xlu0 %3067
  %3071 = vset.pattern.permute.xlu0 0
  %3072 = vperm.xlu0 %3071, %v2670
  %v3073 = vpop.permute.xlu0 %3072
  %3076 = vset.pattern.permute.xlu0 0
  %3077 = vperm.xlu0 %3076, %v2671
  %v3078 = vpop.permute.xlu0 %3077
  %3081 = vset.pattern.permute.xlu0 0
  %3082 = vperm.xlu0 %3081, %v2672
  %v3083 = vpop.permute.xlu0 %3082
  %3086 = vset.pattern.permute.xlu0 0
  %3087 = vperm.xlu0 %3086, %v2673
  %v3088 = vpop.permute.xlu0 %3087
  %3091 = vset.pattern.permute.xlu0 0
  %3092 = vperm.xlu0 %3091, %v2674
  %v3093 = vpop.permute.xlu0 %3092
  %3096 = vset.pattern.permute.xlu0 0
  %3097 = vperm.xlu0 %3096, %v2675
  %v3098 = vpop.permute.xlu0 %3097
  %3101 = vset.pattern.permute.xlu0 0
  %3102 = vperm.xlu0 %3101, %v2676
  %v3103 = vpop.permute.xlu0 %3102
  %3106 = vset.pattern.permute.xlu0 0
  %3107 = vperm.xlu0 %3106, %v2677
  %v3108 = vpop.permute.xlu0 %3107
  %3111 = vset.pattern.permute.xlu0 0
  %3112 = vperm.xlu0 %3111, %v2678
  %v3113 = vpop.permute.xlu0 %3112
  %3116 = vset.pattern.permute.xlu0 0
  %3117 = vperm.xlu0 %3116, %v2679
  %v3118 = vpop.permute.xlu0 %3117
  %3121 = vset.pattern.permute.xlu0 0
  %3122 = vperm.xlu0 %3121, %v2680
  %v3123 = vpop.permute.xlu0 %3122
  %3126 = vset.pattern.permute.xlu0 0
  %3127 = vperm.xlu0 %3126, %v2681
  %v3128 = vpop.permute.xlu0 %3127
  %3131 = vset.pattern.permute.xlu0 0
  %3132 = vperm.xlu0 %3131, %v2682
  %v3133 = vpop.permute.xlu0 %3132
  %3136 = vset.pattern.permute.xlu0 0
  %3137 = vperm.xlu0 %3136, %v2683
  %v3138 = vpop.permute.xlu0 %3137
  %3141 = vset.pattern.permute.xlu0 0
  %3142 = vperm.xlu0 %3141, %v2684
  %v3143 = vpop.permute.xlu0 %3142
  %3146 = vset.pattern.permute.xlu0 0
  %3147 = vperm.xlu0 %3146, %v2685
  %v3148 = vpop.permute.xlu0 %3147
  %3151 = vset.pattern.permute.xlu0 0
  %3152 = vperm.xlu0 %3151, %v2686
  %v3153 = vpop.permute.xlu0 %3152
  %3156 = vset.pattern.permute.xlu0 0
  %3157 = vperm.xlu0 %3156, %v2687
  %v3158 = vpop.permute.xlu0 %3157
  %3161 = vset.pattern.permute.xlu0 0
  %3162 = vperm.xlu0 %3161, %v2688
  %v3163 = vpop.permute.xlu0 %3162
  %3166 = vset.pattern.permute.xlu0 0
  %3167 = vperm.xlu0 %3166, %v2689
  %v3168 = vpop.permute.xlu0 %3167
  %3171 = vset.pattern.permute.xlu0 0
  %3172 = vperm.xlu0 %3171, %v2690
  %v3173 = vpop.permute.xlu0 %3172
  %3176 = vset.pattern.permute.xlu0 0
  %3177 = vperm.xlu0 %3176, %v2691
  %v3178 = vpop.permute.xlu0 %3177
  %3181 = vset.pattern.permute.xlu0 0
  %3182 = vperm.xlu0 %3181, %v2692
  %v3183 = vpop.permute.xlu0 %3182
  %3186 = vset.pattern.permute.xlu0 0
  %3187 = vperm.xlu0 %3186, %v2693
  %v3188 = vpop.permute.xlu0 %3187
  %3191 = vset.pattern.permute.xlu0 0
  %3192 = vperm.xlu0 %3191, %v2694
  %v3193 = vpop.permute.xlu0 %3192
  %3196 = vset.pattern.permute.xlu0 0
  %3197 = vperm.xlu0 %3196, %v2695
  %v3198 = vpop.permute.xlu0 %3197
  %3201 = vset.pattern.permute.xlu0 0
  %3202 = vperm.xlu0 %3201, %v2696
  %v3203 = vpop.permute.xlu0 %3202
  %3206 = vset.pattern.permute.xlu0 0
  %3207 = vperm.xlu0 %3206, %v2697
  %v3208 = vpop.permute.xlu0 %3207
  %3211 = vset.pattern.permute.xlu0 0
  %3212 = vperm.xlu0 %3211, %v2698
  %v3213 = vpop.permute.xlu0 %3212
  %3216 = vset.pattern.permute.xlu0 0
  %3217 = vperm.xlu0 %3216, %v2699
  %v3218 = vpop.permute.xlu0 %3217
  %3221 = vset.pattern.permute.xlu0 0
  %3222 = vperm.xlu0 %3221, %v2700
  %v3223 = vpop.permute.xlu0 %3222
  %3226 = vset.pattern.permute.xlu0 0
  %3227 = vperm.xlu0 %3226, %v2701
  %v3228 = vpop.permute.xlu0 %3227
  %3231 = vset.pattern.permute.xlu0 0
  %3232 = vperm.xlu0 %3231, %v2702
  %v3233 = vpop.permute.xlu0 %3232
  %3236 = vset.pattern.permute.xlu0 0
  %3237 = vperm.xlu0 %3236, %v2703
  %v3238 = vpop.permute.xlu0 %3237
  %3241 = vset.pattern.permute.xlu0 0
  %3242 = vperm.xlu0 %3241, %v2704
  %v3243 = vpop.permute.xlu0 %3242
  %3246 = vset.pattern.permute.xlu0 0
  %3247 = vperm.xlu0 %3246, %v2705
  %v3248 = vpop.permute.xlu0 %3247
  %3251 = vset.pattern.permute.xlu0 0
  %3252 = vperm.xlu0 %3251, %v2706
  %v3253 = vpop.permute.xlu0 %3252
  %3256 = vset.pattern.permute.xlu0 0
  %3257 = vperm.xlu0 %3256, %v2707
  %v3258 = vpop.permute.xlu0 %3257
  %3261 = vset.pattern.permute.xlu0 0
  %3262 = vperm.xlu0 %3261, %v2708
  %v3263 = vpop.permute.xlu0 %3262
  %3266 = vset.pattern.permute.xlu0 0
  %3267 = vperm.xlu0 %3266, %v2709
  %v3268 = vpop.permute.xlu0 %3267
  %3271 = vset.pattern.permute.xlu0 0
  %3272 = vperm.xlu0 %3271, %v2710
  %v3273 = vpop.permute.xlu0 %3272
  %3276 = vset.pattern.permute.xlu0 0
  %3277 = vperm.xlu0 %3276, %v2711
  %v3278 = vpop.permute.xlu0 %3277
  %3281 = vset.pattern.permute.xlu0 0
  %3282 = vperm.xlu0 %3281, %v2712
  %v3283 = vpop.permute.xlu0 %3282
  %3286 = vset.pattern.permute.xlu0 0
  %3287 = vperm.xlu0 %3286, %v2713
  %v3288 = vpop.permute.xlu0 %3287
  %3291 = vset.pattern.permute.xlu0 0
  %3292 = vperm.xlu0 %3291, %v2714
  %v3293 = vpop.permute.xlu0 %3292
  %3296 = vset.pattern.permute.xlu0 0
  %3297 = vperm.xlu0 %3296, %v2715
  %v3298 = vpop.permute.xlu0 %3297
  %3301 = vset.pattern.permute.xlu0 0
  %3302 = vperm.xlu0 %3301, %v2716
  %v3303 = vpop.permute.xlu0 %3302
  %3306 = vset.pattern.permute.xlu0 0
  %3307 = vperm.xlu0 %3306, %v2717
  %v3308 = vpop.permute.xlu0 %3307
  %3311 = vset.pattern.permute.xlu0 0
  %3312 = vperm.xlu0 %3311, %v2718
  %v3313 = vpop.permute.xlu0 %3312
  %3316 = vset.pattern.permute.xlu0 0
  %3317 = vperm.xlu0 %3316, %v2719
  %v3318 = vpop.permute.xlu0 %3317
  %3321 = vset.pattern.permute.xlu0 0
  %3322 = vperm.xlu0 %3321, %v2720
  %v3323 = vpop.permute.xlu0 %3322
  %3326 = vset.pattern.permute.xlu0 0
  %3327 = vperm.xlu0 %3326, %v2721
  %v3328 = vpop.permute.xlu0 %3327
  %3331 = vset.pattern.permute.xlu0 0
  %3332 = vperm.xlu0 %3331, %v2722
  %v3333 = vpop.permute.xlu0 %3332
  %3336 = vset.pattern.permute.xlu0 0
  %3337 = vperm.xlu0 %3336, %v2723
  %v3338 = vpop.permute.xlu0 %3337
  %3341 = vset.pattern.permute.xlu0 0
  %3342 = vperm.xlu0 %3341, %v2724
  %v3343 = vpop.permute.xlu0 %3342
  %3346 = vset.pattern.permute.xlu0 0
  %3347 = vperm.xlu0 %3346, %v2725
  %v3348 = vpop.permute.xlu0 %3347
  %3351 = vset.pattern.permute.xlu0 0
  %3352 = vperm.xlu0 %3351, %v2726
  %v3353 = vpop.permute.xlu0 %3352
  %3356 = vset.pattern.permute.xlu0 0
  %3357 = vperm.xlu0 %3356, %v2727
  %v3358 = vpop.permute.xlu0 %3357
  %3361 = vset.pattern.permute.xlu0 0
  %3362 = vperm.xlu0 %3361, %v2728
  %v3363 = vpop.permute.xlu0 %3362
  %3366 = vset.pattern.permute.xlu0 0
  %3367 = vperm.xlu0 %3366, %v2729
  %v3368 = vpop.permute.xlu0 %3367
  %v3370 = vld [vmem:[%s1] sm:$0x1]
  %v3371 = vld [vmem:[%s1 + $0x1] sm:$0x1]
  %v3372 = vld [vmem:[%s1 + $0x2] sm:$0x1]
  %v3373 = vld [vmem:[%s1 + $0x3] sm:$0x1]
  %v3374 = vld [vmem:[%s1 + $0x4] sm:$0x1]
  %v3375 = vld [vmem:[%s1 + $0x5] sm:$0x1]
  %v3376 = vld [vmem:[%s1 + $0x6] sm:$0x1]
  %v3377 = vld [vmem:[%s1 + $0x7] sm:$0x1]
  %v3378 = vld [vmem:[%s1 + $0x8] sm:$0x1]
  %v3379 = vld [vmem:[%s1 + $0x9] sm:$0x1]
  %v3380 = vld [vmem:[%s1 + $0xa] sm:$0x1]
  %v3381 = vld [vmem:[%s1 + $0xb] sm:$0x1]
  %v3382 = vld [vmem:[%s1 + $0xc] sm:$0x1]
  %v3383 = vld [vmem:[%s1 + $0xd] sm:$0x1]
  %v3384 = vld [vmem:[%s1 + $0xe] sm:$0x1]
  %v3385 = vld [vmem:[%s1 + $0xf] sm:$0x1]
  %v3386 = vld [vmem:[%s1 + $0x10] sm:$0x1]
  %v3387 = vld [vmem:[%s1 + $0x11] sm:$0x1]
  %v3388 = vld [vmem:[%s1 + $0x12] sm:$0x1]
  %v3389 = vld [vmem:[%s1 + $0x13] sm:$0x1]
  %v3390 = vld [vmem:[%s1 + $0x14] sm:$0x1]
  %v3391 = vld [vmem:[%s1 + $0x15] sm:$0x1]
  %v3392 = vld [vmem:[%s1 + $0x16] sm:$0x1]
  %v3393 = vld [vmem:[%s1 + $0x17] sm:$0x1]
  %v3394 = vld [vmem:[%s1 + $0x18] sm:$0x1]
  %v3395 = vld [vmem:[%s1 + $0x19] sm:$0x1]
  %v3396 = vld [vmem:[%s1 + $0x1a] sm:$0x1]
  %v3397 = vld [vmem:[%s1 + $0x1b] sm:$0x1]
  %v3398 = vld [vmem:[%s1 + $0x1c] sm:$0x1]
  %v3399 = vld [vmem:[%s1 + $0x1d] sm:$0x1]
  %v3400 = vld [vmem:[%s1 + $0x1e] sm:$0x1]
  %v3401 = vld [vmem:[%s1 + $0x1f] sm:$0x1]
  %v3434 = vlaneseq
  %v3435 = vshrl.u32 %v3434, 7
  %v3436 = vsub.s32 0, %v3435
  %v3437 = vrot.slane %v3370, %v3436
  %v3438 = vlaneseq
  %v3439 = vshrl.u32 %v3438, 7
  %v3440 = vsub.s32 0, %v3439
  %v3441 = vrot.slane %v3371, %v3440
  %v3442 = vlaneseq
  %v3443 = vshrl.u32 %v3442, 7
  %v3444 = vsub.s32 0, %v3443
  %v3445 = vrot.slane %v3372, %v3444
  %v3446 = vlaneseq
  %v3447 = vshrl.u32 %v3446, 7
  %v3448 = vsub.s32 0, %v3447
  %v3449 = vrot.slane %v3373, %v3448
  %v3450 = vlaneseq
  %v3451 = vshrl.u32 %v3450, 7
  %v3452 = vsub.s32 0, %v3451
  %v3453 = vrot.slane %v3374, %v3452
  %v3454 = vlaneseq
  %v3455 = vshrl.u32 %v3454, 7
  %v3456 = vsub.s32 0, %v3455
  %v3457 = vrot.slane %v3375, %v3456
  %v3458 = vlaneseq
  %v3459 = vshrl.u32 %v3458, 7
  %v3460 = vsub.s32 0, %v3459
  %v3461 = vrot.slane %v3376, %v3460
  %v3462 = vlaneseq
  %v3463 = vshrl.u32 %v3462, 7
  %v3464 = vsub.s32 0, %v3463
  %v3465 = vrot.slane %v3377, %v3464
  %v3466 = vlaneseq
  %v3467 = vshrl.u32 %v3466, 7
  %v3468 = vsub.s32 0, %v3467
  %v3469 = vrot.slane %v3378, %v3468
  %v3470 = vlaneseq
  %v3471 = vshrl.u32 %v3470, 7
  %v3472 = vsub.s32 0, %v3471
  %v3473 = vrot.slane %v3379, %v3472
  %v3474 = vlaneseq
  %v3475 = vshrl.u32 %v3474, 7
  %v3476 = vsub.s32 0, %v3475
  %v3477 = vrot.slane %v3380, %v3476
  %v3478 = vlaneseq
  %v3479 = vshrl.u32 %v3478, 7
  %v3480 = vsub.s32 0, %v3479
  %v3481 = vrot.slane %v3381, %v3480
  %v3482 = vlaneseq
  %v3483 = vshrl.u32 %v3482, 7
  %v3484 = vsub.s32 0, %v3483
  %v3485 = vrot.slane %v3382, %v3484
  %v3486 = vlaneseq
  %v3487 = vshrl.u32 %v3486, 7
  %v3488 = vsub.s32 0, %v3487
  %v3489 = vrot.slane %v3383, %v3488
  %v3490 = vlaneseq
  %v3491 = vshrl.u32 %v3490, 7
  %v3492 = vsub.s32 0, %v3491
  %v3493 = vrot.slane %v3384, %v3492
  %v3494 = vlaneseq
  %v3495 = vshrl.u32 %v3494, 7
  %v3496 = vsub.s32 0, %v3495
  %v3497 = vrot.slane %v3385, %v3496
  %v3498 = vlaneseq
  %v3499 = vshrl.u32 %v3498, 7
  %v3500 = vsub.s32 0, %v3499
  %v3501 = vrot.slane %v3386, %v3500
  %v3502 = vlaneseq
  %v3503 = vshrl.u32 %v3502, 7
  %v3504 = vsub.s32 0, %v3503
  %v3505 = vrot.slane %v3387, %v3504
  %v3506 = vlaneseq
  %v3507 = vshrl.u32 %v3506, 7
  %v3508 = vsub.s32 0, %v3507
  %v3509 = vrot.slane %v3388, %v3508
  %v3510 = vlaneseq
  %v3511 = vshrl.u32 %v3510, 7
  %v3512 = vsub.s32 0, %v3511
  %v3513 = vrot.slane %v3389, %v3512
  %v3514 = vlaneseq
  %v3515 = vshrl.u32 %v3514, 7
  %v3516 = vsub.s32 0, %v3515
  %v3517 = vrot.slane %v3390, %v3516
  %v3518 = vlaneseq
  %v3519 = vshrl.u32 %v3518, 7
  %v3520 = vsub.s32 0, %v3519
  %v3521 = vrot.slane %v3391, %v3520
  %v3522 = vlaneseq
  %v3523 = vshrl.u32 %v3522, 7
  %v3524 = vsub.s32 0, %v3523
  %v3525 = vrot.slane %v3392, %v3524
  %v3526 = vlaneseq
  %v3527 = vshrl.u32 %v3526, 7
  %v3528 = vsub.s32 0, %v3527
  %v3529 = vrot.slane %v3393, %v3528
  %v3530 = vlaneseq
  %v3531 = vshrl.u32 %v3530, 7
  %v3532 = vsub.s32 0, %v3531
  %v3533 = vrot.slane %v3394, %v3532
  %v3534 = vlaneseq
  %v3535 = vshrl.u32 %v3534, 7
  %v3536 = vsub.s32 0, %v3535
  %v3537 = vrot.slane %v3395, %v3536
  %v3538 = vlaneseq
  %v3539 = vshrl.u32 %v3538, 7
  %v3540 = vsub.s32 0, %v3539
  %v3541 = vrot.slane %v3396, %v3540
  %v3542 = vlaneseq
  %v3543 = vshrl.u32 %v3542, 7
  %v3544 = vsub.s32 0, %v3543
  %v3545 = vrot.slane %v3397, %v3544
  %v3546 = vlaneseq
  %v3547 = vshrl.u32 %v3546, 7
  %v3548 = vsub.s32 0, %v3547
  %v3549 = vrot.slane %v3398, %v3548
  %v3550 = vlaneseq
  %v3551 = vshrl.u32 %v3550, 7
  %v3552 = vsub.s32 0, %v3551
  %v3553 = vrot.slane %v3399, %v3552
  %v3554 = vlaneseq
  %v3555 = vshrl.u32 %v3554, 7
  %v3556 = vsub.s32 0, %v3555
  %v3557 = vrot.slane %v3400, %v3556
  %v3558 = vlaneseq
  %v3559 = vshrl.u32 %v3558, 7
  %v3560 = vsub.s32 0, %v3559
  %v3561 = vrot.slane %v3401, %v3560
  %v3594 = vsub.f32 1.0, %v429
  %v3595 = vsub.f32 1.0, %v434
  %v3596 = vsub.f32 1.0, %v439
  %v3597 = vsub.f32 1.0, %v444
  %v3598 = vsub.f32 1.0, %v449
  %v3599 = vsub.f32 1.0, %v454
  %v3600 = vsub.f32 1.0, %v459
  %v3601 = vsub.f32 1.0, %v464
  %v3602 = vsub.f32 1.0, %v469
  %v3603 = vsub.f32 1.0, %v474
  %v3604 = vsub.f32 1.0, %v479
  %v3605 = vsub.f32 1.0, %v484
  %v3606 = vsub.f32 1.0, %v489
  %v3607 = vsub.f32 1.0, %v494
  %v3608 = vsub.f32 1.0, %v499
  %v3609 = vsub.f32 1.0, %v504
  %v3610 = vsub.f32 1.0, %v509
  %v3611 = vsub.f32 1.0, %v514
  %v3612 = vsub.f32 1.0, %v519
  %v3613 = vsub.f32 1.0, %v524
  %v3614 = vsub.f32 1.0, %v529
  %v3615 = vsub.f32 1.0, %v534
  %v3616 = vsub.f32 1.0, %v539
  %v3617 = vsub.f32 1.0, %v544
  %v3618 = vsub.f32 1.0, %v549
  %v3619 = vsub.f32 1.0, %v554
  %v3620 = vsub.f32 1.0, %v559
  %v3621 = vsub.f32 1.0, %v564
  %v3622 = vsub.f32 1.0, %v569
  %v3623 = vsub.f32 1.0, %v574
  %v3624 = vsub.f32 1.0, %v579
  %v3625 = vsub.f32 1.0, %v584
  %v3626 = vsub.f32 1.0, %v589
  %v3627 = vsub.f32 1.0, %v594
  %v3628 = vsub.f32 1.0, %v599
  %v3629 = vsub.f32 1.0, %v604
  %v3630 = vsub.f32 1.0, %v609
  %v3631 = vsub.f32 1.0, %v614
  %v3632 = vsub.f32 1.0, %v619
  %v3633 = vsub.f32 1.0, %v624
  %v3634 = vsub.f32 1.0, %v629
  %v3635 = vsub.f32 1.0, %v634
  %v3636 = vsub.f32 1.0, %v639
  %v3637 = vsub.f32 1.0, %v644
  %v3638 = vsub.f32 1.0, %v649
  %v3639 = vsub.f32 1.0, %v654
  %v3640 = vsub.f32 1.0, %v659
  %v3641 = vsub.f32 1.0, %v664
  %v3642 = vsub.f32 1.0, %v669
  %v3643 = vsub.f32 1.0, %v674
  %v3644 = vsub.f32 1.0, %v679
  %v3645 = vsub.f32 1.0, %v684
  %v3646 = vsub.f32 1.0, %v689
  %v3647 = vsub.f32 1.0, %v694
  %v3648 = vsub.f32 1.0, %v699
  %v3649 = vsub.f32 1.0, %v704
  %v3650 = vsub.f32 1.0, %v709
  %v3651 = vsub.f32 1.0, %v714
  %v3652 = vsub.f32 1.0, %v719
  %v3653 = vsub.f32 1.0, %v724
  %v3654 = vsub.f32 1.0, %v729
  %v3655 = vsub.f32 1.0, %v734
  %v3656 = vsub.f32 1.0, %v739
  %v3657 = vsub.f32 1.0, %v744
  %v3658 = vsub.f32 1.0, %v749
  %v3659 = vsub.f32 1.0, %v754
  %v3660 = vsub.f32 1.0, %v759
  %v3661 = vsub.f32 1.0, %v764
  %v3662 = vsub.f32 1.0, %v769
  %v3663 = vsub.f32 1.0, %v774
  %v3664 = vsub.f32 1.0, %v779
  %v3665 = vsub.f32 1.0, %v784
  %v3666 = vsub.f32 1.0, %v789
  %v3667 = vsub.f32 1.0, %v794
  %v3668 = vsub.f32 1.0, %v799
  %v3669 = vsub.f32 1.0, %v804
  %v3670 = vsub.f32 1.0, %v809
  %v3671 = vsub.f32 1.0, %v814
  %v3672 = vsub.f32 1.0, %v819
  %v3673 = vsub.f32 1.0, %v824
  %v3674 = vsub.f32 1.0, %v829
  %v3675 = vsub.f32 1.0, %v834
  %v3676 = vsub.f32 1.0, %v839
  %v3677 = vsub.f32 1.0, %v844
  %v3678 = vsub.f32 1.0, %v849
  %v3679 = vsub.f32 1.0, %v854
  %v3680 = vsub.f32 1.0, %v859
  %v3681 = vsub.f32 1.0, %v864
  %v3682 = vsub.f32 1.0, %v869
  %v3683 = vsub.f32 1.0, %v874
  %v3684 = vsub.f32 1.0, %v879
  %v3685 = vsub.f32 1.0, %v884
  %v3686 = vsub.f32 1.0, %v889
  %v3687 = vsub.f32 1.0, %v894
  %v3688 = vsub.f32 1.0, %v899
  %v3689 = vsub.f32 1.0, %v904
  %v3690 = vsub.f32 1.0, %v909
  %v3691 = vsub.f32 1.0, %v914
  %v3692 = vsub.f32 1.0, %v919
  %v3693 = vsub.f32 1.0, %v924
  %v3694 = vsub.f32 1.0, %v929
  %v3695 = vsub.f32 1.0, %v934
  %v3696 = vsub.f32 1.0, %v939
  %v3697 = vsub.f32 1.0, %v944
  %v3698 = vsub.f32 1.0, %v949
  %v3699 = vsub.f32 1.0, %v954
  %v3700 = vsub.f32 1.0, %v959
  %v3701 = vsub.f32 1.0, %v964
  %v3702 = vsub.f32 1.0, %v969
  %v3703 = vsub.f32 1.0, %v974
  %v3704 = vsub.f32 1.0, %v979
  %v3705 = vsub.f32 1.0, %v984
  %v3706 = vsub.f32 1.0, %v989
  %v3707 = vsub.f32 1.0, %v994
  %v3708 = vsub.f32 1.0, %v999
  %v3709 = vsub.f32 1.0, %v1004
  %v3710 = vsub.f32 1.0, %v1009
  %v3711 = vsub.f32 1.0, %v1014
  %v3712 = vsub.f32 1.0, %v1019
  %v3713 = vsub.f32 1.0, %v1024
  %v3714 = vsub.f32 1.0, %v1029
  %v3715 = vsub.f32 1.0, %v1034
  %v3716 = vsub.f32 1.0, %v1039
  %v3717 = vsub.f32 1.0, %v1044
  %v3718 = vsub.f32 1.0, %v1049
  %v3719 = vsub.f32 1.0, %v1054
  %v3720 = vsub.f32 1.0, %v1059
  %v3721 = vsub.f32 1.0, %v1064
  %v3722 = vmul.f32 %v3594, %v38
  %v3723 = vmul.f32 %v3595, %v39
  %v3724 = vmul.f32 %v3596, %v40
  %v3725 = vmul.f32 %v3597, %v41
  %v3726 = vmul.f32 %v3598, %v42
  %v3727 = vmul.f32 %v3599, %v43
  %v3728 = vmul.f32 %v3600, %v44
  %v3729 = vmul.f32 %v3601, %v45
  %v3730 = vmul.f32 %v3602, %v46
  %v3731 = vmul.f32 %v3603, %v47
  %v3732 = vmul.f32 %v3604, %v48
  %v3733 = vmul.f32 %v3605, %v49
  %v3734 = vmul.f32 %v3606, %v50
  %v3735 = vmul.f32 %v3607, %v51
  %v3736 = vmul.f32 %v3608, %v52
  %v3737 = vmul.f32 %v3609, %v53
  %v3738 = vmul.f32 %v3610, %v54
  %v3739 = vmul.f32 %v3611, %v55
  %v3740 = vmul.f32 %v3612, %v56
  %v3741 = vmul.f32 %v3613, %v57
  %v3742 = vmul.f32 %v3614, %v58
  %v3743 = vmul.f32 %v3615, %v59
  %v3744 = vmul.f32 %v3616, %v60
  %v3745 = vmul.f32 %v3617, %v61
  %v3746 = vmul.f32 %v3618, %v62
  %v3747 = vmul.f32 %v3619, %v63
  %v3748 = vmul.f32 %v3620, %v64
  %v3749 = vmul.f32 %v3621, %v65
  %v3750 = vmul.f32 %v3622, %v66
  %v3751 = vmul.f32 %v3623, %v67
  %v3752 = vmul.f32 %v3624, %v68
  %v3753 = vmul.f32 %v3625, %v69
  %v3754 = vmul.f32 %v3626, %v70
  %v3755 = vmul.f32 %v3627, %v71
  %v3756 = vmul.f32 %v3628, %v72
  %v3757 = vmul.f32 %v3629, %v73
  %v3758 = vmul.f32 %v3630, %v74
  %v3759 = vmul.f32 %v3631, %v75
  %v3760 = vmul.f32 %v3632, %v76
  %v3761 = vmul.f32 %v3633, %v77
  %v3762 = vmul.f32 %v3634, %v78
  %v3763 = vmul.f32 %v3635, %v79
  %v3764 = vmul.f32 %v3636, %v80
  %v3765 = vmul.f32 %v3637, %v81
  %v3766 = vmul.f32 %v3638, %v82
  %v3767 = vmul.f32 %v3639, %v83
  %v3768 = vmul.f32 %v3640, %v84
  %v3769 = vmul.f32 %v3641, %v85
  %v3770 = vmul.f32 %v3642, %v86
  %v3771 = vmul.f32 %v3643, %v87
  %v3772 = vmul.f32 %v3644, %v88
  %v3773 = vmul.f32 %v3645, %v89
  %v3774 = vmul.f32 %v3646, %v90
  %v3775 = vmul.f32 %v3647, %v91
  %v3776 = vmul.f32 %v3648, %v92
  %v3777 = vmul.f32 %v3649, %v93
  %v3778 = vmul.f32 %v3650, %v94
  %v3779 = vmul.f32 %v3651, %v95
  %v3780 = vmul.f32 %v3652, %v96
  %v3781 = vmul.f32 %v3653, %v97
  %v3782 = vmul.f32 %v3654, %v98
  %v3783 = vmul.f32 %v3655, %v99
  %v3784 = vmul.f32 %v3656, %v100
  %v3785 = vmul.f32 %v3657, %v101
  %v3786 = vmul.f32 %v3658, %v102
  %v3787 = vmul.f32 %v3659, %v103
  %v3788 = vmul.f32 %v3660, %v104
  %v3789 = vmul.f32 %v3661, %v105
  %v3790 = vmul.f32 %v3662, %v106
  %v3791 = vmul.f32 %v3663, %v107
  %v3792 = vmul.f32 %v3664, %v108
  %v3793 = vmul.f32 %v3665, %v109
  %v3794 = vmul.f32 %v3666, %v110
  %v3795 = vmul.f32 %v3667, %v111
  %v3796 = vmul.f32 %v3668, %v112
  %v3797 = vmul.f32 %v3669, %v113
  %v3798 = vmul.f32 %v3670, %v114
  %v3799 = vmul.f32 %v3671, %v115
  %v3800 = vmul.f32 %v3672, %v116
  %v3801 = vmul.f32 %v3673, %v117
  %v3802 = vmul.f32 %v3674, %v118
  %v3803 = vmul.f32 %v3675, %v119
  %v3804 = vmul.f32 %v3676, %v120
  %v3805 = vmul.f32 %v3677, %v121
  %v3806 = vmul.f32 %v3678, %v122
  %v3807 = vmul.f32 %v3679, %v123
  %v3808 = vmul.f32 %v3680, %v124
  %v3809 = vmul.f32 %v3681, %v125
  %v3810 = vmul.f32 %v3682, %v126
  %v3811 = vmul.f32 %v3683, %v127
  %v3812 = vmul.f32 %v3684, %v128
  %v3813 = vmul.f32 %v3685, %v129
  %v3814 = vmul.f32 %v3686, %v130
  %v3815 = vmul.f32 %v3687, %v131
  %v3816 = vmul.f32 %v3688, %v132
  %v3817 = vmul.f32 %v3689, %v133
  %v3818 = vmul.f32 %v3690, %v134
  %v3819 = vmul.f32 %v3691, %v135
  %v3820 = vmul.f32 %v3692, %v136
  %v3821 = vmul.f32 %v3693, %v137
  %v3822 = vmul.f32 %v3694, %v138
  %v3823 = vmul.f32 %v3695, %v139
  %v3824 = vmul.f32 %v3696, %v140
  %v3825 = vmul.f32 %v3697, %v141
  %v3826 = vmul.f32 %v3698, %v142
  %v3827 = vmul.f32 %v3699, %v143
  %v3828 = vmul.f32 %v3700, %v144
  %v3829 = vmul.f32 %v3701, %v145
  %v3830 = vmul.f32 %v3702, %v146
  %v3831 = vmul.f32 %v3703, %v147
  %v3832 = vmul.f32 %v3704, %v148
  %v3833 = vmul.f32 %v3705, %v149
  %v3834 = vmul.f32 %v3706, %v150
  %v3835 = vmul.f32 %v3707, %v151
  %v3836 = vmul.f32 %v3708, %v152
  %v3837 = vmul.f32 %v3709, %v153
  %v3838 = vmul.f32 %v3710, %v154
  %v3839 = vmul.f32 %v3711, %v155
  %v3840 = vmul.f32 %v3712, %v156
  %v3841 = vmul.f32 %v3713, %v157
  %v3842 = vmul.f32 %v3714, %v158
  %v3843 = vmul.f32 %v3715, %v159
  %v3844 = vmul.f32 %v3716, %v160
  %v3845 = vmul.f32 %v3717, %v161
  %v3846 = vmul.f32 %v3718, %v162
  %v3847 = vmul.f32 %v3719, %v163
  %v3848 = vmul.f32 %v3720, %v164
  %v3849 = vmul.f32 %v3721, %v165
  %v3850 = vadd.f32 %v429, %v3722
  %v3851 = vadd.f32 %v434, %v3723
  %v3852 = vadd.f32 %v439, %v3724
  %v3853 = vadd.f32 %v444, %v3725
  %v3854 = vadd.f32 %v449, %v3726
  %v3855 = vadd.f32 %v454, %v3727
  %v3856 = vadd.f32 %v459, %v3728
  %v3857 = vadd.f32 %v464, %v3729
  %v3858 = vadd.f32 %v469, %v3730
  %v3859 = vadd.f32 %v474, %v3731
  %v3860 = vadd.f32 %v479, %v3732
  %v3861 = vadd.f32 %v484, %v3733
  %v3862 = vadd.f32 %v489, %v3734
  %v3863 = vadd.f32 %v494, %v3735
  %v3864 = vadd.f32 %v499, %v3736
  %v3865 = vadd.f32 %v504, %v3737
  %v3866 = vadd.f32 %v509, %v3738
  %v3867 = vadd.f32 %v514, %v3739
  %v3868 = vadd.f32 %v519, %v3740
  %v3869 = vadd.f32 %v524, %v3741
  %v3870 = vadd.f32 %v529, %v3742
  %v3871 = vadd.f32 %v534, %v3743
  %v3872 = vadd.f32 %v539, %v3744
  %v3873 = vadd.f32 %v544, %v3745
  %v3874 = vadd.f32 %v549, %v3746
  %v3875 = vadd.f32 %v554, %v3747
  %v3876 = vadd.f32 %v559, %v3748
  %v3877 = vadd.f32 %v564, %v3749
  %v3878 = vadd.f32 %v569, %v3750
  %v3879 = vadd.f32 %v574, %v3751
  %v3880 = vadd.f32 %v579, %v3752
  %v3881 = vadd.f32 %v584, %v3753
  %v3882 = vadd.f32 %v589, %v3754
  %v3883 = vadd.f32 %v594, %v3755
  %v3884 = vadd.f32 %v599, %v3756
  %v3885 = vadd.f32 %v604, %v3757
  %v3886 = vadd.f32 %v609, %v3758
  %v3887 = vadd.f32 %v614, %v3759
  %v3888 = vadd.f32 %v619, %v3760
  %v3889 = vadd.f32 %v624, %v3761
  %v3890 = vadd.f32 %v629, %v3762
  %v3891 = vadd.f32 %v634, %v3763
  %v3892 = vadd.f32 %v639, %v3764
  %v3893 = vadd.f32 %v644, %v3765
  %v3894 = vadd.f32 %v649, %v3766
  %v3895 = vadd.f32 %v654, %v3767
  %v3896 = vadd.f32 %v659, %v3768
  %v3897 = vadd.f32 %v664, %v3769
  %v3898 = vadd.f32 %v669, %v3770
  %v3899 = vadd.f32 %v674, %v3771
  %v3900 = vadd.f32 %v679, %v3772
  %v3901 = vadd.f32 %v684, %v3773
  %v3902 = vadd.f32 %v689, %v3774
  %v3903 = vadd.f32 %v694, %v3775
  %v3904 = vadd.f32 %v699, %v3776
  %v3905 = vadd.f32 %v704, %v3777
  %v3906 = vadd.f32 %v709, %v3778
  %v3907 = vadd.f32 %v714, %v3779
  %v3908 = vadd.f32 %v719, %v3780
  %v3909 = vadd.f32 %v724, %v3781
  %v3910 = vadd.f32 %v729, %v3782
  %v3911 = vadd.f32 %v734, %v3783
  %v3912 = vadd.f32 %v739, %v3784
  %v3913 = vadd.f32 %v744, %v3785
  %v3914 = vadd.f32 %v749, %v3786
  %v3915 = vadd.f32 %v754, %v3787
  %v3916 = vadd.f32 %v759, %v3788
  %v3917 = vadd.f32 %v764, %v3789
  %v3918 = vadd.f32 %v769, %v3790
  %v3919 = vadd.f32 %v774, %v3791
  %v3920 = vadd.f32 %v779, %v3792
  %v3921 = vadd.f32 %v784, %v3793
  %v3922 = vadd.f32 %v789, %v3794
  %v3923 = vadd.f32 %v794, %v3795
  %v3924 = vadd.f32 %v799, %v3796
  %v3925 = vadd.f32 %v804, %v3797
  %v3926 = vadd.f32 %v809, %v3798
  %v3927 = vadd.f32 %v814, %v3799
  %v3928 = vadd.f32 %v819, %v3800
  %v3929 = vadd.f32 %v824, %v3801
  %v3930 = vadd.f32 %v829, %v3802
  %v3931 = vadd.f32 %v834, %v3803
  %v3932 = vadd.f32 %v839, %v3804
  %v3933 = vadd.f32 %v844, %v3805
  %v3934 = vadd.f32 %v849, %v3806
  %v3935 = vadd.f32 %v854, %v3807
  %v3936 = vadd.f32 %v859, %v3808
  %v3937 = vadd.f32 %v864, %v3809
  %v3938 = vadd.f32 %v869, %v3810
  %v3939 = vadd.f32 %v874, %v3811
  %v3940 = vadd.f32 %v879, %v3812
  %v3941 = vadd.f32 %v884, %v3813
  %v3942 = vadd.f32 %v889, %v3814
  %v3943 = vadd.f32 %v894, %v3815
  %v3944 = vadd.f32 %v899, %v3816
  %v3945 = vadd.f32 %v904, %v3817
  %v3946 = vadd.f32 %v909, %v3818
  %v3947 = vadd.f32 %v914, %v3819
  %v3948 = vadd.f32 %v919, %v3820
  %v3949 = vadd.f32 %v924, %v3821
  %v3950 = vadd.f32 %v929, %v3822
  %v3951 = vadd.f32 %v934, %v3823
  %v3952 = vadd.f32 %v939, %v3824
  %v3953 = vadd.f32 %v944, %v3825
  %v3954 = vadd.f32 %v949, %v3826
  %v3955 = vadd.f32 %v954, %v3827
  %v3956 = vadd.f32 %v959, %v3828
  %v3957 = vadd.f32 %v964, %v3829
  %v3958 = vadd.f32 %v969, %v3830
  %v3959 = vadd.f32 %v974, %v3831
  %v3960 = vadd.f32 %v979, %v3832
  %v3961 = vadd.f32 %v984, %v3833
  %v3962 = vadd.f32 %v989, %v3834
  %v3963 = vadd.f32 %v994, %v3835
  %v3964 = vadd.f32 %v999, %v3836
  %v3965 = vadd.f32 %v1004, %v3837
  %v3966 = vadd.f32 %v1009, %v3838
  %v3967 = vadd.f32 %v1014, %v3839
  %v3968 = vadd.f32 %v1019, %v3840
  %v3969 = vadd.f32 %v1024, %v3841
  %v3970 = vadd.f32 %v1029, %v3842
  %v3971 = vadd.f32 %v1034, %v3843
  %v3972 = vadd.f32 %v1039, %v3844
  %v3973 = vadd.f32 %v1044, %v3845
  %v3974 = vadd.f32 %v1049, %v3846
  %v3975 = vadd.f32 %v1054, %v3847
  %v3976 = vadd.f32 %v1059, %v3848
  %v3977 = vadd.f32 %v1064, %v3849
  %v3978 = vmul.f32 %v166, %v38
  %v3979 = vmul.f32 %v167, %v39
  %v3980 = vmul.f32 %v168, %v40
  %v3981 = vmul.f32 %v169, %v41
  %v3982 = vmul.f32 %v170, %v42
  %v3983 = vmul.f32 %v171, %v43
  %v3984 = vmul.f32 %v172, %v44
  %v3985 = vmul.f32 %v173, %v45
  %v3986 = vmul.f32 %v174, %v46
  %v3987 = vmul.f32 %v175, %v47
  %v3988 = vmul.f32 %v176, %v48
  %v3989 = vmul.f32 %v177, %v49
  %v3990 = vmul.f32 %v178, %v50
  %v3991 = vmul.f32 %v179, %v51
  %v3992 = vmul.f32 %v180, %v52
  %v3993 = vmul.f32 %v181, %v53
  %v3994 = vmul.f32 %v182, %v54
  %v3995 = vmul.f32 %v183, %v55
  %v3996 = vmul.f32 %v184, %v56
  %v3997 = vmul.f32 %v185, %v57
  %v3998 = vmul.f32 %v186, %v58
  %v3999 = vmul.f32 %v187, %v59
  %v4000 = vmul.f32 %v188, %v60
  %v4001 = vmul.f32 %v189, %v61
  %v4002 = vmul.f32 %v190, %v62
  %v4003 = vmul.f32 %v191, %v63
  %v4004 = vmul.f32 %v192, %v64
  %v4005 = vmul.f32 %v193, %v65
  %v4006 = vmul.f32 %v194, %v66
  %v4007 = vmul.f32 %v195, %v67
  %v4008 = vmul.f32 %v196, %v68
  %v4009 = vmul.f32 %v197, %v69
  %v4010 = vmul.f32 %v198, %v70
  %v4011 = vmul.f32 %v199, %v71
  %v4012 = vmul.f32 %v200, %v72
  %v4013 = vmul.f32 %v201, %v73
  %v4014 = vmul.f32 %v202, %v74
  %v4015 = vmul.f32 %v203, %v75
  %v4016 = vmul.f32 %v204, %v76
  %v4017 = vmul.f32 %v205, %v77
  %v4018 = vmul.f32 %v206, %v78
  %v4019 = vmul.f32 %v207, %v79
  %v4020 = vmul.f32 %v208, %v80
  %v4021 = vmul.f32 %v209, %v81
  %v4022 = vmul.f32 %v210, %v82
  %v4023 = vmul.f32 %v211, %v83
  %v4024 = vmul.f32 %v212, %v84
  %v4025 = vmul.f32 %v213, %v85
  %v4026 = vmul.f32 %v214, %v86
  %v4027 = vmul.f32 %v215, %v87
  %v4028 = vmul.f32 %v216, %v88
  %v4029 = vmul.f32 %v217, %v89
  %v4030 = vmul.f32 %v218, %v90
  %v4031 = vmul.f32 %v219, %v91
  %v4032 = vmul.f32 %v220, %v92
  %v4033 = vmul.f32 %v221, %v93
  %v4034 = vmul.f32 %v222, %v94
  %v4035 = vmul.f32 %v223, %v95
  %v4036 = vmul.f32 %v224, %v96
  %v4037 = vmul.f32 %v225, %v97
  %v4038 = vmul.f32 %v226, %v98
  %v4039 = vmul.f32 %v227, %v99
  %v4040 = vmul.f32 %v228, %v100
  %v4041 = vmul.f32 %v229, %v101
  %v4042 = vmul.f32 %v230, %v102
  %v4043 = vmul.f32 %v231, %v103
  %v4044 = vmul.f32 %v232, %v104
  %v4045 = vmul.f32 %v233, %v105
  %v4046 = vmul.f32 %v234, %v106
  %v4047 = vmul.f32 %v235, %v107
  %v4048 = vmul.f32 %v236, %v108
  %v4049 = vmul.f32 %v237, %v109
  %v4050 = vmul.f32 %v238, %v110
  %v4051 = vmul.f32 %v239, %v111
  %v4052 = vmul.f32 %v240, %v112
  %v4053 = vmul.f32 %v241, %v113
  %v4054 = vmul.f32 %v242, %v114
  %v4055 = vmul.f32 %v243, %v115
  %v4056 = vmul.f32 %v244, %v116
  %v4057 = vmul.f32 %v245, %v117
  %v4058 = vmul.f32 %v246, %v118
  %v4059 = vmul.f32 %v247, %v119
  %v4060 = vmul.f32 %v248, %v120
  %v4061 = vmul.f32 %v249, %v121
  %v4062 = vmul.f32 %v250, %v122
  %v4063 = vmul.f32 %v251, %v123
  %v4064 = vmul.f32 %v252, %v124
  %v4065 = vmul.f32 %v253, %v125
  %v4066 = vmul.f32 %v254, %v126
  %v4067 = vmul.f32 %v255, %v127
  %v4068 = vmul.f32 %v256, %v128
  %v4069 = vmul.f32 %v257, %v129
  %v4070 = vmul.f32 %v258, %v130
  %v4071 = vmul.f32 %v259, %v131
  %v4072 = vmul.f32 %v260, %v132
  %v4073 = vmul.f32 %v261, %v133
  %v4074 = vmul.f32 %v262, %v134
  %v4075 = vmul.f32 %v263, %v135
  %v4076 = vmul.f32 %v264, %v136
  %v4077 = vmul.f32 %v265, %v137
  %v4078 = vmul.f32 %v266, %v138
  %v4079 = vmul.f32 %v267, %v139
  %v4080 = vmul.f32 %v268, %v140
  %v4081 = vmul.f32 %v269, %v141
  %v4082 = vmul.f32 %v270, %v142
  %v4083 = vmul.f32 %v271, %v143
  %v4084 = vmul.f32 %v272, %v144
  %v4085 = vmul.f32 %v273, %v145
  %v4086 = vmul.f32 %v274, %v146
  %v4087 = vmul.f32 %v275, %v147
  %v4088 = vmul.f32 %v276, %v148
  %v4089 = vmul.f32 %v277, %v149
  %v4090 = vmul.f32 %v278, %v150
  %v4091 = vmul.f32 %v279, %v151
  %v4092 = vmul.f32 %v280, %v152
  %v4093 = vmul.f32 %v281, %v153
  %v4094 = vmul.f32 %v282, %v154
  %v4095 = vmul.f32 %v283, %v155
  %v4096 = vmul.f32 %v284, %v156
  %v4097 = vmul.f32 %v285, %v157
  %v4098 = vmul.f32 %v286, %v158
  %v4099 = vmul.f32 %v287, %v159
  %v4100 = vmul.f32 %v288, %v160
  %v4101 = vmul.f32 %v289, %v161
  %v4102 = vmul.f32 %v290, %v162
  %v4103 = vmul.f32 %v291, %v163
  %v4104 = vmul.f32 %v292, %v164
  %v4105 = vmul.f32 %v293, %v165
  %v4106 = vmul.f32 %v3978, %v3437
  %v4107 = vmul.f32 %v3979, %v3437
  %v4108 = vmul.f32 %v3980, %v3437
  %v4109 = vmul.f32 %v3981, %v3437
  %v4110 = vmul.f32 %v3982, %v3441
  %v4111 = vmul.f32 %v3983, %v3441
  %v4112 = vmul.f32 %v3984, %v3441
  %v4113 = vmul.f32 %v3985, %v3441
  %v4114 = vmul.f32 %v3986, %v3445
  %v4115 = vmul.f32 %v3987, %v3445
  %v4116 = vmul.f32 %v3988, %v3445
  %v4117 = vmul.f32 %v3989, %v3445
  %v4118 = vmul.f32 %v3990, %v3449
  %v4119 = vmul.f32 %v3991, %v3449
  %v4120 = vmul.f32 %v3992, %v3449
  %v4121 = vmul.f32 %v3993, %v3449
  %v4122 = vmul.f32 %v3994, %v3453
  %v4123 = vmul.f32 %v3995, %v3453
  %v4124 = vmul.f32 %v3996, %v3453
  %v4125 = vmul.f32 %v3997, %v3453
  %v4126 = vmul.f32 %v3998, %v3457
  %v4127 = vmul.f32 %v3999, %v3457
  %v4128 = vmul.f32 %v4000, %v3457
  %v4129 = vmul.f32 %v4001, %v3457
  %v4130 = vmul.f32 %v4002, %v3461
  %v4131 = vmul.f32 %v4003, %v3461
  %v4132 = vmul.f32 %v4004, %v3461
  %v4133 = vmul.f32 %v4005, %v3461
  %v4134 = vmul.f32 %v4006, %v3465
  %v4135 = vmul.f32 %v4007, %v3465
  %v4136 = vmul.f32 %v4008, %v3465
  %v4137 = vmul.f32 %v4009, %v3465
  %v4138 = vmul.f32 %v4010, %v3469
  %v4139 = vmul.f32 %v4011, %v3469
  %v4140 = vmul.f32 %v4012, %v3469
  %v4141 = vmul.f32 %v4013, %v3469
  %v4142 = vmul.f32 %v4014, %v3473
  %v4143 = vmul.f32 %v4015, %v3473
  %v4144 = vmul.f32 %v4016, %v3473
  %v4145 = vmul.f32 %v4017, %v3473
  %v4146 = vmul.f32 %v4018, %v3477
  %v4147 = vmul.f32 %v4019, %v3477
  %v4148 = vmul.f32 %v4020, %v3477
  %v4149 = vmul.f32 %v4021, %v3477
  %v4150 = vmul.f32 %v4022, %v3481
  %v4151 = vmul.f32 %v4023, %v3481
  %v4152 = vmul.f32 %v4024, %v3481
  %v4153 = vmul.f32 %v4025, %v3481
  %v4154 = vmul.f32 %v4026, %v3485
  %v4155 = vmul.f32 %v4027, %v3485
  %v4156 = vmul.f32 %v4028, %v3485
  %v4157 = vmul.f32 %v4029, %v3485
  %v4158 = vmul.f32 %v4030, %v3489
  %v4159 = vmul.f32 %v4031, %v3489
  %v4160 = vmul.f32 %v4032, %v3489
  %v4161 = vmul.f32 %v4033, %v3489
  %v4162 = vmul.f32 %v4034, %v3493
  %v4163 = vmul.f32 %v4035, %v3493
  %v4164 = vmul.f32 %v4036, %v3493
  %v4165 = vmul.f32 %v4037, %v3493
  %v4166 = vmul.f32 %v4038, %v3497
  %v4167 = vmul.f32 %v4039, %v3497
  %v4168 = vmul.f32 %v4040, %v3497
  %v4169 = vmul.f32 %v4041, %v3497
  %v4170 = vmul.f32 %v4042, %v3501
  %v4171 = vmul.f32 %v4043, %v3501
  %v4172 = vmul.f32 %v4044, %v3501
  %v4173 = vmul.f32 %v4045, %v3501
  %v4174 = vmul.f32 %v4046, %v3505
  %v4175 = vmul.f32 %v4047, %v3505
  %v4176 = vmul.f32 %v4048, %v3505
  %v4177 = vmul.f32 %v4049, %v3505
  %v4178 = vmul.f32 %v4050, %v3509
  %v4179 = vmul.f32 %v4051, %v3509
  %v4180 = vmul.f32 %v4052, %v3509
  %v4181 = vmul.f32 %v4053, %v3509
  %v4182 = vmul.f32 %v4054, %v3513
  %v4183 = vmul.f32 %v4055, %v3513
  %v4184 = vmul.f32 %v4056, %v3513
  %v4185 = vmul.f32 %v4057, %v3513
  %v4186 = vmul.f32 %v4058, %v3517
  %v4187 = vmul.f32 %v4059, %v3517
  %v4188 = vmul.f32 %v4060, %v3517
  %v4189 = vmul.f32 %v4061, %v3517
  %v4190 = vmul.f32 %v4062, %v3521
  %v4191 = vmul.f32 %v4063, %v3521
  %v4192 = vmul.f32 %v4064, %v3521
  %v4193 = vmul.f32 %v4065, %v3521
  %v4194 = vmul.f32 %v4066, %v3525
  %v4195 = vmul.f32 %v4067, %v3525
  %v4196 = vmul.f32 %v4068, %v3525
  %v4197 = vmul.f32 %v4069, %v3525
  %v4198 = vmul.f32 %v4070, %v3529
  %v4199 = vmul.f32 %v4071, %v3529
  %v4200 = vmul.f32 %v4072, %v3529
  %v4201 = vmul.f32 %v4073, %v3529
  %v4202 = vmul.f32 %v4074, %v3533
  %v4203 = vmul.f32 %v4075, %v3533
  %v4204 = vmul.f32 %v4076, %v3533
  %v4205 = vmul.f32 %v4077, %v3533
  %v4206 = vmul.f32 %v4078, %v3537
  %v4207 = vmul.f32 %v4079, %v3537
  %v4208 = vmul.f32 %v4080, %v3537
  %v4209 = vmul.f32 %v4081, %v3537
  %v4210 = vmul.f32 %v4082, %v3541
  %v4211 = vmul.f32 %v4083, %v3541
  %v4212 = vmul.f32 %v4084, %v3541
  %v4213 = vmul.f32 %v4085, %v3541
  %v4214 = vmul.f32 %v4086, %v3545
  %v4215 = vmul.f32 %v4087, %v3545
  %v4216 = vmul.f32 %v4088, %v3545
  %v4217 = vmul.f32 %v4089, %v3545
  %v4218 = vmul.f32 %v4090, %v3549
  %v4219 = vmul.f32 %v4091, %v3549
  %v4220 = vmul.f32 %v4092, %v3549
  %v4221 = vmul.f32 %v4093, %v3549
  %v4222 = vmul.f32 %v4094, %v3553
  %v4223 = vmul.f32 %v4095, %v3553
  %v4224 = vmul.f32 %v4096, %v3553
  %v4225 = vmul.f32 %v4097, %v3553
  %v4226 = vmul.f32 %v4098, %v3557
  %v4227 = vmul.f32 %v4099, %v3557
  %v4228 = vmul.f32 %v4100, %v3557
  %v4229 = vmul.f32 %v4101, %v3557
  %v4230 = vmul.f32 %v4102, %v3561
  %v4231 = vmul.f32 %v4103, %v3561
  %v4232 = vmul.f32 %v4104, %v3561
  %v4233 = vmul.f32 %v4105, %v3561
  %v4234 = vsub.f32 %v3850, %v4106
  %v4235 = vsub.f32 %v3851, %v4107
  %v4236 = vsub.f32 %v3852, %v4108
  %v4237 = vsub.f32 %v3853, %v4109
  %v4238 = vsub.f32 %v3854, %v4110
  %v4239 = vsub.f32 %v3855, %v4111
  %v4240 = vsub.f32 %v3856, %v4112
  %v4241 = vsub.f32 %v3857, %v4113
  %v4242 = vsub.f32 %v3858, %v4114
  %v4243 = vsub.f32 %v3859, %v4115
  %v4244 = vsub.f32 %v3860, %v4116
  %v4245 = vsub.f32 %v3861, %v4117
  %v4246 = vsub.f32 %v3862, %v4118
  %v4247 = vsub.f32 %v3863, %v4119
  %v4248 = vsub.f32 %v3864, %v4120
  %v4249 = vsub.f32 %v3865, %v4121
  %v4250 = vsub.f32 %v3866, %v4122
  %v4251 = vsub.f32 %v3867, %v4123
  %v4252 = vsub.f32 %v3868, %v4124
  %v4253 = vsub.f32 %v3869, %v4125
  %v4254 = vsub.f32 %v3870, %v4126
  %v4255 = vsub.f32 %v3871, %v4127
  %v4256 = vsub.f32 %v3872, %v4128
  %v4257 = vsub.f32 %v3873, %v4129
  %v4258 = vsub.f32 %v3874, %v4130
  %v4259 = vsub.f32 %v3875, %v4131
  %v4260 = vsub.f32 %v3876, %v4132
  %v4261 = vsub.f32 %v3877, %v4133
  %v4262 = vsub.f32 %v3878, %v4134
  %v4263 = vsub.f32 %v3879, %v4135
  %v4264 = vsub.f32 %v3880, %v4136
  %v4265 = vsub.f32 %v3881, %v4137
  %v4266 = vsub.f32 %v3882, %v4138
  %v4267 = vsub.f32 %v3883, %v4139
  %v4268 = vsub.f32 %v3884, %v4140
  %v4269 = vsub.f32 %v3885, %v4141
  %v4270 = vsub.f32 %v3886, %v4142
  %v4271 = vsub.f32 %v3887, %v4143
  %v4272 = vsub.f32 %v3888, %v4144
  %v4273 = vsub.f32 %v3889, %v4145
  %v4274 = vsub.f32 %v3890, %v4146
  %v4275 = vsub.f32 %v3891, %v4147
  %v4276 = vsub.f32 %v3892, %v4148
  %v4277 = vsub.f32 %v3893, %v4149
  %v4278 = vsub.f32 %v3894, %v4150
  %v4279 = vsub.f32 %v3895, %v4151
  %v4280 = vsub.f32 %v3896, %v4152
  %v4281 = vsub.f32 %v3897, %v4153
  %v4282 = vsub.f32 %v3898, %v4154
  %v4283 = vsub.f32 %v3899, %v4155
  %v4284 = vsub.f32 %v3900, %v4156
  %v4285 = vsub.f32 %v3901, %v4157
  %v4286 = vsub.f32 %v3902, %v4158
  %v4287 = vsub.f32 %v3903, %v4159
  %v4288 = vsub.f32 %v3904, %v4160
  %v4289 = vsub.f32 %v3905, %v4161
  %v4290 = vsub.f32 %v3906, %v4162
  %v4291 = vsub.f32 %v3907, %v4163
  %v4292 = vsub.f32 %v3908, %v4164
  %v4293 = vsub.f32 %v3909, %v4165
  %v4294 = vsub.f32 %v3910, %v4166
  %v4295 = vsub.f32 %v3911, %v4167
  %v4296 = vsub.f32 %v3912, %v4168
  %v4297 = vsub.f32 %v3913, %v4169
  %v4298 = vsub.f32 %v3914, %v4170
  %v4299 = vsub.f32 %v3915, %v4171
  %v4300 = vsub.f32 %v3916, %v4172
  %v4301 = vsub.f32 %v3917, %v4173
  %v4302 = vsub.f32 %v3918, %v4174
  %v4303 = vsub.f32 %v3919, %v4175
  %v4304 = vsub.f32 %v3920, %v4176
  %v4305 = vsub.f32 %v3921, %v4177
  %v4306 = vsub.f32 %v3922, %v4178
  %v4307 = vsub.f32 %v3923, %v4179
  %v4308 = vsub.f32 %v3924, %v4180
  %v4309 = vsub.f32 %v3925, %v4181
  %v4310 = vsub.f32 %v3926, %v4182
  %v4311 = vsub.f32 %v3927, %v4183
  %v4312 = vsub.f32 %v3928, %v4184
  %v4313 = vsub.f32 %v3929, %v4185
  %v4314 = vsub.f32 %v3930, %v4186
  %v4315 = vsub.f32 %v3931, %v4187
  %v4316 = vsub.f32 %v3932, %v4188
  %v4317 = vsub.f32 %v3933, %v4189
  %v4318 = vsub.f32 %v3934, %v4190
  %v4319 = vsub.f32 %v3935, %v4191
  %v4320 = vsub.f32 %v3936, %v4192
  %v4321 = vsub.f32 %v3937, %v4193
  %v4322 = vsub.f32 %v3938, %v4194
  %v4323 = vsub.f32 %v3939, %v4195
  %v4324 = vsub.f32 %v3940, %v4196
  %v4325 = vsub.f32 %v3941, %v4197
  %v4326 = vsub.f32 %v3942, %v4198
  %v4327 = vsub.f32 %v3943, %v4199
  %v4328 = vsub.f32 %v3944, %v4200
  %v4329 = vsub.f32 %v3945, %v4201
  %v4330 = vsub.f32 %v3946, %v4202
  %v4331 = vsub.f32 %v3947, %v4203
  %v4332 = vsub.f32 %v3948, %v4204
  %v4333 = vsub.f32 %v3949, %v4205
  %v4334 = vsub.f32 %v3950, %v4206
  %v4335 = vsub.f32 %v3951, %v4207
  %v4336 = vsub.f32 %v3952, %v4208
  %v4337 = vsub.f32 %v3953, %v4209
  %v4338 = vsub.f32 %v3954, %v4210
  %v4339 = vsub.f32 %v3955, %v4211
  %v4340 = vsub.f32 %v3956, %v4212
  %v4341 = vsub.f32 %v3957, %v4213
  %v4342 = vsub.f32 %v3958, %v4214
  %v4343 = vsub.f32 %v3959, %v4215
  %v4344 = vsub.f32 %v3960, %v4216
  %v4345 = vsub.f32 %v3961, %v4217
  %v4346 = vsub.f32 %v3962, %v4218
  %v4347 = vsub.f32 %v3963, %v4219
  %v4348 = vsub.f32 %v3964, %v4220
  %v4349 = vsub.f32 %v3965, %v4221
  %v4350 = vsub.f32 %v3966, %v4222
  %v4351 = vsub.f32 %v3967, %v4223
  %v4352 = vsub.f32 %v3968, %v4224
  %v4353 = vsub.f32 %v3969, %v4225
  %v4354 = vsub.f32 %v3970, %v4226
  %v4355 = vsub.f32 %v3971, %v4227
  %v4356 = vsub.f32 %v3972, %v4228
  %v4357 = vsub.f32 %v3973, %v4229
  %v4358 = vsub.f32 %v3974, %v4230
  %v4359 = vsub.f32 %v3975, %v4231
  %v4360 = vsub.f32 %v3976, %v4232
  %v4361 = vsub.f32 %v3977, %v4233
  %v4362 = vmul.f32 %v1965, %v1197
  %v4363 = vmul.f32 %v1970, %v1202
  %v4364 = vmul.f32 %v1975, %v1207
  %v4365 = vmul.f32 %v1980, %v1212
  %v4366 = vmul.f32 %v1985, %v1217
  %v4367 = vmul.f32 %v1990, %v1222
  %v4368 = vmul.f32 %v1995, %v1227
  %v4369 = vmul.f32 %v2000, %v1232
  %v4370 = vmul.f32 %v2005, %v1237
  %v4371 = vmul.f32 %v2010, %v1242
  %v4372 = vmul.f32 %v2015, %v1247
  %v4373 = vmul.f32 %v2020, %v1252
  %v4374 = vmul.f32 %v2025, %v1257
  %v4375 = vmul.f32 %v2030, %v1262
  %v4376 = vmul.f32 %v2035, %v1267
  %v4377 = vmul.f32 %v2040, %v1272
  %v4378 = vmul.f32 %v2045, %v1277
  %v4379 = vmul.f32 %v2050, %v1282
  %v4380 = vmul.f32 %v2055, %v1287
  %v4381 = vmul.f32 %v2060, %v1292
  %v4382 = vmul.f32 %v2065, %v1297
  %v4383 = vmul.f32 %v2070, %v1302
  %v4384 = vmul.f32 %v2075, %v1307
  %v4385 = vmul.f32 %v2080, %v1312
  %v4386 = vmul.f32 %v2085, %v1317
  %v4387 = vmul.f32 %v2090, %v1322
  %v4388 = vmul.f32 %v2095, %v1327
  %v4389 = vmul.f32 %v2100, %v1332
  %v4390 = vmul.f32 %v2105, %v1337
  %v4391 = vmul.f32 %v2110, %v1342
  %v4392 = vmul.f32 %v2115, %v1347
  %v4393 = vmul.f32 %v2120, %v1352
  %v4394 = vmul.f32 %v2125, %v1357
  %v4395 = vmul.f32 %v2130, %v1362
  %v4396 = vmul.f32 %v2135, %v1367
  %v4397 = vmul.f32 %v2140, %v1372
  %v4398 = vmul.f32 %v2145, %v1377
  %v4399 = vmul.f32 %v2150, %v1382
  %v4400 = vmul.f32 %v2155, %v1387
  %v4401 = vmul.f32 %v2160, %v1392
  %v4402 = vmul.f32 %v2165, %v1397
  %v4403 = vmul.f32 %v2170, %v1402
  %v4404 = vmul.f32 %v2175, %v1407
  %v4405 = vmul.f32 %v2180, %v1412
  %v4406 = vmul.f32 %v2185, %v1417
  %v4407 = vmul.f32 %v2190, %v1422
  %v4408 = vmul.f32 %v2195, %v1427
  %v4409 = vmul.f32 %v2200, %v1432
  %v4410 = vmul.f32 %v2205, %v1437
  %v4411 = vmul.f32 %v2210, %v1442
  %v4412 = vmul.f32 %v2215, %v1447
  %v4413 = vmul.f32 %v2220, %v1452
  %v4414 = vmul.f32 %v2225, %v1457
  %v4415 = vmul.f32 %v2230, %v1462
  %v4416 = vmul.f32 %v2235, %v1467
  %v4417 = vmul.f32 %v2240, %v1472
  %v4418 = vmul.f32 %v2245, %v1477
  %v4419 = vmul.f32 %v2250, %v1482
  %v4420 = vmul.f32 %v2255, %v1487
  %v4421 = vmul.f32 %v2260, %v1492
  %v4422 = vmul.f32 %v2265, %v1497
  %v4423 = vmul.f32 %v2270, %v1502
  %v4424 = vmul.f32 %v2275, %v1507
  %v4425 = vmul.f32 %v2280, %v1512
  %v4426 = vmul.f32 %v2285, %v1517
  %v4427 = vmul.f32 %v2290, %v1522
  %v4428 = vmul.f32 %v2295, %v1527
  %v4429 = vmul.f32 %v2300, %v1532
  %v4430 = vmul.f32 %v2305, %v1537
  %v4431 = vmul.f32 %v2310, %v1542
  %v4432 = vmul.f32 %v2315, %v1547
  %v4433 = vmul.f32 %v2320, %v1552
  %v4434 = vmul.f32 %v2325, %v1557
  %v4435 = vmul.f32 %v2330, %v1562
  %v4436 = vmul.f32 %v2335, %v1567
  %v4437 = vmul.f32 %v2340, %v1572
  %v4438 = vmul.f32 %v2345, %v1577
  %v4439 = vmul.f32 %v2350, %v1582
  %v4440 = vmul.f32 %v2355, %v1587
  %v4441 = vmul.f32 %v2360, %v1592
  %v4442 = vmul.f32 %v2365, %v1597
  %v4443 = vmul.f32 %v2370, %v1602
  %v4444 = vmul.f32 %v2375, %v1607
  %v4445 = vmul.f32 %v2380, %v1612
  %v4446 = vmul.f32 %v2385, %v1617
  %v4447 = vmul.f32 %v2390, %v1622
  %v4448 = vmul.f32 %v2395, %v1627
  %v4449 = vmul.f32 %v2400, %v1632
  %v4450 = vmul.f32 %v2405, %v1637
  %v4451 = vmul.f32 %v2410, %v1642
  %v4452 = vmul.f32 %v2415, %v1647
  %v4453 = vmul.f32 %v2420, %v1652
  %v4454 = vmul.f32 %v2425, %v1657
  %v4455 = vmul.f32 %v2430, %v1662
  %v4456 = vmul.f32 %v2435, %v1667
  %v4457 = vmul.f32 %v2440, %v1672
  %v4458 = vmul.f32 %v2445, %v1677
  %v4459 = vmul.f32 %v2450, %v1682
  %v4460 = vmul.f32 %v2455, %v1687
  %v4461 = vmul.f32 %v2460, %v1692
  %v4462 = vmul.f32 %v2465, %v1697
  %v4463 = vmul.f32 %v2470, %v1702
  %v4464 = vmul.f32 %v2475, %v1707
  %v4465 = vmul.f32 %v2480, %v1712
  %v4466 = vmul.f32 %v2485, %v1717
  %v4467 = vmul.f32 %v2490, %v1722
  %v4468 = vmul.f32 %v2495, %v1727
  %v4469 = vmul.f32 %v2500, %v1732
  %v4470 = vmul.f32 %v2505, %v1737
  %v4471 = vmul.f32 %v2510, %v1742
  %v4472 = vmul.f32 %v2515, %v1747
  %v4473 = vmul.f32 %v2520, %v1752
  %v4474 = vmul.f32 %v2525, %v1757
  %v4475 = vmul.f32 %v2530, %v1762
  %v4476 = vmul.f32 %v2535, %v1767
  %v4477 = vmul.f32 %v2540, %v1772
  %v4478 = vmul.f32 %v2545, %v1777
  %v4479 = vmul.f32 %v2550, %v1782
  %v4480 = vmul.f32 %v2555, %v1787
  %v4481 = vmul.f32 %v2560, %v1792
  %v4482 = vmul.f32 %v2565, %v1797
  %v4483 = vmul.f32 %v2570, %v1802
  %v4484 = vmul.f32 %v2575, %v1807
  %v4485 = vmul.f32 %v2580, %v1812
  %v4486 = vmul.f32 %v2585, %v1817
  %v4487 = vmul.f32 %v2590, %v1822
  %v4488 = vmul.f32 %v2595, %v1827
  %v4489 = vmul.f32 %v2600, %v1832
  %v4490 = vsub.f32 1.0, %v1197
  %v4491 = vsub.f32 1.0, %v1202
  %v4492 = vsub.f32 1.0, %v1207
  %v4493 = vsub.f32 1.0, %v1212
  %v4494 = vsub.f32 1.0, %v1217
  %v4495 = vsub.f32 1.0, %v1222
  %v4496 = vsub.f32 1.0, %v1227
  %v4497 = vsub.f32 1.0, %v1232
  %v4498 = vsub.f32 1.0, %v1237
  %v4499 = vsub.f32 1.0, %v1242
  %v4500 = vsub.f32 1.0, %v1247
  %v4501 = vsub.f32 1.0, %v1252
  %v4502 = vsub.f32 1.0, %v1257
  %v4503 = vsub.f32 1.0, %v1262
  %v4504 = vsub.f32 1.0, %v1267
  %v4505 = vsub.f32 1.0, %v1272
  %v4506 = vsub.f32 1.0, %v1277
  %v4507 = vsub.f32 1.0, %v1282
  %v4508 = vsub.f32 1.0, %v1287
  %v4509 = vsub.f32 1.0, %v1292
  %v4510 = vsub.f32 1.0, %v1297
  %v4511 = vsub.f32 1.0, %v1302
  %v4512 = vsub.f32 1.0, %v1307
  %v4513 = vsub.f32 1.0, %v1312
  %v4514 = vsub.f32 1.0, %v1317
  %v4515 = vsub.f32 1.0, %v1322
  %v4516 = vsub.f32 1.0, %v1327
  %v4517 = vsub.f32 1.0, %v1332
  %v4518 = vsub.f32 1.0, %v1337
  %v4519 = vsub.f32 1.0, %v1342
  %v4520 = vsub.f32 1.0, %v1347
  %v4521 = vsub.f32 1.0, %v1352
  %v4522 = vsub.f32 1.0, %v1357
  %v4523 = vsub.f32 1.0, %v1362
  %v4524 = vsub.f32 1.0, %v1367
  %v4525 = vsub.f32 1.0, %v1372
  %v4526 = vsub.f32 1.0, %v1377
  %v4527 = vsub.f32 1.0, %v1382
  %v4528 = vsub.f32 1.0, %v1387
  %v4529 = vsub.f32 1.0, %v1392
  %v4530 = vsub.f32 1.0, %v1397
  %v4531 = vsub.f32 1.0, %v1402
  %v4532 = vsub.f32 1.0, %v1407
  %v4533 = vsub.f32 1.0, %v1412
  %v4534 = vsub.f32 1.0, %v1417
  %v4535 = vsub.f32 1.0, %v1422
  %v4536 = vsub.f32 1.0, %v1427
  %v4537 = vsub.f32 1.0, %v1432
  %v4538 = vsub.f32 1.0, %v1437
  %v4539 = vsub.f32 1.0, %v1442
  %v4540 = vsub.f32 1.0, %v1447
  %v4541 = vsub.f32 1.0, %v1452
  %v4542 = vsub.f32 1.0, %v1457
  %v4543 = vsub.f32 1.0, %v1462
  %v4544 = vsub.f32 1.0, %v1467
  %v4545 = vsub.f32 1.0, %v1472
  %v4546 = vsub.f32 1.0, %v1477
  %v4547 = vsub.f32 1.0, %v1482
  %v4548 = vsub.f32 1.0, %v1487
  %v4549 = vsub.f32 1.0, %v1492
  %v4550 = vsub.f32 1.0, %v1497
  %v4551 = vsub.f32 1.0, %v1502
  %v4552 = vsub.f32 1.0, %v1507
  %v4553 = vsub.f32 1.0, %v1512
  %v4554 = vsub.f32 1.0, %v1517
  %v4555 = vsub.f32 1.0, %v1522
  %v4556 = vsub.f32 1.0, %v1527
  %v4557 = vsub.f32 1.0, %v1532
  %v4558 = vsub.f32 1.0, %v1537
  %v4559 = vsub.f32 1.0, %v1542
  %v4560 = vsub.f32 1.0, %v1547
  %v4561 = vsub.f32 1.0, %v1552
  %v4562 = vsub.f32 1.0, %v1557
  %v4563 = vsub.f32 1.0, %v1562
  %v4564 = vsub.f32 1.0, %v1567
  %v4565 = vsub.f32 1.0, %v1572
  %v4566 = vsub.f32 1.0, %v1577
  %v4567 = vsub.f32 1.0, %v1582
  %v4568 = vsub.f32 1.0, %v1587
  %v4569 = vsub.f32 1.0, %v1592
  %v4570 = vsub.f32 1.0, %v1597
  %v4571 = vsub.f32 1.0, %v1602
  %v4572 = vsub.f32 1.0, %v1607
  %v4573 = vsub.f32 1.0, %v1612
  %v4574 = vsub.f32 1.0, %v1617
  %v4575 = vsub.f32 1.0, %v1622
  %v4576 = vsub.f32 1.0, %v1627
  %v4577 = vsub.f32 1.0, %v1632
  %v4578 = vsub.f32 1.0, %v1637
  %v4579 = vsub.f32 1.0, %v1642
  %v4580 = vsub.f32 1.0, %v1647
  %v4581 = vsub.f32 1.0, %v1652
  %v4582 = vsub.f32 1.0, %v1657
  %v4583 = vsub.f32 1.0, %v1662
  %v4584 = vsub.f32 1.0, %v1667
  %v4585 = vsub.f32 1.0, %v1672
  %v4586 = vsub.f32 1.0, %v1677
  %v4587 = vsub.f32 1.0, %v1682
  %v4588 = vsub.f32 1.0, %v1687
  %v4589 = vsub.f32 1.0, %v1692
  %v4590 = vsub.f32 1.0, %v1697
  %v4591 = vsub.f32 1.0, %v1702
  %v4592 = vsub.f32 1.0, %v1707
  %v4593 = vsub.f32 1.0, %v1712
  %v4594 = vsub.f32 1.0, %v1717
  %v4595 = vsub.f32 1.0, %v1722
  %v4596 = vsub.f32 1.0, %v1727
  %v4597 = vsub.f32 1.0, %v1732
  %v4598 = vsub.f32 1.0, %v1737
  %v4599 = vsub.f32 1.0, %v1742
  %v4600 = vsub.f32 1.0, %v1747
  %v4601 = vsub.f32 1.0, %v1752
  %v4602 = vsub.f32 1.0, %v1757
  %v4603 = vsub.f32 1.0, %v1762
  %v4604 = vsub.f32 1.0, %v1767
  %v4605 = vsub.f32 1.0, %v1772
  %v4606 = vsub.f32 1.0, %v1777
  %v4607 = vsub.f32 1.0, %v1782
  %v4608 = vsub.f32 1.0, %v1787
  %v4609 = vsub.f32 1.0, %v1792
  %v4610 = vsub.f32 1.0, %v1797
  %v4611 = vsub.f32 1.0, %v1802
  %v4612 = vsub.f32 1.0, %v1807
  %v4613 = vsub.f32 1.0, %v1812
  %v4614 = vsub.f32 1.0, %v1817
  %v4615 = vsub.f32 1.0, %v1822
  %v4616 = vsub.f32 1.0, %v1827
  %v4617 = vsub.f32 1.0, %v1832
  %v4618 = vmul.f32 %v4490, %v166
  %v4619 = vmul.f32 %v4491, %v167
  %v4620 = vmul.f32 %v4492, %v168
  %v4621 = vmul.f32 %v4493, %v169
  %v4622 = vmul.f32 %v4494, %v170
  %v4623 = vmul.f32 %v4495, %v171
  %v4624 = vmul.f32 %v4496, %v172
  %v4625 = vmul.f32 %v4497, %v173
  %v4626 = vmul.f32 %v4498, %v174
  %v4627 = vmul.f32 %v4499, %v175
  %v4628 = vmul.f32 %v4500, %v176
  %v4629 = vmul.f32 %v4501, %v177
  %v4630 = vmul.f32 %v4502, %v178
  %v4631 = vmul.f32 %v4503, %v179
  %v4632 = vmul.f32 %v4504, %v180
  %v4633 = vmul.f32 %v4505, %v181
  %v4634 = vmul.f32 %v4506, %v182
  %v4635 = vmul.f32 %v4507, %v183
  %v4636 = vmul.f32 %v4508, %v184
  %v4637 = vmul.f32 %v4509, %v185
  %v4638 = vmul.f32 %v4510, %v186
  %v4639 = vmul.f32 %v4511, %v187
  %v4640 = vmul.f32 %v4512, %v188
  %v4641 = vmul.f32 %v4513, %v189
  %v4642 = vmul.f32 %v4514, %v190
  %v4643 = vmul.f32 %v4515, %v191
  %v4644 = vmul.f32 %v4516, %v192
  %v4645 = vmul.f32 %v4517, %v193
  %v4646 = vmul.f32 %v4518, %v194
  %v4647 = vmul.f32 %v4519, %v195
  %v4648 = vmul.f32 %v4520, %v196
  %v4649 = vmul.f32 %v4521, %v197
  %v4650 = vmul.f32 %v4522, %v198
  %v4651 = vmul.f32 %v4523, %v199
  %v4652 = vmul.f32 %v4524, %v200
  %v4653 = vmul.f32 %v4525, %v201
  %v4654 = vmul.f32 %v4526, %v202
  %v4655 = vmul.f32 %v4527, %v203
  %v4656 = vmul.f32 %v4528, %v204
  %v4657 = vmul.f32 %v4529, %v205
  %v4658 = vmul.f32 %v4530, %v206
  %v4659 = vmul.f32 %v4531, %v207
  %v4660 = vmul.f32 %v4532, %v208
  %v4661 = vmul.f32 %v4533, %v209
  %v4662 = vmul.f32 %v4534, %v210
  %v4663 = vmul.f32 %v4535, %v211
  %v4664 = vmul.f32 %v4536, %v212
  %v4665 = vmul.f32 %v4537, %v213
  %v4666 = vmul.f32 %v4538, %v214
  %v4667 = vmul.f32 %v4539, %v215
  %v4668 = vmul.f32 %v4540, %v216
  %v4669 = vmul.f32 %v4541, %v217
  %v4670 = vmul.f32 %v4542, %v218
  %v4671 = vmul.f32 %v4543, %v219
  %v4672 = vmul.f32 %v4544, %v220
  %v4673 = vmul.f32 %v4545, %v221
  %v4674 = vmul.f32 %v4546, %v222
  %v4675 = vmul.f32 %v4547, %v223
  %v4676 = vmul.f32 %v4548, %v224
  %v4677 = vmul.f32 %v4549, %v225
  %v4678 = vmul.f32 %v4550, %v226
  %v4679 = vmul.f32 %v4551, %v227
  %v4680 = vmul.f32 %v4552, %v228
  %v4681 = vmul.f32 %v4553, %v229
  %v4682 = vmul.f32 %v4554, %v230
  %v4683 = vmul.f32 %v4555, %v231
  %v4684 = vmul.f32 %v4556, %v232
  %v4685 = vmul.f32 %v4557, %v233
  %v4686 = vmul.f32 %v4558, %v234
  %v4687 = vmul.f32 %v4559, %v235
  %v4688 = vmul.f32 %v4560, %v236
  %v4689 = vmul.f32 %v4561, %v237
  %v4690 = vmul.f32 %v4562, %v238
  %v4691 = vmul.f32 %v4563, %v239
  %v4692 = vmul.f32 %v4564, %v240
  %v4693 = vmul.f32 %v4565, %v241
  %v4694 = vmul.f32 %v4566, %v242
  %v4695 = vmul.f32 %v4567, %v243
  %v4696 = vmul.f32 %v4568, %v244
  %v4697 = vmul.f32 %v4569, %v245
  %v4698 = vmul.f32 %v4570, %v246
  %v4699 = vmul.f32 %v4571, %v247
  %v4700 = vmul.f32 %v4572, %v248
  %v4701 = vmul.f32 %v4573, %v249
  %v4702 = vmul.f32 %v4574, %v250
  %v4703 = vmul.f32 %v4575, %v251
  %v4704 = vmul.f32 %v4576, %v252
  %v4705 = vmul.f32 %v4577, %v253
  %v4706 = vmul.f32 %v4578, %v254
  %v4707 = vmul.f32 %v4579, %v255
  %v4708 = vmul.f32 %v4580, %v256
  %v4709 = vmul.f32 %v4581, %v257
  %v4710 = vmul.f32 %v4582, %v258
  %v4711 = vmul.f32 %v4583, %v259
  %v4712 = vmul.f32 %v4584, %v260
  %v4713 = vmul.f32 %v4585, %v261
  %v4714 = vmul.f32 %v4586, %v262
  %v4715 = vmul.f32 %v4587, %v263
  %v4716 = vmul.f32 %v4588, %v264
  %v4717 = vmul.f32 %v4589, %v265
  %v4718 = vmul.f32 %v4590, %v266
  %v4719 = vmul.f32 %v4591, %v267
  %v4720 = vmul.f32 %v4592, %v268
  %v4721 = vmul.f32 %v4593, %v269
  %v4722 = vmul.f32 %v4594, %v270
  %v4723 = vmul.f32 %v4595, %v271
  %v4724 = vmul.f32 %v4596, %v272
  %v4725 = vmul.f32 %v4597, %v273
  %v4726 = vmul.f32 %v4598, %v274
  %v4727 = vmul.f32 %v4599, %v275
  %v4728 = vmul.f32 %v4600, %v276
  %v4729 = vmul.f32 %v4601, %v277
  %v4730 = vmul.f32 %v4602, %v278
  %v4731 = vmul.f32 %v4603, %v279
  %v4732 = vmul.f32 %v4604, %v280
  %v4733 = vmul.f32 %v4605, %v281
  %v4734 = vmul.f32 %v4606, %v282
  %v4735 = vmul.f32 %v4607, %v283
  %v4736 = vmul.f32 %v4608, %v284
  %v4737 = vmul.f32 %v4609, %v285
  %v4738 = vmul.f32 %v4610, %v286
  %v4739 = vmul.f32 %v4611, %v287
  %v4740 = vmul.f32 %v4612, %v288
  %v4741 = vmul.f32 %v4613, %v289
  %v4742 = vmul.f32 %v4614, %v290
  %v4743 = vmul.f32 %v4615, %v291
  %v4744 = vmul.f32 %v4616, %v292
  %v4745 = vmul.f32 %v4617, %v293
  %v4746 = vadd.f32 %v4362, %v4618
  %v4747 = vadd.f32 %v4363, %v4619
  %v4748 = vadd.f32 %v4364, %v4620
  %v4749 = vadd.f32 %v4365, %v4621
  %v4750 = vadd.f32 %v4366, %v4622
  %v4751 = vadd.f32 %v4367, %v4623
  %v4752 = vadd.f32 %v4368, %v4624
  %v4753 = vadd.f32 %v4369, %v4625
  %v4754 = vadd.f32 %v4370, %v4626
  %v4755 = vadd.f32 %v4371, %v4627
  %v4756 = vadd.f32 %v4372, %v4628
  %v4757 = vadd.f32 %v4373, %v4629
  %v4758 = vadd.f32 %v4374, %v4630
  %v4759 = vadd.f32 %v4375, %v4631
  %v4760 = vadd.f32 %v4376, %v4632
  %v4761 = vadd.f32 %v4377, %v4633
  %v4762 = vadd.f32 %v4378, %v4634
  %v4763 = vadd.f32 %v4379, %v4635
  %v4764 = vadd.f32 %v4380, %v4636
  %v4765 = vadd.f32 %v4381, %v4637
  %v4766 = vadd.f32 %v4382, %v4638
  %v4767 = vadd.f32 %v4383, %v4639
  %v4768 = vadd.f32 %v4384, %v4640
  %v4769 = vadd.f32 %v4385, %v4641
  %v4770 = vadd.f32 %v4386, %v4642
  %v4771 = vadd.f32 %v4387, %v4643
  %v4772 = vadd.f32 %v4388, %v4644
  %v4773 = vadd.f32 %v4389, %v4645
  %v4774 = vadd.f32 %v4390, %v4646
  %v4775 = vadd.f32 %v4391, %v4647
  %v4776 = vadd.f32 %v4392, %v4648
  %v4777 = vadd.f32 %v4393, %v4649
  %v4778 = vadd.f32 %v4394, %v4650
  %v4779 = vadd.f32 %v4395, %v4651
  %v4780 = vadd.f32 %v4396, %v4652
  %v4781 = vadd.f32 %v4397, %v4653
  %v4782 = vadd.f32 %v4398, %v4654
  %v4783 = vadd.f32 %v4399, %v4655
  %v4784 = vadd.f32 %v4400, %v4656
  %v4785 = vadd.f32 %v4401, %v4657
  %v4786 = vadd.f32 %v4402, %v4658
  %v4787 = vadd.f32 %v4403, %v4659
  %v4788 = vadd.f32 %v4404, %v4660
  %v4789 = vadd.f32 %v4405, %v4661
  %v4790 = vadd.f32 %v4406, %v4662
  %v4791 = vadd.f32 %v4407, %v4663
  %v4792 = vadd.f32 %v4408, %v4664
  %v4793 = vadd.f32 %v4409, %v4665
  %v4794 = vadd.f32 %v4410, %v4666
  %v4795 = vadd.f32 %v4411, %v4667
  %v4796 = vadd.f32 %v4412, %v4668
  %v4797 = vadd.f32 %v4413, %v4669
  %v4798 = vadd.f32 %v4414, %v4670
  %v4799 = vadd.f32 %v4415, %v4671
  %v4800 = vadd.f32 %v4416, %v4672
  %v4801 = vadd.f32 %v4417, %v4673
  %v4802 = vadd.f32 %v4418, %v4674
  %v4803 = vadd.f32 %v4419, %v4675
  %v4804 = vadd.f32 %v4420, %v4676
  %v4805 = vadd.f32 %v4421, %v4677
  %v4806 = vadd.f32 %v4422, %v4678
  %v4807 = vadd.f32 %v4423, %v4679
  %v4808 = vadd.f32 %v4424, %v4680
  %v4809 = vadd.f32 %v4425, %v4681
  %v4810 = vadd.f32 %v4426, %v4682
  %v4811 = vadd.f32 %v4427, %v4683
  %v4812 = vadd.f32 %v4428, %v4684
  %v4813 = vadd.f32 %v4429, %v4685
  %v4814 = vadd.f32 %v4430, %v4686
  %v4815 = vadd.f32 %v4431, %v4687
  %v4816 = vadd.f32 %v4432, %v4688
  %v4817 = vadd.f32 %v4433, %v4689
  %v4818 = vadd.f32 %v4434, %v4690
  %v4819 = vadd.f32 %v4435, %v4691
  %v4820 = vadd.f32 %v4436, %v4692
  %v4821 = vadd.f32 %v4437, %v4693
  %v4822 = vadd.f32 %v4438, %v4694
  %v4823 = vadd.f32 %v4439, %v4695
  %v4824 = vadd.f32 %v4440, %v4696
  %v4825 = vadd.f32 %v4441, %v4697
  %v4826 = vadd.f32 %v4442, %v4698
  %v4827 = vadd.f32 %v4443, %v4699
  %v4828 = vadd.f32 %v4444, %v4700
  %v4829 = vadd.f32 %v4445, %v4701
  %v4830 = vadd.f32 %v4446, %v4702
  %v4831 = vadd.f32 %v4447, %v4703
  %v4832 = vadd.f32 %v4448, %v4704
  %v4833 = vadd.f32 %v4449, %v4705
  %v4834 = vadd.f32 %v4450, %v4706
  %v4835 = vadd.f32 %v4451, %v4707
  %v4836 = vadd.f32 %v4452, %v4708
  %v4837 = vadd.f32 %v4453, %v4709
  %v4838 = vadd.f32 %v4454, %v4710
  %v4839 = vadd.f32 %v4455, %v4711
  %v4840 = vadd.f32 %v4456, %v4712
  %v4841 = vadd.f32 %v4457, %v4713
  %v4842 = vadd.f32 %v4458, %v4714
  %v4843 = vadd.f32 %v4459, %v4715
  %v4844 = vadd.f32 %v4460, %v4716
  %v4845 = vadd.f32 %v4461, %v4717
  %v4846 = vadd.f32 %v4462, %v4718
  %v4847 = vadd.f32 %v4463, %v4719
  %v4848 = vadd.f32 %v4464, %v4720
  %v4849 = vadd.f32 %v4465, %v4721
  %v4850 = vadd.f32 %v4466, %v4722
  %v4851 = vadd.f32 %v4467, %v4723
  %v4852 = vadd.f32 %v4468, %v4724
  %v4853 = vadd.f32 %v4469, %v4725
  %v4854 = vadd.f32 %v4470, %v4726
  %v4855 = vadd.f32 %v4471, %v4727
  %v4856 = vadd.f32 %v4472, %v4728
  %v4857 = vadd.f32 %v4473, %v4729
  %v4858 = vadd.f32 %v4474, %v4730
  %v4859 = vadd.f32 %v4475, %v4731
  %v4860 = vadd.f32 %v4476, %v4732
  %v4861 = vadd.f32 %v4477, %v4733
  %v4862 = vadd.f32 %v4478, %v4734
  %v4863 = vadd.f32 %v4479, %v4735
  %v4864 = vadd.f32 %v4480, %v4736
  %v4865 = vadd.f32 %v4481, %v4737
  %v4866 = vadd.f32 %v4482, %v4738
  %v4867 = vadd.f32 %v4483, %v4739
  %v4868 = vadd.f32 %v4484, %v4740
  %v4869 = vadd.f32 %v4485, %v4741
  %v4870 = vadd.f32 %v4486, %v4742
  %v4871 = vadd.f32 %v4487, %v4743
  %v4872 = vadd.f32 %v4488, %v4744
  %v4873 = vadd.f32 %v4489, %v4745
  %v4874 = vsub.f32 1.0, %v166
  %v4875 = vsub.f32 1.0, %v167
  %v4876 = vsub.f32 1.0, %v168
  %v4877 = vsub.f32 1.0, %v169
  %v4878 = vsub.f32 1.0, %v170
  %v4879 = vsub.f32 1.0, %v171
  %v4880 = vsub.f32 1.0, %v172
  %v4881 = vsub.f32 1.0, %v173
  %v4882 = vsub.f32 1.0, %v174
  %v4883 = vsub.f32 1.0, %v175
  %v4884 = vsub.f32 1.0, %v176
  %v4885 = vsub.f32 1.0, %v177
  %v4886 = vsub.f32 1.0, %v178
  %v4887 = vsub.f32 1.0, %v179
  %v4888 = vsub.f32 1.0, %v180
  %v4889 = vsub.f32 1.0, %v181
  %v4890 = vsub.f32 1.0, %v182
  %v4891 = vsub.f32 1.0, %v183
  %v4892 = vsub.f32 1.0, %v184
  %v4893 = vsub.f32 1.0, %v185
  %v4894 = vsub.f32 1.0, %v186
  %v4895 = vsub.f32 1.0, %v187
  %v4896 = vsub.f32 1.0, %v188
  %v4897 = vsub.f32 1.0, %v189
  %v4898 = vsub.f32 1.0, %v190
  %v4899 = vsub.f32 1.0, %v191
  %v4900 = vsub.f32 1.0, %v192
  %v4901 = vsub.f32 1.0, %v193
  %v4902 = vsub.f32 1.0, %v194
  %v4903 = vsub.f32 1.0, %v195
  %v4904 = vsub.f32 1.0, %v196
  %v4905 = vsub.f32 1.0, %v197
  %v4906 = vsub.f32 1.0, %v198
  %v4907 = vsub.f32 1.0, %v199
  %v4908 = vsub.f32 1.0, %v200
  %v4909 = vsub.f32 1.0, %v201
  %v4910 = vsub.f32 1.0, %v202
  %v4911 = vsub.f32 1.0, %v203
  %v4912 = vsub.f32 1.0, %v204
  %v4913 = vsub.f32 1.0, %v205
  %v4914 = vsub.f32 1.0, %v206
  %v4915 = vsub.f32 1.0, %v207
  %v4916 = vsub.f32 1.0, %v208
  %v4917 = vsub.f32 1.0, %v209
  %v4918 = vsub.f32 1.0, %v210
  %v4919 = vsub.f32 1.0, %v211
  %v4920 = vsub.f32 1.0, %v212
  %v4921 = vsub.f32 1.0, %v213
  %v4922 = vsub.f32 1.0, %v214
  %v4923 = vsub.f32 1.0, %v215
  %v4924 = vsub.f32 1.0, %v216
  %v4925 = vsub.f32 1.0, %v217
  %v4926 = vsub.f32 1.0, %v218
  %v4927 = vsub.f32 1.0, %v219
  %v4928 = vsub.f32 1.0, %v220
  %v4929 = vsub.f32 1.0, %v221
  %v4930 = vsub.f32 1.0, %v222
  %v4931 = vsub.f32 1.0, %v223
  %v4932 = vsub.f32 1.0, %v224
  %v4933 = vsub.f32 1.0, %v225
  %v4934 = vsub.f32 1.0, %v226
  %v4935 = vsub.f32 1.0, %v227
  %v4936 = vsub.f32 1.0, %v228
  %v4937 = vsub.f32 1.0, %v229
  %v4938 = vsub.f32 1.0, %v230
  %v4939 = vsub.f32 1.0, %v231
  %v4940 = vsub.f32 1.0, %v232
  %v4941 = vsub.f32 1.0, %v233
  %v4942 = vsub.f32 1.0, %v234
  %v4943 = vsub.f32 1.0, %v235
  %v4944 = vsub.f32 1.0, %v236
  %v4945 = vsub.f32 1.0, %v237
  %v4946 = vsub.f32 1.0, %v238
  %v4947 = vsub.f32 1.0, %v239
  %v4948 = vsub.f32 1.0, %v240
  %v4949 = vsub.f32 1.0, %v241
  %v4950 = vsub.f32 1.0, %v242
  %v4951 = vsub.f32 1.0, %v243
  %v4952 = vsub.f32 1.0, %v244
  %v4953 = vsub.f32 1.0, %v245
  %v4954 = vsub.f32 1.0, %v246
  %v4955 = vsub.f32 1.0, %v247
  %v4956 = vsub.f32 1.0, %v248
  %v4957 = vsub.f32 1.0, %v249
  %v4958 = vsub.f32 1.0, %v250
  %v4959 = vsub.f32 1.0, %v251
  %v4960 = vsub.f32 1.0, %v252
  %v4961 = vsub.f32 1.0, %v253
  %v4962 = vsub.f32 1.0, %v254
  %v4963 = vsub.f32 1.0, %v255
  %v4964 = vsub.f32 1.0, %v256
  %v4965 = vsub.f32 1.0, %v257
  %v4966 = vsub.f32 1.0, %v258
  %v4967 = vsub.f32 1.0, %v259
  %v4968 = vsub.f32 1.0, %v260
  %v4969 = vsub.f32 1.0, %v261
  %v4970 = vsub.f32 1.0, %v262
  %v4971 = vsub.f32 1.0, %v263
  %v4972 = vsub.f32 1.0, %v264
  %v4973 = vsub.f32 1.0, %v265
  %v4974 = vsub.f32 1.0, %v266
  %v4975 = vsub.f32 1.0, %v267
  %v4976 = vsub.f32 1.0, %v268
  %v4977 = vsub.f32 1.0, %v269
  %v4978 = vsub.f32 1.0, %v270
  %v4979 = vsub.f32 1.0, %v271
  %v4980 = vsub.f32 1.0, %v272
  %v4981 = vsub.f32 1.0, %v273
  %v4982 = vsub.f32 1.0, %v274
  %v4983 = vsub.f32 1.0, %v275
  %v4984 = vsub.f32 1.0, %v276
  %v4985 = vsub.f32 1.0, %v277
  %v4986 = vsub.f32 1.0, %v278
  %v4987 = vsub.f32 1.0, %v279
  %v4988 = vsub.f32 1.0, %v280
  %v4989 = vsub.f32 1.0, %v281
  %v4990 = vsub.f32 1.0, %v282
  %v4991 = vsub.f32 1.0, %v283
  %v4992 = vsub.f32 1.0, %v284
  %v4993 = vsub.f32 1.0, %v285
  %v4994 = vsub.f32 1.0, %v286
  %v4995 = vsub.f32 1.0, %v287
  %v4996 = vsub.f32 1.0, %v288
  %v4997 = vsub.f32 1.0, %v289
  %v4998 = vsub.f32 1.0, %v290
  %v4999 = vsub.f32 1.0, %v291
  %v5000 = vsub.f32 1.0, %v292
  %v5001 = vsub.f32 1.0, %v293
  %v5002 = vmul.f32 %v4874, %v3437
  %v5003 = vmul.f32 %v4875, %v3437
  %v5004 = vmul.f32 %v4876, %v3437
  %v5005 = vmul.f32 %v4877, %v3437
  %v5006 = vmul.f32 %v4878, %v3441
  %v5007 = vmul.f32 %v4879, %v3441
  %v5008 = vmul.f32 %v4880, %v3441
  %v5009 = vmul.f32 %v4881, %v3441
  %v5010 = vmul.f32 %v4882, %v3445
  %v5011 = vmul.f32 %v4883, %v3445
  %v5012 = vmul.f32 %v4884, %v3445
  %v5013 = vmul.f32 %v4885, %v3445
  %v5014 = vmul.f32 %v4886, %v3449
  %v5015 = vmul.f32 %v4887, %v3449
  %v5016 = vmul.f32 %v4888, %v3449
  %v5017 = vmul.f32 %v4889, %v3449
  %v5018 = vmul.f32 %v4890, %v3453
  %v5019 = vmul.f32 %v4891, %v3453
  %v5020 = vmul.f32 %v4892, %v3453
  %v5021 = vmul.f32 %v4893, %v3453
  %v5022 = vmul.f32 %v4894, %v3457
  %v5023 = vmul.f32 %v4895, %v3457
  %v5024 = vmul.f32 %v4896, %v3457
  %v5025 = vmul.f32 %v4897, %v3457
  %v5026 = vmul.f32 %v4898, %v3461
  %v5027 = vmul.f32 %v4899, %v3461
  %v5028 = vmul.f32 %v4900, %v3461
  %v5029 = vmul.f32 %v4901, %v3461
  %v5030 = vmul.f32 %v4902, %v3465
  %v5031 = vmul.f32 %v4903, %v3465
  %v5032 = vmul.f32 %v4904, %v3465
  %v5033 = vmul.f32 %v4905, %v3465
  %v5034 = vmul.f32 %v4906, %v3469
  %v5035 = vmul.f32 %v4907, %v3469
  %v5036 = vmul.f32 %v4908, %v3469
  %v5037 = vmul.f32 %v4909, %v3469
  %v5038 = vmul.f32 %v4910, %v3473
  %v5039 = vmul.f32 %v4911, %v3473
  %v5040 = vmul.f32 %v4912, %v3473
  %v5041 = vmul.f32 %v4913, %v3473
  %v5042 = vmul.f32 %v4914, %v3477
  %v5043 = vmul.f32 %v4915, %v3477
  %v5044 = vmul.f32 %v4916, %v3477
  %v5045 = vmul.f32 %v4917, %v3477
  %v5046 = vmul.f32 %v4918, %v3481
  %v5047 = vmul.f32 %v4919, %v3481
  %v5048 = vmul.f32 %v4920, %v3481
  %v5049 = vmul.f32 %v4921, %v3481
  %v5050 = vmul.f32 %v4922, %v3485
  %v5051 = vmul.f32 %v4923, %v3485
  %v5052 = vmul.f32 %v4924, %v3485
  %v5053 = vmul.f32 %v4925, %v3485
  %v5054 = vmul.f32 %v4926, %v3489
  %v5055 = vmul.f32 %v4927, %v3489
  %v5056 = vmul.f32 %v4928, %v3489
  %v5057 = vmul.f32 %v4929, %v3489
  %v5058 = vmul.f32 %v4930, %v3493
  %v5059 = vmul.f32 %v4931, %v3493
  %v5060 = vmul.f32 %v4932, %v3493
  %v5061 = vmul.f32 %v4933, %v3493
  %v5062 = vmul.f32 %v4934, %v3497
  %v5063 = vmul.f32 %v4935, %v3497
  %v5064 = vmul.f32 %v4936, %v3497
  %v5065 = vmul.f32 %v4937, %v3497
  %v5066 = vmul.f32 %v4938, %v3501
  %v5067 = vmul.f32 %v4939, %v3501
  %v5068 = vmul.f32 %v4940, %v3501
  %v5069 = vmul.f32 %v4941, %v3501
  %v5070 = vmul.f32 %v4942, %v3505
  %v5071 = vmul.f32 %v4943, %v3505
  %v5072 = vmul.f32 %v4944, %v3505
  %v5073 = vmul.f32 %v4945, %v3505
  %v5074 = vmul.f32 %v4946, %v3509
  %v5075 = vmul.f32 %v4947, %v3509
  %v5076 = vmul.f32 %v4948, %v3509
  %v5077 = vmul.f32 %v4949, %v3509
  %v5078 = vmul.f32 %v4950, %v3513
  %v5079 = vmul.f32 %v4951, %v3513
  %v5080 = vmul.f32 %v4952, %v3513
  %v5081 = vmul.f32 %v4953, %v3513
  %v5082 = vmul.f32 %v4954, %v3517
  %v5083 = vmul.f32 %v4955, %v3517
  %v5084 = vmul.f32 %v4956, %v3517
  %v5085 = vmul.f32 %v4957, %v3517
  %v5086 = vmul.f32 %v4958, %v3521
  %v5087 = vmul.f32 %v4959, %v3521
  %v5088 = vmul.f32 %v4960, %v3521
  %v5089 = vmul.f32 %v4961, %v3521
  %v5090 = vmul.f32 %v4962, %v3525
  %v5091 = vmul.f32 %v4963, %v3525
  %v5092 = vmul.f32 %v4964, %v3525
  %v5093 = vmul.f32 %v4965, %v3525
  %v5094 = vmul.f32 %v4966, %v3529
  %v5095 = vmul.f32 %v4967, %v3529
  %v5096 = vmul.f32 %v4968, %v3529
  %v5097 = vmul.f32 %v4969, %v3529
  %v5098 = vmul.f32 %v4970, %v3533
  %v5099 = vmul.f32 %v4971, %v3533
  %v5100 = vmul.f32 %v4972, %v3533
  %v5101 = vmul.f32 %v4973, %v3533
  %v5102 = vmul.f32 %v4974, %v3537
  %v5103 = vmul.f32 %v4975, %v3537
  %v5104 = vmul.f32 %v4976, %v3537
  %v5105 = vmul.f32 %v4977, %v3537
  %v5106 = vmul.f32 %v4978, %v3541
  %v5107 = vmul.f32 %v4979, %v3541
  %v5108 = vmul.f32 %v4980, %v3541
  %v5109 = vmul.f32 %v4981, %v3541
  %v5110 = vmul.f32 %v4982, %v3545
  %v5111 = vmul.f32 %v4983, %v3545
  %v5112 = vmul.f32 %v4984, %v3545
  %v5113 = vmul.f32 %v4985, %v3545
  %v5114 = vmul.f32 %v4986, %v3549
  %v5115 = vmul.f32 %v4987, %v3549
  %v5116 = vmul.f32 %v4988, %v3549
  %v5117 = vmul.f32 %v4989, %v3549
  %v5118 = vmul.f32 %v4990, %v3553
  %v5119 = vmul.f32 %v4991, %v3553
  %v5120 = vmul.f32 %v4992, %v3553
  %v5121 = vmul.f32 %v4993, %v3553
  %v5122 = vmul.f32 %v4994, %v3557
  %v5123 = vmul.f32 %v4995, %v3557
  %v5124 = vmul.f32 %v4996, %v3557
  %v5125 = vmul.f32 %v4997, %v3557
  %v5126 = vmul.f32 %v4998, %v3561
  %v5127 = vmul.f32 %v4999, %v3561
  %v5128 = vmul.f32 %v5000, %v3561
  %v5129 = vmul.f32 %v5001, %v3561
  %v5130 = vmul.f32 %v1965, %v5002
  %v5131 = vmul.f32 %v1970, %v5003
  %v5132 = vmul.f32 %v1975, %v5004
  %v5133 = vmul.f32 %v1980, %v5005
  %v5134 = vmul.f32 %v1985, %v5006
  %v5135 = vmul.f32 %v1990, %v5007
  %v5136 = vmul.f32 %v1995, %v5008
  %v5137 = vmul.f32 %v2000, %v5009
  %v5138 = vmul.f32 %v2005, %v5010
  %v5139 = vmul.f32 %v2010, %v5011
  %v5140 = vmul.f32 %v2015, %v5012
  %v5141 = vmul.f32 %v2020, %v5013
  %v5142 = vmul.f32 %v2025, %v5014
  %v5143 = vmul.f32 %v2030, %v5015
  %v5144 = vmul.f32 %v2035, %v5016
  %v5145 = vmul.f32 %v2040, %v5017
  %v5146 = vmul.f32 %v2045, %v5018
  %v5147 = vmul.f32 %v2050, %v5019
  %v5148 = vmul.f32 %v2055, %v5020
  %v5149 = vmul.f32 %v2060, %v5021
  %v5150 = vmul.f32 %v2065, %v5022
  %v5151 = vmul.f32 %v2070, %v5023
  %v5152 = vmul.f32 %v2075, %v5024
  %v5153 = vmul.f32 %v2080, %v5025
  %v5154 = vmul.f32 %v2085, %v5026
  %v5155 = vmul.f32 %v2090, %v5027
  %v5156 = vmul.f32 %v2095, %v5028
  %v5157 = vmul.f32 %v2100, %v5029
  %v5158 = vmul.f32 %v2105, %v5030
  %v5159 = vmul.f32 %v2110, %v5031
  %v5160 = vmul.f32 %v2115, %v5032
  %v5161 = vmul.f32 %v2120, %v5033
  %v5162 = vmul.f32 %v2125, %v5034
  %v5163 = vmul.f32 %v2130, %v5035
  %v5164 = vmul.f32 %v2135, %v5036
  %v5165 = vmul.f32 %v2140, %v5037
  %v5166 = vmul.f32 %v2145, %v5038
  %v5167 = vmul.f32 %v2150, %v5039
  %v5168 = vmul.f32 %v2155, %v5040
  %v5169 = vmul.f32 %v2160, %v5041
  %v5170 = vmul.f32 %v2165, %v5042
  %v5171 = vmul.f32 %v2170, %v5043
  %v5172 = vmul.f32 %v2175, %v5044
  %v5173 = vmul.f32 %v2180, %v5045
  %v5174 = vmul.f32 %v2185, %v5046
  %v5175 = vmul.f32 %v2190, %v5047
  %v5176 = vmul.f32 %v2195, %v5048
  %v5177 = vmul.f32 %v2200, %v5049
  %v5178 = vmul.f32 %v2205, %v5050
  %v5179 = vmul.f32 %v2210, %v5051
  %v5180 = vmul.f32 %v2215, %v5052
  %v5181 = vmul.f32 %v2220, %v5053
  %v5182 = vmul.f32 %v2225, %v5054
  %v5183 = vmul.f32 %v2230, %v5055
  %v5184 = vmul.f32 %v2235, %v5056
  %v5185 = vmul.f32 %v2240, %v5057
  %v5186 = vmul.f32 %v2245, %v5058
  %v5187 = vmul.f32 %v2250, %v5059
  %v5188 = vmul.f32 %v2255, %v5060
  %v5189 = vmul.f32 %v2260, %v5061
  %v5190 = vmul.f32 %v2265, %v5062
  %v5191 = vmul.f32 %v2270, %v5063
  %v5192 = vmul.f32 %v2275, %v5064
  %v5193 = vmul.f32 %v2280, %v5065
  %v5194 = vmul.f32 %v2285, %v5066
  %v5195 = vmul.f32 %v2290, %v5067
  %v5196 = vmul.f32 %v2295, %v5068
  %v5197 = vmul.f32 %v2300, %v5069
  %v5198 = vmul.f32 %v2305, %v5070
  %v5199 = vmul.f32 %v2310, %v5071
  %v5200 = vmul.f32 %v2315, %v5072
  %v5201 = vmul.f32 %v2320, %v5073
  %v5202 = vmul.f32 %v2325, %v5074
  %v5203 = vmul.f32 %v2330, %v5075
  %v5204 = vmul.f32 %v2335, %v5076
  %v5205 = vmul.f32 %v2340, %v5077
  %v5206 = vmul.f32 %v2345, %v5078
  %v5207 = vmul.f32 %v2350, %v5079
  %v5208 = vmul.f32 %v2355, %v5080
  %v5209 = vmul.f32 %v2360, %v5081
  %v5210 = vmul.f32 %v2365, %v5082
  %v5211 = vmul.f32 %v2370, %v5083
  %v5212 = vmul.f32 %v2375, %v5084
  %v5213 = vmul.f32 %v2380, %v5085
  %v5214 = vmul.f32 %v2385, %v5086
  %v5215 = vmul.f32 %v2390, %v5087
  %v5216 = vmul.f32 %v2395, %v5088
  %v5217 = vmul.f32 %v2400, %v5089
  %v5218 = vmul.f32 %v2405, %v5090
  %v5219 = vmul.f32 %v2410, %v5091
  %v5220 = vmul.f32 %v2415, %v5092
  %v5221 = vmul.f32 %v2420, %v5093
  %v5222 = vmul.f32 %v2425, %v5094
  %v5223 = vmul.f32 %v2430, %v5095
  %v5224 = vmul.f32 %v2435, %v5096
  %v5225 = vmul.f32 %v2440, %v5097
  %v5226 = vmul.f32 %v2445, %v5098
  %v5227 = vmul.f32 %v2450, %v5099
  %v5228 = vmul.f32 %v2455, %v5100
  %v5229 = vmul.f32 %v2460, %v5101
  %v5230 = vmul.f32 %v2465, %v5102
  %v5231 = vmul.f32 %v2470, %v5103
  %v5232 = vmul.f32 %v2475, %v5104
  %v5233 = vmul.f32 %v2480, %v5105
  %v5234 = vmul.f32 %v2485, %v5106
  %v5235 = vmul.f32 %v2490, %v5107
  %v5236 = vmul.f32 %v2495, %v5108
  %v5237 = vmul.f32 %v2500, %v5109
  %v5238 = vmul.f32 %v2505, %v5110
  %v5239 = vmul.f32 %v2510, %v5111
  %v5240 = vmul.f32 %v2515, %v5112
  %v5241 = vmul.f32 %v2520, %v5113
  %v5242 = vmul.f32 %v2525, %v5114
  %v5243 = vmul.f32 %v2530, %v5115
  %v5244 = vmul.f32 %v2535, %v5116
  %v5245 = vmul.f32 %v2540, %v5117
  %v5246 = vmul.f32 %v2545, %v5118
  %v5247 = vmul.f32 %v2550, %v5119
  %v5248 = vmul.f32 %v2555, %v5120
  %v5249 = vmul.f32 %v2560, %v5121
  %v5250 = vmul.f32 %v2565, %v5122
  %v5251 = vmul.f32 %v2570, %v5123
  %v5252 = vmul.f32 %v2575, %v5124
  %v5253 = vmul.f32 %v2580, %v5125
  %v5254 = vmul.f32 %v2585, %v5126
  %v5255 = vmul.f32 %v2590, %v5127
  %v5256 = vmul.f32 %v2595, %v5128
  %v5257 = vmul.f32 %v2600, %v5129
  %v5258 = vadd.f32 %v4746, %v5130
  %v5259 = vadd.f32 %v4747, %v5131
  %v5260 = vadd.f32 %v4748, %v5132
  %v5261 = vadd.f32 %v4749, %v5133
  %v5262 = vadd.f32 %v4750, %v5134
  %v5263 = vadd.f32 %v4751, %v5135
  %v5264 = vadd.f32 %v4752, %v5136
  %v5265 = vadd.f32 %v4753, %v5137
  %v5266 = vadd.f32 %v4754, %v5138
  %v5267 = vadd.f32 %v4755, %v5139
  %v5268 = vadd.f32 %v4756, %v5140
  %v5269 = vadd.f32 %v4757, %v5141
  %v5270 = vadd.f32 %v4758, %v5142
  %v5271 = vadd.f32 %v4759, %v5143
  %v5272 = vadd.f32 %v4760, %v5144
  %v5273 = vadd.f32 %v4761, %v5145
  %v5274 = vadd.f32 %v4762, %v5146
  %v5275 = vadd.f32 %v4763, %v5147
  %v5276 = vadd.f32 %v4764, %v5148
  %v5277 = vadd.f32 %v4765, %v5149
  %v5278 = vadd.f32 %v4766, %v5150
  %v5279 = vadd.f32 %v4767, %v5151
  %v5280 = vadd.f32 %v4768, %v5152
  %v5281 = vadd.f32 %v4769, %v5153
  %v5282 = vadd.f32 %v4770, %v5154
  %v5283 = vadd.f32 %v4771, %v5155
  %v5284 = vadd.f32 %v4772, %v5156
  %v5285 = vadd.f32 %v4773, %v5157
  %v5286 = vadd.f32 %v4774, %v5158
  %v5287 = vadd.f32 %v4775, %v5159
  %v5288 = vadd.f32 %v4776, %v5160
  %v5289 = vadd.f32 %v4777, %v5161
  %v5290 = vadd.f32 %v4778, %v5162
  %v5291 = vadd.f32 %v4779, %v5163
  %v5292 = vadd.f32 %v4780, %v5164
  %v5293 = vadd.f32 %v4781, %v5165
  %v5294 = vadd.f32 %v4782, %v5166
  %v5295 = vadd.f32 %v4783, %v5167
  %v5296 = vadd.f32 %v4784, %v5168
  %v5297 = vadd.f32 %v4785, %v5169
  %v5298 = vadd.f32 %v4786, %v5170
  %v5299 = vadd.f32 %v4787, %v5171
  %v5300 = vadd.f32 %v4788, %v5172
  %v5301 = vadd.f32 %v4789, %v5173
  %v5302 = vadd.f32 %v4790, %v5174
  %v5303 = vadd.f32 %v4791, %v5175
  %v5304 = vadd.f32 %v4792, %v5176
  %v5305 = vadd.f32 %v4793, %v5177
  %v5306 = vadd.f32 %v4794, %v5178
  %v5307 = vadd.f32 %v4795, %v5179
  %v5308 = vadd.f32 %v4796, %v5180
  %v5309 = vadd.f32 %v4797, %v5181
  %v5310 = vadd.f32 %v4798, %v5182
  %v5311 = vadd.f32 %v4799, %v5183
  %v5312 = vadd.f32 %v4800, %v5184
  %v5313 = vadd.f32 %v4801, %v5185
  %v5314 = vadd.f32 %v4802, %v5186
  %v5315 = vadd.f32 %v4803, %v5187
  %v5316 = vadd.f32 %v4804, %v5188
  %v5317 = vadd.f32 %v4805, %v5189
  %v5318 = vadd.f32 %v4806, %v5190
  %v5319 = vadd.f32 %v4807, %v5191
  %v5320 = vadd.f32 %v4808, %v5192
  %v5321 = vadd.f32 %v4809, %v5193
  %v5322 = vadd.f32 %v4810, %v5194
  %v5323 = vadd.f32 %v4811, %v5195
  %v5324 = vadd.f32 %v4812, %v5196
  %v5325 = vadd.f32 %v4813, %v5197
  %v5326 = vadd.f32 %v4814, %v5198
  %v5327 = vadd.f32 %v4815, %v5199
  %v5328 = vadd.f32 %v4816, %v5200
  %v5329 = vadd.f32 %v4817, %v5201
  %v5330 = vadd.f32 %v4818, %v5202
  %v5331 = vadd.f32 %v4819, %v5203
  %v5332 = vadd.f32 %v4820, %v5204
  %v5333 = vadd.f32 %v4821, %v5205
  %v5334 = vadd.f32 %v4822, %v5206
  %v5335 = vadd.f32 %v4823, %v5207
  %v5336 = vadd.f32 %v4824, %v5208
  %v5337 = vadd.f32 %v4825, %v5209
  %v5338 = vadd.f32 %v4826, %v5210
  %v5339 = vadd.f32 %v4827, %v5211
  %v5340 = vadd.f32 %v4828, %v5212
  %v5341 = vadd.f32 %v4829, %v5213
  %v5342 = vadd.f32 %v4830, %v5214
  %v5343 = vadd.f32 %v4831, %v5215
  %v5344 = vadd.f32 %v4832, %v5216
  %v5345 = vadd.f32 %v4833, %v5217
  %v5346 = vadd.f32 %v4834, %v5218
  %v5347 = vadd.f32 %v4835, %v5219
  %v5348 = vadd.f32 %v4836, %v5220
  %v5349 = vadd.f32 %v4837, %v5221
  %v5350 = vadd.f32 %v4838, %v5222
  %v5351 = vadd.f32 %v4839, %v5223
  %v5352 = vadd.f32 %v4840, %v5224
  %v5353 = vadd.f32 %v4841, %v5225
  %v5354 = vadd.f32 %v4842, %v5226
  %v5355 = vadd.f32 %v4843, %v5227
  %v5356 = vadd.f32 %v4844, %v5228
  %v5357 = vadd.f32 %v4845, %v5229
  %v5358 = vadd.f32 %v4846, %v5230
  %v5359 = vadd.f32 %v4847, %v5231
  %v5360 = vadd.f32 %v4848, %v5232
  %v5361 = vadd.f32 %v4849, %v5233
  %v5362 = vadd.f32 %v4850, %v5234
  %v5363 = vadd.f32 %v4851, %v5235
  %v5364 = vadd.f32 %v4852, %v5236
  %v5365 = vadd.f32 %v4853, %v5237
  %v5366 = vadd.f32 %v4854, %v5238
  %v5367 = vadd.f32 %v4855, %v5239
  %v5368 = vadd.f32 %v4856, %v5240
  %v5369 = vadd.f32 %v4857, %v5241
  %v5370 = vadd.f32 %v4858, %v5242
  %v5371 = vadd.f32 %v4859, %v5243
  %v5372 = vadd.f32 %v4860, %v5244
  %v5373 = vadd.f32 %v4861, %v5245
  %v5374 = vadd.f32 %v4862, %v5246
  %v5375 = vadd.f32 %v4863, %v5247
  %v5376 = vadd.f32 %v4864, %v5248
  %v5377 = vadd.f32 %v4865, %v5249
  %v5378 = vadd.f32 %v4866, %v5250
  %v5379 = vadd.f32 %v4867, %v5251
  %v5380 = vadd.f32 %v4868, %v5252
  %v5381 = vadd.f32 %v4869, %v5253
  %v5382 = vadd.f32 %v4870, %v5254
  %v5383 = vadd.f32 %v4871, %v5255
  %v5384 = vadd.f32 %v4872, %v5256
  %v5385 = vadd.f32 %v4873, %v5257
  %v5386 = vmax.f32 %v1965, %v5258
  %v5387 = vmax.f32 %v1970, %v5259
  %v5388 = vmax.f32 %v1975, %v5260
  %v5389 = vmax.f32 %v1980, %v5261
  %v5390 = vmax.f32 %v1985, %v5262
  %v5391 = vmax.f32 %v1990, %v5263
  %v5392 = vmax.f32 %v1995, %v5264
  %v5393 = vmax.f32 %v2000, %v5265
  %v5394 = vmax.f32 %v2005, %v5266
  %v5395 = vmax.f32 %v2010, %v5267
  %v5396 = vmax.f32 %v2015, %v5268
  %v5397 = vmax.f32 %v2020, %v5269
  %v5398 = vmax.f32 %v2025, %v5270
  %v5399 = vmax.f32 %v2030, %v5271
  %v5400 = vmax.f32 %v2035, %v5272
  %v5401 = vmax.f32 %v2040, %v5273
  %v5402 = vmax.f32 %v2045, %v5274
  %v5403 = vmax.f32 %v2050, %v5275
  %v5404 = vmax.f32 %v2055, %v5276
  %v5405 = vmax.f32 %v2060, %v5277
  %v5406 = vmax.f32 %v2065, %v5278
  %v5407 = vmax.f32 %v2070, %v5279
  %v5408 = vmax.f32 %v2075, %v5280
  %v5409 = vmax.f32 %v2080, %v5281
  %v5410 = vmax.f32 %v2085, %v5282
  %v5411 = vmax.f32 %v2090, %v5283
  %v5412 = vmax.f32 %v2095, %v5284
  %v5413 = vmax.f32 %v2100, %v5285
  %v5414 = vmax.f32 %v2105, %v5286
  %v5415 = vmax.f32 %v2110, %v5287
  %v5416 = vmax.f32 %v2115, %v5288
  %v5417 = vmax.f32 %v2120, %v5289
  %v5418 = vmax.f32 %v2125, %v5290
  %v5419 = vmax.f32 %v2130, %v5291
  %v5420 = vmax.f32 %v2135, %v5292
  %v5421 = vmax.f32 %v2140, %v5293
  %v5422 = vmax.f32 %v2145, %v5294
  %v5423 = vmax.f32 %v2150, %v5295
  %v5424 = vmax.f32 %v2155, %v5296
  %v5425 = vmax.f32 %v2160, %v5297
  %v5426 = vmax.f32 %v2165, %v5298
  %v5427 = vmax.f32 %v2170, %v5299
  %v5428 = vmax.f32 %v2175, %v5300
  %v5429 = vmax.f32 %v2180, %v5301
  %v5430 = vmax.f32 %v2185, %v5302
  %v5431 = vmax.f32 %v2190, %v5303
  %v5432 = vmax.f32 %v2195, %v5304
  %v5433 = vmax.f32 %v2200, %v5305
  %v5434 = vmax.f32 %v2205, %v5306
  %v5435 = vmax.f32 %v2210, %v5307
  %v5436 = vmax.f32 %v2215, %v5308
  %v5437 = vmax.f32 %v2220, %v5309
  %v5438 = vmax.f32 %v2225, %v5310
  %v5439 = vmax.f32 %v2230, %v5311
  %v5440 = vmax.f32 %v2235, %v5312
  %v5441 = vmax.f32 %v2240, %v5313
  %v5442 = vmax.f32 %v2245, %v5314
  %v5443 = vmax.f32 %v2250, %v5315
  %v5444 = vmax.f32 %v2255, %v5316
  %v5445 = vmax.f32 %v2260, %v5317
  %v5446 = vmax.f32 %v2265, %v5318
  %v5447 = vmax.f32 %v2270, %v5319
  %v5448 = vmax.f32 %v2275, %v5320
  %v5449 = vmax.f32 %v2280, %v5321
  %v5450 = vmax.f32 %v2285, %v5322
  %v5451 = vmax.f32 %v2290, %v5323
  %v5452 = vmax.f32 %v2295, %v5324
  %v5453 = vmax.f32 %v2300, %v5325
  %v5454 = vmax.f32 %v2305, %v5326
  %v5455 = vmax.f32 %v2310, %v5327
  %v5456 = vmax.f32 %v2315, %v5328
  %v5457 = vmax.f32 %v2320, %v5329
  %v5458 = vmax.f32 %v2325, %v5330
  %v5459 = vmax.f32 %v2330, %v5331
  %v5460 = vmax.f32 %v2335, %v5332
  %v5461 = vmax.f32 %v2340, %v5333
  %v5462 = vmax.f32 %v2345, %v5334
  %v5463 = vmax.f32 %v2350, %v5335
  %v5464 = vmax.f32 %v2355, %v5336
  %v5465 = vmax.f32 %v2360, %v5337
  %v5466 = vmax.f32 %v2365, %v5338
  %v5467 = vmax.f32 %v2370, %v5339
  %v5468 = vmax.f32 %v2375, %v5340
  %v5469 = vmax.f32 %v2380, %v5341
  %v5470 = vmax.f32 %v2385, %v5342
  %v5471 = vmax.f32 %v2390, %v5343
  %v5472 = vmax.f32 %v2395, %v5344
  %v5473 = vmax.f32 %v2400, %v5345
  %v5474 = vmax.f32 %v2405, %v5346
  %v5475 = vmax.f32 %v2410, %v5347
  %v5476 = vmax.f32 %v2415, %v5348
  %v5477 = vmax.f32 %v2420, %v5349
  %v5478 = vmax.f32 %v2425, %v5350
  %v5479 = vmax.f32 %v2430, %v5351
  %v5480 = vmax.f32 %v2435, %v5352
  %v5481 = vmax.f32 %v2440, %v5353
  %v5482 = vmax.f32 %v2445, %v5354
  %v5483 = vmax.f32 %v2450, %v5355
  %v5484 = vmax.f32 %v2455, %v5356
  %v5485 = vmax.f32 %v2460, %v5357
  %v5486 = vmax.f32 %v2465, %v5358
  %v5487 = vmax.f32 %v2470, %v5359
  %v5488 = vmax.f32 %v2475, %v5360
  %v5489 = vmax.f32 %v2480, %v5361
  %v5490 = vmax.f32 %v2485, %v5362
  %v5491 = vmax.f32 %v2490, %v5363
  %v5492 = vmax.f32 %v2495, %v5364
  %v5493 = vmax.f32 %v2500, %v5365
  %v5494 = vmax.f32 %v2505, %v5366
  %v5495 = vmax.f32 %v2510, %v5367
  %v5496 = vmax.f32 %v2515, %v5368
  %v5497 = vmax.f32 %v2520, %v5369
  %v5498 = vmax.f32 %v2525, %v5370
  %v5499 = vmax.f32 %v2530, %v5371
  %v5500 = vmax.f32 %v2535, %v5372
  %v5501 = vmax.f32 %v2540, %v5373
  %v5502 = vmax.f32 %v2545, %v5374
  %v5503 = vmax.f32 %v2550, %v5375
  %v5504 = vmax.f32 %v2555, %v5376
  %v5505 = vmax.f32 %v2560, %v5377
  %v5506 = vmax.f32 %v2565, %v5378
  %v5507 = vmax.f32 %v2570, %v5379
  %v5508 = vmax.f32 %v2575, %v5380
  %v5509 = vmax.f32 %v2580, %v5381
  %v5510 = vmax.f32 %v2585, %v5382
  %v5511 = vmax.f32 %v2590, %v5383
  %v5512 = vmax.f32 %v2595, %v5384
  %v5513 = vmax.f32 %v2600, %v5385
  %v5514 = vmin.f32 %v5386, 1.0
  %v5515 = vmin.f32 %v5387, 1.0
  %v5516 = vmin.f32 %v5388, 1.0
  %v5517 = vmin.f32 %v5389, 1.0
  %v5518 = vmin.f32 %v5390, 1.0
  %v5519 = vmin.f32 %v5391, 1.0
  %v5520 = vmin.f32 %v5392, 1.0
  %v5521 = vmin.f32 %v5393, 1.0
  %v5522 = vmin.f32 %v5394, 1.0
  %v5523 = vmin.f32 %v5395, 1.0
  %v5524 = vmin.f32 %v5396, 1.0
  %v5525 = vmin.f32 %v5397, 1.0
  %v5526 = vmin.f32 %v5398, 1.0
  %v5527 = vmin.f32 %v5399, 1.0
  %v5528 = vmin.f32 %v5400, 1.0
  %v5529 = vmin.f32 %v5401, 1.0
  %v5530 = vmin.f32 %v5402, 1.0
  %v5531 = vmin.f32 %v5403, 1.0
  %v5532 = vmin.f32 %v5404, 1.0
  %v5533 = vmin.f32 %v5405, 1.0
  %v5534 = vmin.f32 %v5406, 1.0
  %v5535 = vmin.f32 %v5407, 1.0
  %v5536 = vmin.f32 %v5408, 1.0
  %v5537 = vmin.f32 %v5409, 1.0
  %v5538 = vmin.f32 %v5410, 1.0
  %v5539 = vmin.f32 %v5411, 1.0
  %v5540 = vmin.f32 %v5412, 1.0
  %v5541 = vmin.f32 %v5413, 1.0
  %v5542 = vmin.f32 %v5414, 1.0
  %v5543 = vmin.f32 %v5415, 1.0
  %v5544 = vmin.f32 %v5416, 1.0
  %v5545 = vmin.f32 %v5417, 1.0
  %v5546 = vmin.f32 %v5418, 1.0
  %v5547 = vmin.f32 %v5419, 1.0
  %v5548 = vmin.f32 %v5420, 1.0
  %v5549 = vmin.f32 %v5421, 1.0
  %v5550 = vmin.f32 %v5422, 1.0
  %v5551 = vmin.f32 %v5423, 1.0
  %v5552 = vmin.f32 %v5424, 1.0
  %v5553 = vmin.f32 %v5425, 1.0
  %v5554 = vmin.f32 %v5426, 1.0
  %v5555 = vmin.f32 %v5427, 1.0
  %v5556 = vmin.f32 %v5428, 1.0
  %v5557 = vmin.f32 %v5429, 1.0
  %v5558 = vmin.f32 %v5430, 1.0
  %v5559 = vmin.f32 %v5431, 1.0
  %v5560 = vmin.f32 %v5432, 1.0
  %v5561 = vmin.f32 %v5433, 1.0
  %v5562 = vmin.f32 %v5434, 1.0
  %v5563 = vmin.f32 %v5435, 1.0
  %v5564 = vmin.f32 %v5436, 1.0
  %v5565 = vmin.f32 %v5437, 1.0
  %v5566 = vmin.f32 %v5438, 1.0
  %v5567 = vmin.f32 %v5439, 1.0
  %v5568 = vmin.f32 %v5440, 1.0
  %v5569 = vmin.f32 %v5441, 1.0
  %v5570 = vmin.f32 %v5442, 1.0
  %v5571 = vmin.f32 %v5443, 1.0
  %v5572 = vmin.f32 %v5444, 1.0
  %v5573 = vmin.f32 %v5445, 1.0
  %v5574 = vmin.f32 %v5446, 1.0
  %v5575 = vmin.f32 %v5447, 1.0
  %v5576 = vmin.f32 %v5448, 1.0
  %v5577 = vmin.f32 %v5449, 1.0
  %v5578 = vmin.f32 %v5450, 1.0
  %v5579 = vmin.f32 %v5451, 1.0
  %v5580 = vmin.f32 %v5452, 1.0
  %v5581 = vmin.f32 %v5453, 1.0
  %v5582 = vmin.f32 %v5454, 1.0
  %v5583 = vmin.f32 %v5455, 1.0
  %v5584 = vmin.f32 %v5456, 1.0
  %v5585 = vmin.f32 %v5457, 1.0
  %v5586 = vmin.f32 %v5458, 1.0
  %v5587 = vmin.f32 %v5459, 1.0
  %v5588 = vmin.f32 %v5460, 1.0
  %v5589 = vmin.f32 %v5461, 1.0
  %v5590 = vmin.f32 %v5462, 1.0
  %v5591 = vmin.f32 %v5463, 1.0
  %v5592 = vmin.f32 %v5464, 1.0
  %v5593 = vmin.f32 %v5465, 1.0
  %v5594 = vmin.f32 %v5466, 1.0
  %v5595 = vmin.f32 %v5467, 1.0
  %v5596 = vmin.f32 %v5468, 1.0
  %v5597 = vmin.f32 %v5469, 1.0
  %v5598 = vmin.f32 %v5470, 1.0
  %v5599 = vmin.f32 %v5471, 1.0
  %v5600 = vmin.f32 %v5472, 1.0
  %v5601 = vmin.f32 %v5473, 1.0
  %v5602 = vmin.f32 %v5474, 1.0
  %v5603 = vmin.f32 %v5475, 1.0
  %v5604 = vmin.f32 %v5476, 1.0
  %v5605 = vmin.f32 %v5477, 1.0
  %v5606 = vmin.f32 %v5478, 1.0
  %v5607 = vmin.f32 %v5479, 1.0
  %v5608 = vmin.f32 %v5480, 1.0
  %v5609 = vmin.f32 %v5481, 1.0
  %v5610 = vmin.f32 %v5482, 1.0
  %v5611 = vmin.f32 %v5483, 1.0
  %v5612 = vmin.f32 %v5484, 1.0
  %v5613 = vmin.f32 %v5485, 1.0
  %v5614 = vmin.f32 %v5486, 1.0
  %v5615 = vmin.f32 %v5487, 1.0
  %v5616 = vmin.f32 %v5488, 1.0
  %v5617 = vmin.f32 %v5489, 1.0
  %v5618 = vmin.f32 %v5490, 1.0
  %v5619 = vmin.f32 %v5491, 1.0
  %v5620 = vmin.f32 %v5492, 1.0
  %v5621 = vmin.f32 %v5493, 1.0
  %v5622 = vmin.f32 %v5494, 1.0
  %v5623 = vmin.f32 %v5495, 1.0
  %v5624 = vmin.f32 %v5496, 1.0
  %v5625 = vmin.f32 %v5497, 1.0
  %v5626 = vmin.f32 %v5498, 1.0
  %v5627 = vmin.f32 %v5499, 1.0
  %v5628 = vmin.f32 %v5500, 1.0
  %v5629 = vmin.f32 %v5501, 1.0
  %v5630 = vmin.f32 %v5502, 1.0
  %v5631 = vmin.f32 %v5503, 1.0
  %v5632 = vmin.f32 %v5504, 1.0
  %v5633 = vmin.f32 %v5505, 1.0
  %v5634 = vmin.f32 %v5506, 1.0
  %v5635 = vmin.f32 %v5507, 1.0
  %v5636 = vmin.f32 %v5508, 1.0
  %v5637 = vmin.f32 %v5509, 1.0
  %v5638 = vmin.f32 %v5510, 1.0
  %v5639 = vmin.f32 %v5511, 1.0
  %v5640 = vmin.f32 %v5512, 1.0
  %v5641 = vmin.f32 %v5513, 1.0
  %v5642 = vmul.f32 %v2733, %v5514
  %v5643 = vmul.f32 %v2738, %v5515
  %v5644 = vmul.f32 %v2743, %v5516
  %v5645 = vmul.f32 %v2748, %v5517
  %v5646 = vmul.f32 %v2753, %v5518
  %v5647 = vmul.f32 %v2758, %v5519
  %v5648 = vmul.f32 %v2763, %v5520
  %v5649 = vmul.f32 %v2768, %v5521
  %v5650 = vmul.f32 %v2773, %v5522
  %v5651 = vmul.f32 %v2778, %v5523
  %v5652 = vmul.f32 %v2783, %v5524
  %v5653 = vmul.f32 %v2788, %v5525
  %v5654 = vmul.f32 %v2793, %v5526
  %v5655 = vmul.f32 %v2798, %v5527
  %v5656 = vmul.f32 %v2803, %v5528
  %v5657 = vmul.f32 %v2808, %v5529
  %v5658 = vmul.f32 %v2813, %v5530
  %v5659 = vmul.f32 %v2818, %v5531
  %v5660 = vmul.f32 %v2823, %v5532
  %v5661 = vmul.f32 %v2828, %v5533
  %v5662 = vmul.f32 %v2833, %v5534
  %v5663 = vmul.f32 %v2838, %v5535
  %v5664 = vmul.f32 %v2843, %v5536
  %v5665 = vmul.f32 %v2848, %v5537
  %v5666 = vmul.f32 %v2853, %v5538
  %v5667 = vmul.f32 %v2858, %v5539
  %v5668 = vmul.f32 %v2863, %v5540
  %v5669 = vmul.f32 %v2868, %v5541
  %v5670 = vmul.f32 %v2873, %v5542
  %v5671 = vmul.f32 %v2878, %v5543
  %v5672 = vmul.f32 %v2883, %v5544
  %v5673 = vmul.f32 %v2888, %v5545
  %v5674 = vmul.f32 %v2893, %v5546
  %v5675 = vmul.f32 %v2898, %v5547
  %v5676 = vmul.f32 %v2903, %v5548
  %v5677 = vmul.f32 %v2908, %v5549
  %v5678 = vmul.f32 %v2913, %v5550
  %v5679 = vmul.f32 %v2918, %v5551
  %v5680 = vmul.f32 %v2923, %v5552
  %v5681 = vmul.f32 %v2928, %v5553
  %v5682 = vmul.f32 %v2933, %v5554
  %v5683 = vmul.f32 %v2938, %v5555
  %v5684 = vmul.f32 %v2943, %v5556
  %v5685 = vmul.f32 %v2948, %v5557
  %v5686 = vmul.f32 %v2953, %v5558
  %v5687 = vmul.f32 %v2958, %v5559
  %v5688 = vmul.f32 %v2963, %v5560
  %v5689 = vmul.f32 %v2968, %v5561
  %v5690 = vmul.f32 %v2973, %v5562
  %v5691 = vmul.f32 %v2978, %v5563
  %v5692 = vmul.f32 %v2983, %v5564
  %v5693 = vmul.f32 %v2988, %v5565
  %v5694 = vmul.f32 %v2993, %v5566
  %v5695 = vmul.f32 %v2998, %v5567
  %v5696 = vmul.f32 %v3003, %v5568
  %v5697 = vmul.f32 %v3008, %v5569
  %v5698 = vmul.f32 %v3013, %v5570
  %v5699 = vmul.f32 %v3018, %v5571
  %v5700 = vmul.f32 %v3023, %v5572
  %v5701 = vmul.f32 %v3028, %v5573
  %v5702 = vmul.f32 %v3033, %v5574
  %v5703 = vmul.f32 %v3038, %v5575
  %v5704 = vmul.f32 %v3043, %v5576
  %v5705 = vmul.f32 %v3048, %v5577
  %v5706 = vmul.f32 %v3053, %v5578
  %v5707 = vmul.f32 %v3058, %v5579
  %v5708 = vmul.f32 %v3063, %v5580
  %v5709 = vmul.f32 %v3068, %v5581
  %v5710 = vmul.f32 %v3073, %v5582
  %v5711 = vmul.f32 %v3078, %v5583
  %v5712 = vmul.f32 %v3083, %v5584
  %v5713 = vmul.f32 %v3088, %v5585
  %v5714 = vmul.f32 %v3093, %v5586
  %v5715 = vmul.f32 %v3098, %v5587
  %v5716 = vmul.f32 %v3103, %v5588
  %v5717 = vmul.f32 %v3108, %v5589
  %v5718 = vmul.f32 %v3113, %v5590
  %v5719 = vmul.f32 %v3118, %v5591
  %v5720 = vmul.f32 %v3123, %v5592
  %v5721 = vmul.f32 %v3128, %v5593
  %v5722 = vmul.f32 %v3133, %v5594
  %v5723 = vmul.f32 %v3138, %v5595
  %v5724 = vmul.f32 %v3143, %v5596
  %v5725 = vmul.f32 %v3148, %v5597
  %v5726 = vmul.f32 %v3153, %v5598
  %v5727 = vmul.f32 %v3158, %v5599
  %v5728 = vmul.f32 %v3163, %v5600
  %v5729 = vmul.f32 %v3168, %v5601
  %v5730 = vmul.f32 %v3173, %v5602
  %v5731 = vmul.f32 %v3178, %v5603
  %v5732 = vmul.f32 %v3183, %v5604
  %v5733 = vmul.f32 %v3188, %v5605
  %v5734 = vmul.f32 %v3193, %v5606
  %v5735 = vmul.f32 %v3198, %v5607
  %v5736 = vmul.f32 %v3203, %v5608
  %v5737 = vmul.f32 %v3208, %v5609
  %v5738 = vmul.f32 %v3213, %v5610
  %v5739 = vmul.f32 %v3218, %v5611
  %v5740 = vmul.f32 %v3223, %v5612
  %v5741 = vmul.f32 %v3228, %v5613
  %v5742 = vmul.f32 %v3233, %v5614
  %v5743 = vmul.f32 %v3238, %v5615
  %v5744 = vmul.f32 %v3243, %v5616
  %v5745 = vmul.f32 %v3248, %v5617
  %v5746 = vmul.f32 %v3253, %v5618
  %v5747 = vmul.f32 %v3258, %v5619
  %v5748 = vmul.f32 %v3263, %v5620
  %v5749 = vmul.f32 %v3268, %v5621
  %v5750 = vmul.f32 %v3273, %v5622
  %v5751 = vmul.f32 %v3278, %v5623
  %v5752 = vmul.f32 %v3283, %v5624
  %v5753 = vmul.f32 %v3288, %v5625
  %v5754 = vmul.f32 %v3293, %v5626
  %v5755 = vmul.f32 %v3298, %v5627
  %v5756 = vmul.f32 %v3303, %v5628
  %v5757 = vmul.f32 %v3308, %v5629
  %v5758 = vmul.f32 %v3313, %v5630
  %v5759 = vmul.f32 %v3318, %v5631
  %v5760 = vmul.f32 %v3323, %v5632
  %v5761 = vmul.f32 %v3328, %v5633
  %v5762 = vmul.f32 %v3333, %v5634
  %v5763 = vmul.f32 %v3338, %v5635
  %v5764 = vmul.f32 %v3343, %v5636
  %v5765 = vmul.f32 %v3348, %v5637
  %v5766 = vmul.f32 %v3353, %v5638
  %v5767 = vmul.f32 %v3358, %v5639
  %v5768 = vmul.f32 %v3363, %v5640
  %v5769 = vmul.f32 %v3368, %v5641
  %v5770 = vmul.f32 %v5642, %v4234
  %v5771 = vmul.f32 %v5643, %v4235
  %v5772 = vmul.f32 %v5644, %v4236
  %v5773 = vmul.f32 %v5645, %v4237
  %v5774 = vmul.f32 %v5646, %v4238
  %v5775 = vmul.f32 %v5647, %v4239
  %v5776 = vmul.f32 %v5648, %v4240
  %v5777 = vmul.f32 %v5649, %v4241
  %v5778 = vmul.f32 %v5650, %v4242
  %v5779 = vmul.f32 %v5651, %v4243
  %v5780 = vmul.f32 %v5652, %v4244
  %v5781 = vmul.f32 %v5653, %v4245
  %v5782 = vmul.f32 %v5654, %v4246
  %v5783 = vmul.f32 %v5655, %v4247
  %v5784 = vmul.f32 %v5656, %v4248
  %v5785 = vmul.f32 %v5657, %v4249
  %v5786 = vmul.f32 %v5658, %v4250
  %v5787 = vmul.f32 %v5659, %v4251
  %v5788 = vmul.f32 %v5660, %v4252
  %v5789 = vmul.f32 %v5661, %v4253
  %v5790 = vmul.f32 %v5662, %v4254
  %v5791 = vmul.f32 %v5663, %v4255
  %v5792 = vmul.f32 %v5664, %v4256
  %v5793 = vmul.f32 %v5665, %v4257
  %v5794 = vmul.f32 %v5666, %v4258
  %v5795 = vmul.f32 %v5667, %v4259
  %v5796 = vmul.f32 %v5668, %v4260
  %v5797 = vmul.f32 %v5669, %v4261
  %v5798 = vmul.f32 %v5670, %v4262
  %v5799 = vmul.f32 %v5671, %v4263
  %v5800 = vmul.f32 %v5672, %v4264
  %v5801 = vmul.f32 %v5673, %v4265
  %v5802 = vmul.f32 %v5674, %v4266
  %v5803 = vmul.f32 %v5675, %v4267
  %v5804 = vmul.f32 %v5676, %v4268
  %v5805 = vmul.f32 %v5677, %v4269
  %v5806 = vmul.f32 %v5678, %v4270
  %v5807 = vmul.f32 %v5679, %v4271
  %v5808 = vmul.f32 %v5680, %v4272
  %v5809 = vmul.f32 %v5681, %v4273
  %v5810 = vmul.f32 %v5682, %v4274
  %v5811 = vmul.f32 %v5683, %v4275
  %v5812 = vmul.f32 %v5684, %v4276
  %v5813 = vmul.f32 %v5685, %v4277
  %v5814 = vmul.f32 %v5686, %v4278
  %v5815 = vmul.f32 %v5687, %v4279
  %v5816 = vmul.f32 %v5688, %v4280
  %v5817 = vmul.f32 %v5689, %v4281
  %v5818 = vmul.f32 %v5690, %v4282
  %v5819 = vmul.f32 %v5691, %v4283
  %v5820 = vmul.f32 %v5692, %v4284
  %v5821 = vmul.f32 %v5693, %v4285
  %v5822 = vmul.f32 %v5694, %v4286
  %v5823 = vmul.f32 %v5695, %v4287
  %v5824 = vmul.f32 %v5696, %v4288
  %v5825 = vmul.f32 %v5697, %v4289
  %v5826 = vmul.f32 %v5698, %v4290
  %v5827 = vmul.f32 %v5699, %v4291
  %v5828 = vmul.f32 %v5700, %v4292
  %v5829 = vmul.f32 %v5701, %v4293
  %v5830 = vmul.f32 %v5702, %v4294
  %v5831 = vmul.f32 %v5703, %v4295
  %v5832 = vmul.f32 %v5704, %v4296
  %v5833 = vmul.f32 %v5705, %v4297
  %v5834 = vmul.f32 %v5706, %v4298
  %v5835 = vmul.f32 %v5707, %v4299
  %v5836 = vmul.f32 %v5708, %v4300
  %v5837 = vmul.f32 %v5709, %v4301
  %v5838 = vmul.f32 %v5710, %v4302
  %v5839 = vmul.f32 %v5711, %v4303
  %v5840 = vmul.f32 %v5712, %v4304
  %v5841 = vmul.f32 %v5713, %v4305
  %v5842 = vmul.f32 %v5714, %v4306
  %v5843 = vmul.f32 %v5715, %v4307
  %v5844 = vmul.f32 %v5716, %v4308
  %v5845 = vmul.f32 %v5717, %v4309
  %v5846 = vmul.f32 %v5718, %v4310
  %v5847 = vmul.f32 %v5719, %v4311
  %v5848 = vmul.f32 %v5720, %v4312
  %v5849 = vmul.f32 %v5721, %v4313
  %v5850 = vmul.f32 %v5722, %v4314
  %v5851 = vmul.f32 %v5723, %v4315
  %v5852 = vmul.f32 %v5724, %v4316
  %v5853 = vmul.f32 %v5725, %v4317
  %v5854 = vmul.f32 %v5726, %v4318
  %v5855 = vmul.f32 %v5727, %v4319
  %v5856 = vmul.f32 %v5728, %v4320
  %v5857 = vmul.f32 %v5729, %v4321
  %v5858 = vmul.f32 %v5730, %v4322
  %v5859 = vmul.f32 %v5731, %v4323
  %v5860 = vmul.f32 %v5732, %v4324
  %v5861 = vmul.f32 %v5733, %v4325
  %v5862 = vmul.f32 %v5734, %v4326
  %v5863 = vmul.f32 %v5735, %v4327
  %v5864 = vmul.f32 %v5736, %v4328
  %v5865 = vmul.f32 %v5737, %v4329
  %v5866 = vmul.f32 %v5738, %v4330
  %v5867 = vmul.f32 %v5739, %v4331
  %v5868 = vmul.f32 %v5740, %v4332
  %v5869 = vmul.f32 %v5741, %v4333
  %v5870 = vmul.f32 %v5742, %v4334
  %v5871 = vmul.f32 %v5743, %v4335
  %v5872 = vmul.f32 %v5744, %v4336
  %v5873 = vmul.f32 %v5745, %v4337
  %v5874 = vmul.f32 %v5746, %v4338
  %v5875 = vmul.f32 %v5747, %v4339
  %v5876 = vmul.f32 %v5748, %v4340
  %v5877 = vmul.f32 %v5749, %v4341
  %v5878 = vmul.f32 %v5750, %v4342
  %v5879 = vmul.f32 %v5751, %v4343
  %v5880 = vmul.f32 %v5752, %v4344
  %v5881 = vmul.f32 %v5753, %v4345
  %v5882 = vmul.f32 %v5754, %v4346
  %v5883 = vmul.f32 %v5755, %v4347
  %v5884 = vmul.f32 %v5756, %v4348
  %v5885 = vmul.f32 %v5757, %v4349
  %v5886 = vmul.f32 %v5758, %v4350
  %v5887 = vmul.f32 %v5759, %v4351
  %v5888 = vmul.f32 %v5760, %v4352
  %v5889 = vmul.f32 %v5761, %v4353
  %v5890 = vmul.f32 %v5762, %v4354
  %v5891 = vmul.f32 %v5763, %v4355
  %v5892 = vmul.f32 %v5764, %v4356
  %v5893 = vmul.f32 %v5765, %v4357
  %v5894 = vmul.f32 %v5766, %v4358
  %v5895 = vmul.f32 %v5767, %v4359
  %v5896 = vmul.f32 %v5768, %v4360
  %v5897 = vmul.f32 %v5769, %v4361
  %v5898 = vmul.f32 %v5770, %v294
  %v5899 = vmul.f32 %v5771, %v295
  %v5900 = vmul.f32 %v5772, %v296
  %v5901 = vmul.f32 %v5773, %v297
  %v5902 = vmul.f32 %v5774, %v294
  %v5903 = vmul.f32 %v5775, %v295
  %v5904 = vmul.f32 %v5776, %v296
  %v5905 = vmul.f32 %v5777, %v297
  %v5906 = vmul.f32 %v5778, %v294
  %v5907 = vmul.f32 %v5779, %v295
  %v5908 = vmul.f32 %v5780, %v296
  %v5909 = vmul.f32 %v5781, %v297
  %v5910 = vmul.f32 %v5782, %v294
  %v5911 = vmul.f32 %v5783, %v295
  %v5912 = vmul.f32 %v5784, %v296
  %v5913 = vmul.f32 %v5785, %v297
  %v5914 = vmul.f32 %v5786, %v294
  %v5915 = vmul.f32 %v5787, %v295
  %v5916 = vmul.f32 %v5788, %v296
  %v5917 = vmul.f32 %v5789, %v297
  %v5918 = vmul.f32 %v5790, %v294
  %v5919 = vmul.f32 %v5791, %v295
  %v5920 = vmul.f32 %v5792, %v296
  %v5921 = vmul.f32 %v5793, %v297
  %v5922 = vmul.f32 %v5794, %v294
  %v5923 = vmul.f32 %v5795, %v295
  %v5924 = vmul.f32 %v5796, %v296
  %v5925 = vmul.f32 %v5797, %v297
  %v5926 = vmul.f32 %v5798, %v294
  %v5927 = vmul.f32 %v5799, %v295
  %v5928 = vmul.f32 %v5800, %v296
  %v5929 = vmul.f32 %v5801, %v297
  %v5930 = vmul.f32 %v5802, %v294
  %v5931 = vmul.f32 %v5803, %v295
  %v5932 = vmul.f32 %v5804, %v296
  %v5933 = vmul.f32 %v5805, %v297
  %v5934 = vmul.f32 %v5806, %v294
  %v5935 = vmul.f32 %v5807, %v295
  %v5936 = vmul.f32 %v5808, %v296
  %v5937 = vmul.f32 %v5809, %v297
  %v5938 = vmul.f32 %v5810, %v294
  %v5939 = vmul.f32 %v5811, %v295
  %v5940 = vmul.f32 %v5812, %v296
  %v5941 = vmul.f32 %v5813, %v297
  %v5942 = vmul.f32 %v5814, %v294
  %v5943 = vmul.f32 %v5815, %v295
  %v5944 = vmul.f32 %v5816, %v296
  %v5945 = vmul.f32 %v5817, %v297
  %v5946 = vmul.f32 %v5818, %v294
  %v5947 = vmul.f32 %v5819, %v295
  %v5948 = vmul.f32 %v5820, %v296
  %v5949 = vmul.f32 %v5821, %v297
  %v5950 = vmul.f32 %v5822, %v294
  %v5951 = vmul.f32 %v5823, %v295
  %v5952 = vmul.f32 %v5824, %v296
  %v5953 = vmul.f32 %v5825, %v297
  %v5954 = vmul.f32 %v5826, %v294
  %v5955 = vmul.f32 %v5827, %v295
  %v5956 = vmul.f32 %v5828, %v296
  %v5957 = vmul.f32 %v5829, %v297
  %v5958 = vmul.f32 %v5830, %v294
  %v5959 = vmul.f32 %v5831, %v295
  %v5960 = vmul.f32 %v5832, %v296
  %v5961 = vmul.f32 %v5833, %v297
  %v5962 = vmul.f32 %v5834, %v294
  %v5963 = vmul.f32 %v5835, %v295
  %v5964 = vmul.f32 %v5836, %v296
  %v5965 = vmul.f32 %v5837, %v297
  %v5966 = vmul.f32 %v5838, %v294
  %v5967 = vmul.f32 %v5839, %v295
  %v5968 = vmul.f32 %v5840, %v296
  %v5969 = vmul.f32 %v5841, %v297
  %v5970 = vmul.f32 %v5842, %v294
  %v5971 = vmul.f32 %v5843, %v295
  %v5972 = vmul.f32 %v5844, %v296
  %v5973 = vmul.f32 %v5845, %v297
  %v5974 = vmul.f32 %v5846, %v294
  %v5975 = vmul.f32 %v5847, %v295
  %v5976 = vmul.f32 %v5848, %v296
  %v5977 = vmul.f32 %v5849, %v297
  %v5978 = vmul.f32 %v5850, %v294
  %v5979 = vmul.f32 %v5851, %v295
  %v5980 = vmul.f32 %v5852, %v296
  %v5981 = vmul.f32 %v5853, %v297
  %v5982 = vmul.f32 %v5854, %v294
  %v5983 = vmul.f32 %v5855, %v295
  %v5984 = vmul.f32 %v5856, %v296
  %v5985 = vmul.f32 %v5857, %v297
  %v5986 = vmul.f32 %v5858, %v294
  %v5987 = vmul.f32 %v5859, %v295
  %v5988 = vmul.f32 %v5860, %v296
  %v5989 = vmul.f32 %v5861, %v297
  %v5990 = vmul.f32 %v5862, %v294
  %v5991 = vmul.f32 %v5863, %v295
  %v5992 = vmul.f32 %v5864, %v296
  %v5993 = vmul.f32 %v5865, %v297
  %v5994 = vmul.f32 %v5866, %v294
  %v5995 = vmul.f32 %v5867, %v295
  %v5996 = vmul.f32 %v5868, %v296
  %v5997 = vmul.f32 %v5869, %v297
  %v5998 = vmul.f32 %v5870, %v294
  %v5999 = vmul.f32 %v5871, %v295
  %v6000 = vmul.f32 %v5872, %v296
  %v6001 = vmul.f32 %v5873, %v297
  %v6002 = vmul.f32 %v5874, %v294
  %v6003 = vmul.f32 %v5875, %v295
  %v6004 = vmul.f32 %v5876, %v296
  %v6005 = vmul.f32 %v5877, %v297
  %v6006 = vmul.f32 %v5878, %v294
  %v6007 = vmul.f32 %v5879, %v295
  %v6008 = vmul.f32 %v5880, %v296
  %v6009 = vmul.f32 %v5881, %v297
  %v6010 = vmul.f32 %v5882, %v294
  %v6011 = vmul.f32 %v5883, %v295
  %v6012 = vmul.f32 %v5884, %v296
  %v6013 = vmul.f32 %v5885, %v297
  %v6014 = vmul.f32 %v5886, %v294
  %v6015 = vmul.f32 %v5887, %v295
  %v6016 = vmul.f32 %v5888, %v296
  %v6017 = vmul.f32 %v5889, %v297
  %v6018 = vmul.f32 %v5890, %v294
  %v6019 = vmul.f32 %v5891, %v295
  %v6020 = vmul.f32 %v5892, %v296
  %v6021 = vmul.f32 %v5893, %v297
  %v6022 = vmul.f32 %v5894, %v294
  %v6023 = vmul.f32 %v5895, %v295
  %v6024 = vmul.f32 %v5896, %v296
  %v6025 = vmul.f32 %v5897, %v297
  %vm6026 = vcmask 15360
  %v6027 = vsel %vm6026, %v5898, 0.0
  %v6028 = vsel %vm6026, %v5899, 0.0
  %v6029 = vadd.f32 %v6027, %v6028
  %v6030 = vsel %vm6026, %v5900, 0.0
  %v6031 = vadd.f32 %v6029, %v6030
  %v6032 = vsel %vm6026, %v5901, 0.0
  %v6033 = vadd.f32 %v6031, %v6032
  %v6034 = vrot.slane %v6033, 4
  %v6035 = vadd.f32 %v6033, %v6034
  %v6036 = vrot.slane %v6035, 2
  %v6037 = vadd.f32 %v6035, %v6036
  %v6038 = vrot.slane %v6037, 1
  %v6039 = vadd.f32 %v6037, %v6038
  %v6040 = vsel %vm6026, %v5902, 0.0
  %v6041 = vsel %vm6026, %v5903, 0.0
  %v6042 = vadd.f32 %v6040, %v6041
  %v6043 = vsel %vm6026, %v5904, 0.0
  %v6044 = vadd.f32 %v6042, %v6043
  %v6045 = vsel %vm6026, %v5905, 0.0
  %v6046 = vadd.f32 %v6044, %v6045
  %v6047 = vrot.slane %v6046, 4
  %v6048 = vadd.f32 %v6046, %v6047
  %v6049 = vrot.slane %v6048, 2
  %v6050 = vadd.f32 %v6048, %v6049
  %v6051 = vrot.slane %v6050, 1
  %v6052 = vadd.f32 %v6050, %v6051
  %v6053 = vsel %vm6026, %v5906, 0.0
  %v6054 = vsel %vm6026, %v5907, 0.0
  %v6055 = vadd.f32 %v6053, %v6054
  %v6056 = vsel %vm6026, %v5908, 0.0
  %v6057 = vadd.f32 %v6055, %v6056
  %v6058 = vsel %vm6026, %v5909, 0.0
  %v6059 = vadd.f32 %v6057, %v6058
  %v6060 = vrot.slane %v6059, 4
  %v6061 = vadd.f32 %v6059, %v6060
  %v6062 = vrot.slane %v6061, 2
  %v6063 = vadd.f32 %v6061, %v6062
  %v6064 = vrot.slane %v6063, 1
  %v6065 = vadd.f32 %v6063, %v6064
  %v6066 = vsel %vm6026, %v5910, 0.0
  %v6067 = vsel %vm6026, %v5911, 0.0
  %v6068 = vadd.f32 %v6066, %v6067
  %v6069 = vsel %vm6026, %v5912, 0.0
  %v6070 = vadd.f32 %v6068, %v6069
  %v6071 = vsel %vm6026, %v5913, 0.0
  %v6072 = vadd.f32 %v6070, %v6071
  %v6073 = vrot.slane %v6072, 4
  %v6074 = vadd.f32 %v6072, %v6073
  %v6075 = vrot.slane %v6074, 2
  %v6076 = vadd.f32 %v6074, %v6075
  %v6077 = vrot.slane %v6076, 1
  %v6078 = vadd.f32 %v6076, %v6077
  %v6079 = vsel %vm6026, %v5914, 0.0
  %v6080 = vsel %vm6026, %v5915, 0.0
  %v6081 = vadd.f32 %v6079, %v6080
  %v6082 = vsel %vm6026, %v5916, 0.0
  %v6083 = vadd.f32 %v6081, %v6082
  %v6084 = vsel %vm6026, %v5917, 0.0
  %v6085 = vadd.f32 %v6083, %v6084
  %v6086 = vrot.slane %v6085, 4
  %v6087 = vadd.f32 %v6085, %v6086
  %v6088 = vrot.slane %v6087, 2
  %v6089 = vadd.f32 %v6087, %v6088
  %v6090 = vrot.slane %v6089, 1
  %v6091 = vadd.f32 %v6089, %v6090
  %v6092 = vsel %vm6026, %v5918, 0.0
  %v6093 = vsel %vm6026, %v5919, 0.0
  %v6094 = vadd.f32 %v6092, %v6093
  %v6095 = vsel %vm6026, %v5920, 0.0
  %v6096 = vadd.f32 %v6094, %v6095
  %v6097 = vsel %vm6026, %v5921, 0.0
  %v6098 = vadd.f32 %v6096, %v6097
  %v6099 = vrot.slane %v6098, 4
  %v6100 = vadd.f32 %v6098, %v6099
  %v6101 = vrot.slane %v6100, 2
  %v6102 = vadd.f32 %v6100, %v6101
  %v6103 = vrot.slane %v6102, 1
  %v6104 = vadd.f32 %v6102, %v6103
  %v6105 = vsel %vm6026, %v5922, 0.0
  %v6106 = vsel %vm6026, %v5923, 0.0
  %v6107 = vadd.f32 %v6105, %v6106
  %v6108 = vsel %vm6026, %v5924, 0.0
  %v6109 = vadd.f32 %v6107, %v6108
  %v6110 = vsel %vm6026, %v5925, 0.0
  %v6111 = vadd.f32 %v6109, %v6110
  %v6112 = vrot.slane %v6111, 4
  %v6113 = vadd.f32 %v6111, %v6112
  %v6114 = vrot.slane %v6113, 2
  %v6115 = vadd.f32 %v6113, %v6114
  %v6116 = vrot.slane %v6115, 1
  %v6117 = vadd.f32 %v6115, %v6116
  %v6118 = vsel %vm6026, %v5926, 0.0
  %v6119 = vsel %vm6026, %v5927, 0.0
  %v6120 = vadd.f32 %v6118, %v6119
  %v6121 = vsel %vm6026, %v5928, 0.0
  %v6122 = vadd.f32 %v6120, %v6121
  %v6123 = vsel %vm6026, %v5929, 0.0
  %v6124 = vadd.f32 %v6122, %v6123
  %v6125 = vrot.slane %v6124, 4
  %v6126 = vadd.f32 %v6124, %v6125
  %v6127 = vrot.slane %v6126, 2
  %v6128 = vadd.f32 %v6126, %v6127
  %v6129 = vrot.slane %v6128, 1
  %v6130 = vadd.f32 %v6128, %v6129
  %v6131 = vsel %vm6026, %v5930, 0.0
  %v6132 = vsel %vm6026, %v5931, 0.0
  %v6133 = vadd.f32 %v6131, %v6132
  %v6134 = vsel %vm6026, %v5932, 0.0
  %v6135 = vadd.f32 %v6133, %v6134
  %v6136 = vsel %vm6026, %v5933, 0.0
  %v6137 = vadd.f32 %v6135, %v6136
  %v6138 = vrot.slane %v6137, 4
  %v6139 = vadd.f32 %v6137, %v6138
  %v6140 = vrot.slane %v6139, 2
  %v6141 = vadd.f32 %v6139, %v6140
  %v6142 = vrot.slane %v6141, 1
  %v6143 = vadd.f32 %v6141, %v6142
  %v6144 = vsel %vm6026, %v5934, 0.0
  %v6145 = vsel %vm6026, %v5935, 0.0
  %v6146 = vadd.f32 %v6144, %v6145
  %v6147 = vsel %vm6026, %v5936, 0.0
  %v6148 = vadd.f32 %v6146, %v6147
  %v6149 = vsel %vm6026, %v5937, 0.0
  %v6150 = vadd.f32 %v6148, %v6149
  %v6151 = vrot.slane %v6150, 4
  %v6152 = vadd.f32 %v6150, %v6151
  %v6153 = vrot.slane %v6152, 2
  %v6154 = vadd.f32 %v6152, %v6153
  %v6155 = vrot.slane %v6154, 1
  %v6156 = vadd.f32 %v6154, %v6155
  %v6157 = vsel %vm6026, %v5938, 0.0
  %v6158 = vsel %vm6026, %v5939, 0.0
  %v6159 = vadd.f32 %v6157, %v6158
  %v6160 = vsel %vm6026, %v5940, 0.0
  %v6161 = vadd.f32 %v6159, %v6160
  %v6162 = vsel %vm6026, %v5941, 0.0
  %v6163 = vadd.f32 %v6161, %v6162
  %v6164 = vrot.slane %v6163, 4
  %v6165 = vadd.f32 %v6163, %v6164
  %v6166 = vrot.slane %v6165, 2
  %v6167 = vadd.f32 %v6165, %v6166
  %v6168 = vrot.slane %v6167, 1
  %v6169 = vadd.f32 %v6167, %v6168
  %v6170 = vsel %vm6026, %v5942, 0.0
  %v6171 = vsel %vm6026, %v5943, 0.0
  %v6172 = vadd.f32 %v6170, %v6171
  %v6173 = vsel %vm6026, %v5944, 0.0
  %v6174 = vadd.f32 %v6172, %v6173
  %v6175 = vsel %vm6026, %v5945, 0.0
  %v6176 = vadd.f32 %v6174, %v6175
  %v6177 = vrot.slane %v6176, 4
  %v6178 = vadd.f32 %v6176, %v6177
  %v6179 = vrot.slane %v6178, 2
  %v6180 = vadd.f32 %v6178, %v6179
  %v6181 = vrot.slane %v6180, 1
  %v6182 = vadd.f32 %v6180, %v6181
  %v6183 = vsel %vm6026, %v5946, 0.0
  %v6184 = vsel %vm6026, %v5947, 0.0
  %v6185 = vadd.f32 %v6183, %v6184
  %v6186 = vsel %vm6026, %v5948, 0.0
  %v6187 = vadd.f32 %v6185, %v6186
  %v6188 = vsel %vm6026, %v5949, 0.0
  %v6189 = vadd.f32 %v6187, %v6188
  %v6190 = vrot.slane %v6189, 4
  %v6191 = vadd.f32 %v6189, %v6190
  %v6192 = vrot.slane %v6191, 2
  %v6193 = vadd.f32 %v6191, %v6192
  %v6194 = vrot.slane %v6193, 1
  %v6195 = vadd.f32 %v6193, %v6194
  %v6196 = vsel %vm6026, %v5950, 0.0
  %v6197 = vsel %vm6026, %v5951, 0.0
  %v6198 = vadd.f32 %v6196, %v6197
  %v6199 = vsel %vm6026, %v5952, 0.0
  %v6200 = vadd.f32 %v6198, %v6199
  %v6201 = vsel %vm6026, %v5953, 0.0
  %v6202 = vadd.f32 %v6200, %v6201
  %v6203 = vrot.slane %v6202, 4
  %v6204 = vadd.f32 %v6202, %v6203
  %v6205 = vrot.slane %v6204, 2
  %v6206 = vadd.f32 %v6204, %v6205
  %v6207 = vrot.slane %v6206, 1
  %v6208 = vadd.f32 %v6206, %v6207
  %v6209 = vsel %vm6026, %v5954, 0.0
  %v6210 = vsel %vm6026, %v5955, 0.0
  %v6211 = vadd.f32 %v6209, %v6210
  %v6212 = vsel %vm6026, %v5956, 0.0
  %v6213 = vadd.f32 %v6211, %v6212
  %v6214 = vsel %vm6026, %v5957, 0.0
  %v6215 = vadd.f32 %v6213, %v6214
  %v6216 = vrot.slane %v6215, 4
  %v6217 = vadd.f32 %v6215, %v6216
  %v6218 = vrot.slane %v6217, 2
  %v6219 = vadd.f32 %v6217, %v6218
  %v6220 = vrot.slane %v6219, 1
  %v6221 = vadd.f32 %v6219, %v6220
  %v6222 = vsel %vm6026, %v5958, 0.0
  %v6223 = vsel %vm6026, %v5959, 0.0
  %v6224 = vadd.f32 %v6222, %v6223
  %v6225 = vsel %vm6026, %v5960, 0.0
  %v6226 = vadd.f32 %v6224, %v6225
  %v6227 = vsel %vm6026, %v5961, 0.0
  %v6228 = vadd.f32 %v6226, %v6227
  %v6229 = vrot.slane %v6228, 4
  %v6230 = vadd.f32 %v6228, %v6229
  %v6231 = vrot.slane %v6230, 2
  %v6232 = vadd.f32 %v6230, %v6231
  %v6233 = vrot.slane %v6232, 1
  %v6234 = vadd.f32 %v6232, %v6233
  %v6235 = vsel %vm6026, %v5962, 0.0
  %v6236 = vsel %vm6026, %v5963, 0.0
  %v6237 = vadd.f32 %v6235, %v6236
  %v6238 = vsel %vm6026, %v5964, 0.0
  %v6239 = vadd.f32 %v6237, %v6238
  %v6240 = vsel %vm6026, %v5965, 0.0
  %v6241 = vadd.f32 %v6239, %v6240
  %v6242 = vrot.slane %v6241, 4
  %v6243 = vadd.f32 %v6241, %v6242
  %v6244 = vrot.slane %v6243, 2
  %v6245 = vadd.f32 %v6243, %v6244
  %v6246 = vrot.slane %v6245, 1
  %v6247 = vadd.f32 %v6245, %v6246
  %v6248 = vsel %vm6026, %v5966, 0.0
  %v6249 = vsel %vm6026, %v5967, 0.0
  %v6250 = vadd.f32 %v6248, %v6249
  %v6251 = vsel %vm6026, %v5968, 0.0
  %v6252 = vadd.f32 %v6250, %v6251
  %v6253 = vsel %vm6026, %v5969, 0.0
  %v6254 = vadd.f32 %v6252, %v6253
  %v6255 = vrot.slane %v6254, 4
  %v6256 = vadd.f32 %v6254, %v6255
  %v6257 = vrot.slane %v6256, 2
  %v6258 = vadd.f32 %v6256, %v6257
  %v6259 = vrot.slane %v6258, 1
  %v6260 = vadd.f32 %v6258, %v6259
  %v6261 = vsel %vm6026, %v5970, 0.0
  %v6262 = vsel %vm6026, %v5971, 0.0
  %v6263 = vadd.f32 %v6261, %v6262
  %v6264 = vsel %vm6026, %v5972, 0.0
  %v6265 = vadd.f32 %v6263, %v6264
  %v6266 = vsel %vm6026, %v5973, 0.0
  %v6267 = vadd.f32 %v6265, %v6266
  %v6268 = vrot.slane %v6267, 4
  %v6269 = vadd.f32 %v6267, %v6268
  %v6270 = vrot.slane %v6269, 2
  %v6271 = vadd.f32 %v6269, %v6270
  %v6272 = vrot.slane %v6271, 1
  %v6273 = vadd.f32 %v6271, %v6272
  %v6274 = vsel %vm6026, %v5974, 0.0
  %v6275 = vsel %vm6026, %v5975, 0.0
  %v6276 = vadd.f32 %v6274, %v6275
  %v6277 = vsel %vm6026, %v5976, 0.0
  %v6278 = vadd.f32 %v6276, %v6277
  %v6279 = vsel %vm6026, %v5977, 0.0
  %v6280 = vadd.f32 %v6278, %v6279
  %v6281 = vrot.slane %v6280, 4
  %v6282 = vadd.f32 %v6280, %v6281
  %v6283 = vrot.slane %v6282, 2
  %v6284 = vadd.f32 %v6282, %v6283
  %v6285 = vrot.slane %v6284, 1
  %v6286 = vadd.f32 %v6284, %v6285
  %v6287 = vsel %vm6026, %v5978, 0.0
  %v6288 = vsel %vm6026, %v5979, 0.0
  %v6289 = vadd.f32 %v6287, %v6288
  %v6290 = vsel %vm6026, %v5980, 0.0
  %v6291 = vadd.f32 %v6289, %v6290
  %v6292 = vsel %vm6026, %v5981, 0.0
  %v6293 = vadd.f32 %v6291, %v6292
  %v6294 = vrot.slane %v6293, 4
  %v6295 = vadd.f32 %v6293, %v6294
  %v6296 = vrot.slane %v6295, 2
  %v6297 = vadd.f32 %v6295, %v6296
  %v6298 = vrot.slane %v6297, 1
  %v6299 = vadd.f32 %v6297, %v6298
  %v6300 = vsel %vm6026, %v5982, 0.0
  %v6301 = vsel %vm6026, %v5983, 0.0
  %v6302 = vadd.f32 %v6300, %v6301
  %v6303 = vsel %vm6026, %v5984, 0.0
  %v6304 = vadd.f32 %v6302, %v6303
  %v6305 = vsel %vm6026, %v5985, 0.0
  %v6306 = vadd.f32 %v6304, %v6305
  %v6307 = vrot.slane %v6306, 4
  %v6308 = vadd.f32 %v6306, %v6307
  %v6309 = vrot.slane %v6308, 2
  %v6310 = vadd.f32 %v6308, %v6309
  %v6311 = vrot.slane %v6310, 1
  %v6312 = vadd.f32 %v6310, %v6311
  %v6313 = vsel %vm6026, %v5986, 0.0
  %v6314 = vsel %vm6026, %v5987, 0.0
  %v6315 = vadd.f32 %v6313, %v6314
  %v6316 = vsel %vm6026, %v5988, 0.0
  %v6317 = vadd.f32 %v6315, %v6316
  %v6318 = vsel %vm6026, %v5989, 0.0
  %v6319 = vadd.f32 %v6317, %v6318
  %v6320 = vrot.slane %v6319, 4
  %v6321 = vadd.f32 %v6319, %v6320
  %v6322 = vrot.slane %v6321, 2
  %v6323 = vadd.f32 %v6321, %v6322
  %v6324 = vrot.slane %v6323, 1
  %v6325 = vadd.f32 %v6323, %v6324
  %v6326 = vsel %vm6026, %v5990, 0.0
  %v6327 = vsel %vm6026, %v5991, 0.0
  %v6328 = vadd.f32 %v6326, %v6327
  %v6329 = vsel %vm6026, %v5992, 0.0
  %v6330 = vadd.f32 %v6328, %v6329
  %v6331 = vsel %vm6026, %v5993, 0.0
  %v6332 = vadd.f32 %v6330, %v6331
  %v6333 = vrot.slane %v6332, 4
  %v6334 = vadd.f32 %v6332, %v6333
  %v6335 = vrot.slane %v6334, 2
  %v6336 = vadd.f32 %v6334, %v6335
  %v6337 = vrot.slane %v6336, 1
  %v6338 = vadd.f32 %v6336, %v6337
  %v6339 = vsel %vm6026, %v5994, 0.0
  %v6340 = vsel %vm6026, %v5995, 0.0
  %v6341 = vadd.f32 %v6339, %v6340
  %v6342 = vsel %vm6026, %v5996, 0.0
  %v6343 = vadd.f32 %v6341, %v6342
  %v6344 = vsel %vm6026, %v5997, 0.0
  %v6345 = vadd.f32 %v6343, %v6344
  %v6346 = vrot.slane %v6345, 4
  %v6347 = vadd.f32 %v6345, %v6346
  %v6348 = vrot.slane %v6347, 2
  %v6349 = vadd.f32 %v6347, %v6348
  %v6350 = vrot.slane %v6349, 1
  %v6351 = vadd.f32 %v6349, %v6350
  %v6352 = vsel %vm6026, %v5998, 0.0
  %v6353 = vsel %vm6026, %v5999, 0.0
  %v6354 = vadd.f32 %v6352, %v6353
  %v6355 = vsel %vm6026, %v6000, 0.0
  %v6356 = vadd.f32 %v6354, %v6355
  %v6357 = vsel %vm6026, %v6001, 0.0
  %v6358 = vadd.f32 %v6356, %v6357
  %v6359 = vrot.slane %v6358, 4
  %v6360 = vadd.f32 %v6358, %v6359
  %v6361 = vrot.slane %v6360, 2
  %v6362 = vadd.f32 %v6360, %v6361
  %v6363 = vrot.slane %v6362, 1
  %v6364 = vadd.f32 %v6362, %v6363
  %v6365 = vsel %vm6026, %v6002, 0.0
  %v6366 = vsel %vm6026, %v6003, 0.0
  %v6367 = vadd.f32 %v6365, %v6366
  %v6368 = vsel %vm6026, %v6004, 0.0
  %v6369 = vadd.f32 %v6367, %v6368
  %v6370 = vsel %vm6026, %v6005, 0.0
  %v6371 = vadd.f32 %v6369, %v6370
  %v6372 = vrot.slane %v6371, 4
  %v6373 = vadd.f32 %v6371, %v6372
  %v6374 = vrot.slane %v6373, 2
  %v6375 = vadd.f32 %v6373, %v6374
  %v6376 = vrot.slane %v6375, 1
  %v6377 = vadd.f32 %v6375, %v6376
  %v6378 = vsel %vm6026, %v6006, 0.0
  %v6379 = vsel %vm6026, %v6007, 0.0
  %v6380 = vadd.f32 %v6378, %v6379
  %v6381 = vsel %vm6026, %v6008, 0.0
  %v6382 = vadd.f32 %v6380, %v6381
  %v6383 = vsel %vm6026, %v6009, 0.0
  %v6384 = vadd.f32 %v6382, %v6383
  %v6385 = vrot.slane %v6384, 4
  %v6386 = vadd.f32 %v6384, %v6385
  %v6387 = vrot.slane %v6386, 2
  %v6388 = vadd.f32 %v6386, %v6387
  %v6389 = vrot.slane %v6388, 1
  %v6390 = vadd.f32 %v6388, %v6389
  %v6391 = vsel %vm6026, %v6010, 0.0
  %v6392 = vsel %vm6026, %v6011, 0.0
  %v6393 = vadd.f32 %v6391, %v6392
  %v6394 = vsel %vm6026, %v6012, 0.0
  %v6395 = vadd.f32 %v6393, %v6394
  %v6396 = vsel %vm6026, %v6013, 0.0
  %v6397 = vadd.f32 %v6395, %v6396
  %v6398 = vrot.slane %v6397, 4
  %v6399 = vadd.f32 %v6397, %v6398
  %v6400 = vrot.slane %v6399, 2
  %v6401 = vadd.f32 %v6399, %v6400
  %v6402 = vrot.slane %v6401, 1
  %v6403 = vadd.f32 %v6401, %v6402
  %v6404 = vsel %vm6026, %v6014, 0.0
  %v6405 = vsel %vm6026, %v6015, 0.0
  %v6406 = vadd.f32 %v6404, %v6405
  %v6407 = vsel %vm6026, %v6016, 0.0
  %v6408 = vadd.f32 %v6406, %v6407
  %v6409 = vsel %vm6026, %v6017, 0.0
  %v6410 = vadd.f32 %v6408, %v6409
  %v6411 = vrot.slane %v6410, 4
  %v6412 = vadd.f32 %v6410, %v6411
  %v6413 = vrot.slane %v6412, 2
  %v6414 = vadd.f32 %v6412, %v6413
  %v6415 = vrot.slane %v6414, 1
  %v6416 = vadd.f32 %v6414, %v6415
  %v6417 = vsel %vm6026, %v6018, 0.0
  %v6418 = vsel %vm6026, %v6019, 0.0
  %v6419 = vadd.f32 %v6417, %v6418
  %v6420 = vsel %vm6026, %v6020, 0.0
  %v6421 = vadd.f32 %v6419, %v6420
  %v6422 = vsel %vm6026, %v6021, 0.0
  %v6423 = vadd.f32 %v6421, %v6422
  %v6424 = vrot.slane %v6423, 4
  %v6425 = vadd.f32 %v6423, %v6424
  %v6426 = vrot.slane %v6425, 2
  %v6427 = vadd.f32 %v6425, %v6426
  %v6428 = vrot.slane %v6427, 1
  %v6429 = vadd.f32 %v6427, %v6428
  %v6430 = vsel %vm6026, %v6022, 0.0
  %v6431 = vsel %vm6026, %v6023, 0.0
  %v6432 = vadd.f32 %v6430, %v6431
  %v6433 = vsel %vm6026, %v6024, 0.0
  %v6434 = vadd.f32 %v6432, %v6433
  %v6435 = vsel %vm6026, %v6025, 0.0
  %v6436 = vadd.f32 %v6434, %v6435
  %v6437 = vrot.slane %v6436, 4
  %v6438 = vadd.f32 %v6436, %v6437
  %v6439 = vrot.slane %v6438, 2
  %v6440 = vadd.f32 %v6438, %v6439
  %v6441 = vrot.slane %v6440, 1
  %v6442 = vadd.f32 %v6440, %v6441
  %v6443 = vld [vmem:[%s9] sm:$0xff]
  %v6444 = vld [vmem:[%s9 + $0x8] sm:$0xff]
  %v6445 = vld [vmem:[%s9 + $0x10] sm:$0xff]
  %v6446 = vld [vmem:[%s9 + $0x18] sm:$0xff]
  %v6447 = vsub.f32 1.0, %v6443
  %v6448 = vsub.f32 1.0, %v6444
  %v6449 = vsub.f32 1.0, %v6445
  %v6450 = vsub.f32 1.0, %v6446
  %6452 = vset.pattern.permute.xlu0 0
  %6453 = vperm.xlu0 %6452, %v6447
  %v6454 = vpop.permute.xlu0 %6453
  %6457 = vset.pattern.permute.xlu0 0
  %6458 = vperm.xlu0 %6457, %v6448
  %v6459 = vpop.permute.xlu0 %6458
  %6462 = vset.pattern.permute.xlu0 0
  %6463 = vperm.xlu0 %6462, %v6449
  %v6464 = vpop.permute.xlu0 %6463
  %6467 = vset.pattern.permute.xlu0 0
  %6468 = vperm.xlu0 %6467, %v6450
  %v6469 = vpop.permute.xlu0 %6468
  %v6471 = vmul.f32 %v6454, %v294
  %v6472 = vmul.f32 %v6459, %v295
  %v6473 = vmul.f32 %v6464, %v296
  %v6474 = vmul.f32 %v6469, %v297
  %v6475 = vld [vmem:[%s2] sm:$0xff]
  %v6476 = vld [vmem:[%s2 + $0x8] sm:$0xff]
  %v6477 = vld [vmem:[%s2 + $0x10] sm:$0xff]
  %v6478 = vld [vmem:[%s2 + $0x18] sm:$0xff]
  %v6483 = vrot.slane %v6475, 1
  %v6484 = vrot.slane %v6475, 2
  %v6485 = vrot.slane %v6475, 3
  %v6486 = vrot.slane %v6475, 4
  %v6487 = vrot.slane %v6475, 5
  %v6488 = vrot.slane %v6475, 6
  %v6489 = vrot.slane %v6475, 7
  %v6490 = vrot.slane %v6476, 1
  %v6491 = vrot.slane %v6476, 2
  %v6492 = vrot.slane %v6476, 3
  %v6493 = vrot.slane %v6476, 4
  %v6494 = vrot.slane %v6476, 5
  %v6495 = vrot.slane %v6476, 6
  %v6496 = vrot.slane %v6476, 7
  %v6497 = vrot.slane %v6477, 1
  %v6498 = vrot.slane %v6477, 2
  %v6499 = vrot.slane %v6477, 3
  %v6500 = vrot.slane %v6477, 4
  %v6501 = vrot.slane %v6477, 5
  %v6502 = vrot.slane %v6477, 6
  %v6503 = vrot.slane %v6477, 7
  %v6504 = vrot.slane %v6478, 1
  %v6505 = vrot.slane %v6478, 2
  %v6506 = vrot.slane %v6478, 3
  %v6507 = vrot.slane %v6478, 4
  %v6508 = vrot.slane %v6478, 5
  %v6509 = vrot.slane %v6478, 6
  %v6510 = vrot.slane %v6478, 7
  %v6543 = vadd.f32 %v6039, %v6475
  %v6544 = vadd.f32 %v6052, %v6483
  %v6545 = vadd.f32 %v6065, %v6484
  %v6546 = vadd.f32 %v6078, %v6485
  %v6547 = vadd.f32 %v6091, %v6486
  %v6548 = vadd.f32 %v6104, %v6487
  %v6549 = vadd.f32 %v6117, %v6488
  %v6550 = vadd.f32 %v6130, %v6489
  %v6551 = vadd.f32 %v6143, %v6476
  %v6552 = vadd.f32 %v6156, %v6490
  %v6553 = vadd.f32 %v6169, %v6491
  %v6554 = vadd.f32 %v6182, %v6492
  %v6555 = vadd.f32 %v6195, %v6493
  %v6556 = vadd.f32 %v6208, %v6494
  %v6557 = vadd.f32 %v6221, %v6495
  %v6558 = vadd.f32 %v6234, %v6496
  %v6559 = vadd.f32 %v6247, %v6477
  %v6560 = vadd.f32 %v6260, %v6497
  %v6561 = vadd.f32 %v6273, %v6498
  %v6562 = vadd.f32 %v6286, %v6499
  %v6563 = vadd.f32 %v6299, %v6500
  %v6564 = vadd.f32 %v6312, %v6501
  %v6565 = vadd.f32 %v6325, %v6502
  %v6566 = vadd.f32 %v6338, %v6503
  %v6567 = vadd.f32 %v6351, %v6478
  %v6568 = vadd.f32 %v6364, %v6504
  %v6569 = vadd.f32 %v6377, %v6505
  %v6570 = vadd.f32 %v6390, %v6506
  %v6571 = vadd.f32 %v6403, %v6507
  %v6572 = vadd.f32 %v6416, %v6508
  %v6573 = vadd.f32 %v6429, %v6509
  %v6574 = vadd.f32 %v6442, %v6510
  %v6575 = vxor.u32 %v6543, 2147483648
  %v6576 = vxor.u32 %v6544, 2147483648
  %v6577 = vxor.u32 %v6545, 2147483648
  %v6578 = vxor.u32 %v6546, 2147483648
  %v6579 = vxor.u32 %v6547, 2147483648
  %v6580 = vxor.u32 %v6548, 2147483648
  %v6581 = vxor.u32 %v6549, 2147483648
  %v6582 = vxor.u32 %v6550, 2147483648
  %v6583 = vxor.u32 %v6551, 2147483648
  %v6584 = vxor.u32 %v6552, 2147483648
  %v6585 = vxor.u32 %v6553, 2147483648
  %v6586 = vxor.u32 %v6554, 2147483648
  %v6587 = vxor.u32 %v6555, 2147483648
  %v6588 = vxor.u32 %v6556, 2147483648
  %v6589 = vxor.u32 %v6557, 2147483648
  %v6590 = vxor.u32 %v6558, 2147483648
  %v6591 = vxor.u32 %v6559, 2147483648
  %v6592 = vxor.u32 %v6560, 2147483648
  %v6593 = vxor.u32 %v6561, 2147483648
  %v6594 = vxor.u32 %v6562, 2147483648
  %v6595 = vxor.u32 %v6563, 2147483648
  %v6596 = vxor.u32 %v6564, 2147483648
  %v6597 = vxor.u32 %v6565, 2147483648
  %v6598 = vxor.u32 %v6566, 2147483648
  %v6599 = vxor.u32 %v6567, 2147483648
  %v6600 = vxor.u32 %v6568, 2147483648
  %v6601 = vxor.u32 %v6569, 2147483648
  %v6602 = vxor.u32 %v6570, 2147483648
  %v6603 = vxor.u32 %v6571, 2147483648
  %v6604 = vxor.u32 %v6572, 2147483648
  %v6605 = vxor.u32 %v6573, 2147483648
  %v6606 = vxor.u32 %v6574, 2147483648
  %v6607 = vmul.f32 %v6575, 1.442695
  %v6608 = vpow.pop %v6607
  %v6609 = vmul.f32 %v6576, 1.442695
  %v6610 = vpow.pop %v6609
  %v6611 = vmul.f32 %v6577, 1.442695
  %v6612 = vpow.pop %v6611
  %v6613 = vmul.f32 %v6578, 1.442695
  %v6614 = vpow.pop %v6613
  %v6615 = vmul.f32 %v6579, 1.442695
  %v6616 = vpow.pop %v6615
  %v6617 = vmul.f32 %v6580, 1.442695
  %v6618 = vpow.pop %v6617
  %v6619 = vmul.f32 %v6581, 1.442695
  %v6620 = vpow.pop %v6619
  %v6621 = vmul.f32 %v6582, 1.442695
  %v6622 = vpow.pop %v6621
  %v6623 = vmul.f32 %v6583, 1.442695
  %v6624 = vpow.pop %v6623
  %v6625 = vmul.f32 %v6584, 1.442695
  %v6626 = vpow.pop %v6625
  %v6627 = vmul.f32 %v6585, 1.442695
  %v6628 = vpow.pop %v6627
  %v6629 = vmul.f32 %v6586, 1.442695
  %v6630 = vpow.pop %v6629
  %v6631 = vmul.f32 %v6587, 1.442695
  %v6632 = vpow.pop %v6631
  %v6633 = vmul.f32 %v6588, 1.442695
  %v6634 = vpow.pop %v6633
  %v6635 = vmul.f32 %v6589, 1.442695
  %v6636 = vpow.pop %v6635
  %v6637 = vmul.f32 %v6590, 1.442695
  %v6638 = vpow.pop %v6637
  %v6639 = vmul.f32 %v6591, 1.442695
  %v6640 = vpow.pop %v6639
  %v6641 = vmul.f32 %v6592, 1.442695
  %v6642 = vpow.pop %v6641
  %v6643 = vmul.f32 %v6593, 1.442695
  %v6644 = vpow.pop %v6643
  %v6645 = vmul.f32 %v6594, 1.442695
  %v6646 = vpow.pop %v6645
  %v6647 = vmul.f32 %v6595, 1.442695
  %v6648 = vpow.pop %v6647
  %v6649 = vmul.f32 %v6596, 1.442695
  %v6650 = vpow.pop %v6649
  %v6651 = vmul.f32 %v6597, 1.442695
  %v6652 = vpow.pop %v6651
  %v6653 = vmul.f32 %v6598, 1.442695
  %v6654 = vpow.pop %v6653
  %v6655 = vmul.f32 %v6599, 1.442695
  %v6656 = vpow.pop %v6655
  %v6657 = vmul.f32 %v6600, 1.442695
  %v6658 = vpow.pop %v6657
  %v6659 = vmul.f32 %v6601, 1.442695
  %v6660 = vpow.pop %v6659
  %v6661 = vmul.f32 %v6602, 1.442695
  %v6662 = vpow.pop %v6661
  %v6663 = vmul.f32 %v6603, 1.442695
  %v6664 = vpow.pop %v6663
  %v6665 = vmul.f32 %v6604, 1.442695
  %v6666 = vpow.pop %v6665
  %v6667 = vmul.f32 %v6605, 1.442695
  %v6668 = vpow.pop %v6667
  %v6669 = vmul.f32 %v6606, 1.442695
  %v6670 = vpow.pop %v6669
  %v6671 = vadd.f32 %v6608, 1.0
  %v6672 = vadd.f32 %v6610, 1.0
  %v6673 = vadd.f32 %v6612, 1.0
  %v6674 = vadd.f32 %v6614, 1.0
  %v6675 = vadd.f32 %v6616, 1.0
  %v6676 = vadd.f32 %v6618, 1.0
  %v6677 = vadd.f32 %v6620, 1.0
  %v6678 = vadd.f32 %v6622, 1.0
  %v6679 = vadd.f32 %v6624, 1.0
  %v6680 = vadd.f32 %v6626, 1.0
  %v6681 = vadd.f32 %v6628, 1.0
  %v6682 = vadd.f32 %v6630, 1.0
  %v6683 = vadd.f32 %v6632, 1.0
  %v6684 = vadd.f32 %v6634, 1.0
  %v6685 = vadd.f32 %v6636, 1.0
  %v6686 = vadd.f32 %v6638, 1.0
  %v6687 = vadd.f32 %v6640, 1.0
  %v6688 = vadd.f32 %v6642, 1.0
  %v6689 = vadd.f32 %v6644, 1.0
  %v6690 = vadd.f32 %v6646, 1.0
  %v6691 = vadd.f32 %v6648, 1.0
  %v6692 = vadd.f32 %v6650, 1.0
  %v6693 = vadd.f32 %v6652, 1.0
  %v6694 = vadd.f32 %v6654, 1.0
  %v6695 = vadd.f32 %v6656, 1.0
  %v6696 = vadd.f32 %v6658, 1.0
  %v6697 = vadd.f32 %v6660, 1.0
  %v6698 = vadd.f32 %v6662, 1.0
  %v6699 = vadd.f32 %v6664, 1.0
  %v6700 = vadd.f32 %v6666, 1.0
  %v6701 = vadd.f32 %v6668, 1.0
  %v6702 = vadd.f32 %v6670, 1.0
  %v6703 = vrcp.pop %v6671
  %v6704 = vmul.f32 1.0, %v6703
  %v6705 = vrcp.pop %v6672
  %v6706 = vmul.f32 1.0, %v6705
  %v6707 = vrcp.pop %v6673
  %v6708 = vmul.f32 1.0, %v6707
  %v6709 = vrcp.pop %v6674
  %v6710 = vmul.f32 1.0, %v6709
  %v6711 = vrcp.pop %v6675
  %v6712 = vmul.f32 1.0, %v6711
  %v6713 = vrcp.pop %v6676
  %v6714 = vmul.f32 1.0, %v6713
  %v6715 = vrcp.pop %v6677
  %v6716 = vmul.f32 1.0, %v6715
  %v6717 = vrcp.pop %v6678
  %v6718 = vmul.f32 1.0, %v6717
  %v6719 = vrcp.pop %v6679
  %v6720 = vmul.f32 1.0, %v6719
  %v6721 = vrcp.pop %v6680
  %v6722 = vmul.f32 1.0, %v6721
  %v6723 = vrcp.pop %v6681
  %v6724 = vmul.f32 1.0, %v6723
  %v6725 = vrcp.pop %v6682
  %v6726 = vmul.f32 1.0, %v6725
  %v6727 = vrcp.pop %v6683
  %v6728 = vmul.f32 1.0, %v6727
  %v6729 = vrcp.pop %v6684
  %v6730 = vmul.f32 1.0, %v6729
  %v6731 = vrcp.pop %v6685
  %v6732 = vmul.f32 1.0, %v6731
  %v6733 = vrcp.pop %v6686
  %v6734 = vmul.f32 1.0, %v6733
  %v6735 = vrcp.pop %v6687
  %v6736 = vmul.f32 1.0, %v6735
  %v6737 = vrcp.pop %v6688
  %v6738 = vmul.f32 1.0, %v6737
  %v6739 = vrcp.pop %v6689
  %v6740 = vmul.f32 1.0, %v6739
  %v6741 = vrcp.pop %v6690
  %v6742 = vmul.f32 1.0, %v6741
  %v6743 = vrcp.pop %v6691
  %v6744 = vmul.f32 1.0, %v6743
  %v6745 = vrcp.pop %v6692
  %v6746 = vmul.f32 1.0, %v6745
  %v6747 = vrcp.pop %v6693
  %v6748 = vmul.f32 1.0, %v6747
  %v6749 = vrcp.pop %v6694
  %v6750 = vmul.f32 1.0, %v6749
  %v6751 = vrcp.pop %v6695
  %v6752 = vmul.f32 1.0, %v6751
  %v6753 = vrcp.pop %v6696
  %v6754 = vmul.f32 1.0, %v6753
  %v6755 = vrcp.pop %v6697
  %v6756 = vmul.f32 1.0, %v6755
  %v6757 = vrcp.pop %v6698
  %v6758 = vmul.f32 1.0, %v6757
  %v6759 = vrcp.pop %v6699
  %v6760 = vmul.f32 1.0, %v6759
  %v6761 = vrcp.pop %v6700
  %v6762 = vmul.f32 1.0, %v6761
  %v6763 = vrcp.pop %v6701
  %v6764 = vmul.f32 1.0, %v6763
  %v6765 = vrcp.pop %v6702
  %v6766 = vmul.f32 1.0, %v6765
  %6768 = vset.pattern.permute.xlu0 0
  %6769 = vperm.xlu0 %6768, %v6443
  %v6770 = vpop.permute.xlu0 %6769
  %6773 = vset.pattern.permute.xlu0 0
  %6774 = vperm.xlu0 %6773, %v6444
  %v6775 = vpop.permute.xlu0 %6774
  %6778 = vset.pattern.permute.xlu0 0
  %6779 = vperm.xlu0 %6778, %v6445
  %v6780 = vpop.permute.xlu0 %6779
  %6783 = vset.pattern.permute.xlu0 0
  %6784 = vperm.xlu0 %6783, %v6446
  %v6785 = vpop.permute.xlu0 %6784
  %v6819 = vrot.slane %v6706, 7
  %vm6820 = vcmask 1041409
  %v6821 = vsel %vm6820, %v6819, %v6704
  %v6822 = vrot.slane %v6708, 6
  %vm6823 = vcmask 1042434
  %v6824 = vsel %vm6823, %v6822, %v6821
  %v6825 = vrot.slane %v6710, 5
  %vm6826 = vcmask 1043459
  %v6827 = vsel %vm6826, %v6825, %v6824
  %v6828 = vrot.slane %v6712, 4
  %vm6829 = vcmask 1044484
  %v6830 = vsel %vm6829, %v6828, %v6827
  %v6831 = vrot.slane %v6714, 3
  %vm6832 = vcmask 1045509
  %v6833 = vsel %vm6832, %v6831, %v6830
  %v6834 = vrot.slane %v6716, 2
  %vm6835 = vcmask 1046534
  %v6836 = vsel %vm6835, %v6834, %v6833
  %v6837 = vrot.slane %v6718, 1
  %vm6838 = vcmask 1047559
  %v6839 = vsel %vm6838, %v6837, %v6836
  %v6840 = vrot.slane %v6722, 7
  %v6841 = vsel %vm6820, %v6840, %v6720
  %v6842 = vrot.slane %v6724, 6
  %v6843 = vsel %vm6823, %v6842, %v6841
  %v6844 = vrot.slane %v6726, 5
  %v6845 = vsel %vm6826, %v6844, %v6843
  %v6846 = vrot.slane %v6728, 4
  %v6847 = vsel %vm6829, %v6846, %v6845
  %v6848 = vrot.slane %v6730, 3
  %v6849 = vsel %vm6832, %v6848, %v6847
  %v6850 = vrot.slane %v6732, 2
  %v6851 = vsel %vm6835, %v6850, %v6849
  %v6852 = vrot.slane %v6734, 1
  %v6853 = vsel %vm6838, %v6852, %v6851
  %v6854 = vrot.slane %v6738, 7
  %v6855 = vsel %vm6820, %v6854, %v6736
  %v6856 = vrot.slane %v6740, 6
  %v6857 = vsel %vm6823, %v6856, %v6855
  %v6858 = vrot.slane %v6742, 5
  %v6859 = vsel %vm6826, %v6858, %v6857
  %v6860 = vrot.slane %v6744, 4
  %v6861 = vsel %vm6829, %v6860, %v6859
  %v6862 = vrot.slane %v6746, 3
  %v6863 = vsel %vm6832, %v6862, %v6861
  %v6864 = vrot.slane %v6748, 2
  %v6865 = vsel %vm6835, %v6864, %v6863
  %v6866 = vrot.slane %v6750, 1
  %v6867 = vsel %vm6838, %v6866, %v6865
  %v6868 = vrot.slane %v6754, 7
  %v6869 = vsel %vm6820, %v6868, %v6752
  %v6870 = vrot.slane %v6756, 6
  %v6871 = vsel %vm6823, %v6870, %v6869
  %v6872 = vrot.slane %v6758, 5
  %v6873 = vsel %vm6826, %v6872, %v6871
  %v6874 = vrot.slane %v6760, 4
  %v6875 = vsel %vm6829, %v6874, %v6873
  %v6876 = vrot.slane %v6762, 3
  %v6877 = vsel %vm6832, %v6876, %v6875
  %v6878 = vrot.slane %v6764, 2
  %v6879 = vsel %vm6835, %v6878, %v6877
  %v6880 = vrot.slane %v6766, 1
  %v6881 = vsel %vm6838, %v6880, %v6879
  %v6886 = vmul.f32 %v6770, %v6839
  %v6887 = vmul.f32 %v6775, %v6853
  %v6888 = vmul.f32 %v6780, %v6867
  %v6889 = vmul.f32 %v6785, %v6881
  %v6890 = vadd.f32 %v6471, %v6886
  %v6891 = vadd.f32 %v6472, %v6887
  %v6892 = vadd.f32 %v6473, %v6888
  %v6893 = vadd.f32 %v6474, %v6889
  %6894 = vst.msk [vmem:[%s10] sm:$0xff] %vm6026, %v6890
  %6895 = vst.msk [vmem:[%s10 + $0x8] sm:$0xff] %vm6026, %v6891
  %6896 = vst.msk [vmem:[%s10 + $0x10] sm:$0xff] %vm6026, %v6892
  %6897 = vst.msk [vmem:[%s10 + $0x18] sm:$0xff] %vm6026, %v6893
  %6898 = vst.msk [vmem:[%s11] sm:$0xff] %vm6026, %v4234
  %6899 = vst.msk [vmem:[%s11 + $0x8] sm:$0xff] %vm6026, %v4235
  %6900 = vst.msk [vmem:[%s11 + $0x10] sm:$0xff] %vm6026, %v4236
  %6901 = vst.msk [vmem:[%s11 + $0x18] sm:$0xff] %vm6026, %v4237
  %6902 = vst.msk [vmem:[%s11 + $0x20] sm:$0xff] %vm6026, %v4238
  %6903 = vst.msk [vmem:[%s11 + $0x28] sm:$0xff] %vm6026, %v4239
  %6904 = vst.msk [vmem:[%s11 + $0x30] sm:$0xff] %vm6026, %v4240
  %6905 = vst.msk [vmem:[%s11 + $0x38] sm:$0xff] %vm6026, %v4241
  %6906 = vst.msk [vmem:[%s11 + $0x40] sm:$0xff] %vm6026, %v4242
  %6907 = vst.msk [vmem:[%s11 + $0x48] sm:$0xff] %vm6026, %v4243
  %6908 = vst.msk [vmem:[%s11 + $0x50] sm:$0xff] %vm6026, %v4244
  %6909 = vst.msk [vmem:[%s11 + $0x58] sm:$0xff] %vm6026, %v4245
  %6910 = vst.msk [vmem:[%s11 + $0x60] sm:$0xff] %vm6026, %v4246
  %6911 = vst.msk [vmem:[%s11 + $0x68] sm:$0xff] %vm6026, %v4247
  %6912 = vst.msk [vmem:[%s11 + $0x70] sm:$0xff] %vm6026, %v4248
  %6913 = vst.msk [vmem:[%s11 + $0x78] sm:$0xff] %vm6026, %v4249
  %6914 = vst.msk [vmem:[%s11 + $0x80] sm:$0xff] %vm6026, %v4250
  %6915 = vst.msk [vmem:[%s11 + $0x88] sm:$0xff] %vm6026, %v4251
  %6916 = vst.msk [vmem:[%s11 + $0x90] sm:$0xff] %vm6026, %v4252
  %6917 = vst.msk [vmem:[%s11 + $0x98] sm:$0xff] %vm6026, %v4253
  %6918 = vst.msk [vmem:[%s11 + $0xa0] sm:$0xff] %vm6026, %v4254
  %6919 = vst.msk [vmem:[%s11 + $0xa8] sm:$0xff] %vm6026, %v4255
  %6920 = vst.msk [vmem:[%s11 + $0xb0] sm:$0xff] %vm6026, %v4256
  %6921 = vst.msk [vmem:[%s11 + $0xb8] sm:$0xff] %vm6026, %v4257
  %6922 = vst.msk [vmem:[%s11 + $0xc0] sm:$0xff] %vm6026, %v4258
  %6923 = vst.msk [vmem:[%s11 + $0xc8] sm:$0xff] %vm6026, %v4259
  %6924 = vst.msk [vmem:[%s11 + $0xd0] sm:$0xff] %vm6026, %v4260
  %6925 = vst.msk [vmem:[%s11 + $0xd8] sm:$0xff] %vm6026, %v4261
  %6926 = vst.msk [vmem:[%s11 + $0xe0] sm:$0xff] %vm6026, %v4262
  %6927 = vst.msk [vmem:[%s11 + $0xe8] sm:$0xff] %vm6026, %v4263
  %6928 = vst.msk [vmem:[%s11 + $0xf0] sm:$0xff] %vm6026, %v4264
  %6929 = vst.msk [vmem:[%s11 + $0xf8] sm:$0xff] %vm6026, %v4265
  %6930 = vst.msk [vmem:[%s11 + $0x100] sm:$0xff] %vm6026, %v4266
  %6931 = vst.msk [vmem:[%s11 + $0x108] sm:$0xff] %vm6026, %v4267
  %6932 = vst.msk [vmem:[%s11 + $0x110] sm:$0xff] %vm6026, %v4268
  %6933 = vst.msk [vmem:[%s11 + $0x118] sm:$0xff] %vm6026, %v4269
  %6934 = vst.msk [vmem:[%s11 + $0x120] sm:$0xff] %vm6026, %v4270
  %6935 = vst.msk [vmem:[%s11 + $0x128] sm:$0xff] %vm6026, %v4271
  %6936 = vst.msk [vmem:[%s11 + $0x130] sm:$0xff] %vm6026, %v4272
  %6937 = vst.msk [vmem:[%s11 + $0x138] sm:$0xff] %vm6026, %v4273
  %6938 = vst.msk [vmem:[%s11 + $0x140] sm:$0xff] %vm6026, %v4274
  %6939 = vst.msk [vmem:[%s11 + $0x148] sm:$0xff] %vm6026, %v4275
  %6940 = vst.msk [vmem:[%s11 + $0x150] sm:$0xff] %vm6026, %v4276
  %6941 = vst.msk [vmem:[%s11 + $0x158] sm:$0xff] %vm6026, %v4277
  %6942 = vst.msk [vmem:[%s11 + $0x160] sm:$0xff] %vm6026, %v4278
  %6943 = vst.msk [vmem:[%s11 + $0x168] sm:$0xff] %vm6026, %v4279
  %6944 = vst.msk [vmem:[%s11 + $0x170] sm:$0xff] %vm6026, %v4280
  %6945 = vst.msk [vmem:[%s11 + $0x178] sm:$0xff] %vm6026, %v4281
  %6946 = vst.msk [vmem:[%s11 + $0x180] sm:$0xff] %vm6026, %v4282
  %6947 = vst.msk [vmem:[%s11 + $0x188] sm:$0xff] %vm6026, %v4283
  %6948 = vst.msk [vmem:[%s11 + $0x190] sm:$0xff] %vm6026, %v4284
  %6949 = vst.msk [vmem:[%s11 + $0x198] sm:$0xff] %vm6026, %v4285
  %6950 = vst.msk [vmem:[%s11 + $0x1a0] sm:$0xff] %vm6026, %v4286
  %6951 = vst.msk [vmem:[%s11 + $0x1a8] sm:$0xff] %vm6026, %v4287
  %6952 = vst.msk [vmem:[%s11 + $0x1b0] sm:$0xff] %vm6026, %v4288
  %6953 = vst.msk [vmem:[%s11 + $0x1b8] sm:$0xff] %vm6026, %v4289
  %6954 = vst.msk [vmem:[%s11 + $0x1c0] sm:$0xff] %vm6026, %v4290
  %6955 = vst.msk [vmem:[%s11 + $0x1c8] sm:$0xff] %vm6026, %v4291
  %6956 = vst.msk [vmem:[%s11 + $0x1d0] sm:$0xff] %vm6026, %v4292
  %6957 = vst.msk [vmem:[%s11 + $0x1d8] sm:$0xff] %vm6026, %v4293
  %6958 = vst.msk [vmem:[%s11 + $0x1e0] sm:$0xff] %vm6026, %v4294
  %6959 = vst.msk [vmem:[%s11 + $0x1e8] sm:$0xff] %vm6026, %v4295
  %6960 = vst.msk [vmem:[%s11 + $0x1f0] sm:$0xff] %vm6026, %v4296
  %6961 = vst.msk [vmem:[%s11 + $0x1f8] sm:$0xff] %vm6026, %v4297
  %6962 = vst.msk [vmem:[%s11 + $0x200] sm:$0xff] %vm6026, %v4298
  %6963 = vst.msk [vmem:[%s11 + $0x208] sm:$0xff] %vm6026, %v4299
  %6964 = vst.msk [vmem:[%s11 + $0x210] sm:$0xff] %vm6026, %v4300
  %6965 = vst.msk [vmem:[%s11 + $0x218] sm:$0xff] %vm6026, %v4301
  %6966 = vst.msk [vmem:[%s11 + $0x220] sm:$0xff] %vm6026, %v4302
  %6967 = vst.msk [vmem:[%s11 + $0x228] sm:$0xff] %vm6026, %v4303
  %6968 = vst.msk [vmem:[%s11 + $0x230] sm:$0xff] %vm6026, %v4304
  %6969 = vst.msk [vmem:[%s11 + $0x238] sm:$0xff] %vm6026, %v4305
  %6970 = vst.msk [vmem:[%s11 + $0x240] sm:$0xff] %vm6026, %v4306
  %6971 = vst.msk [vmem:[%s11 + $0x248] sm:$0xff] %vm6026, %v4307
  %6972 = vst.msk [vmem:[%s11 + $0x250] sm:$0xff] %vm6026, %v4308
  %6973 = vst.msk [vmem:[%s11 + $0x258] sm:$0xff] %vm6026, %v4309
  %6974 = vst.msk [vmem:[%s11 + $0x260] sm:$0xff] %vm6026, %v4310
  %6975 = vst.msk [vmem:[%s11 + $0x268] sm:$0xff] %vm6026, %v4311
  %6976 = vst.msk [vmem:[%s11 + $0x270] sm:$0xff] %vm6026, %v4312
  %6977 = vst.msk [vmem:[%s11 + $0x278] sm:$0xff] %vm6026, %v4313
  %6978 = vst.msk [vmem:[%s11 + $0x280] sm:$0xff] %vm6026, %v4314
  %6979 = vst.msk [vmem:[%s11 + $0x288] sm:$0xff] %vm6026, %v4315
  %6980 = vst.msk [vmem:[%s11 + $0x290] sm:$0xff] %vm6026, %v4316
  %6981 = vst.msk [vmem:[%s11 + $0x298] sm:$0xff] %vm6026, %v4317
  %6982 = vst.msk [vmem:[%s11 + $0x2a0] sm:$0xff] %vm6026, %v4318
  %6983 = vst.msk [vmem:[%s11 + $0x2a8] sm:$0xff] %vm6026, %v4319
  %6984 = vst.msk [vmem:[%s11 + $0x2b0] sm:$0xff] %vm6026, %v4320
  %6985 = vst.msk [vmem:[%s11 + $0x2b8] sm:$0xff] %vm6026, %v4321
  %6986 = vst.msk [vmem:[%s11 + $0x2c0] sm:$0xff] %vm6026, %v4322
  %6987 = vst.msk [vmem:[%s11 + $0x2c8] sm:$0xff] %vm6026, %v4323
  %6988 = vst.msk [vmem:[%s11 + $0x2d0] sm:$0xff] %vm6026, %v4324
  %6989 = vst.msk [vmem:[%s11 + $0x2d8] sm:$0xff] %vm6026, %v4325
  %6990 = vst.msk [vmem:[%s11 + $0x2e0] sm:$0xff] %vm6026, %v4326
  %6991 = vst.msk [vmem:[%s11 + $0x2e8] sm:$0xff] %vm6026, %v4327
  %6992 = vst.msk [vmem:[%s11 + $0x2f0] sm:$0xff] %vm6026, %v4328
  %6993 = vst.msk [vmem:[%s11 + $0x2f8] sm:$0xff] %vm6026, %v4329
  %6994 = vst.msk [vmem:[%s11 + $0x300] sm:$0xff] %vm6026, %v4330
  %6995 = vst.msk [vmem:[%s11 + $0x308] sm:$0xff] %vm6026, %v4331
  %6996 = vst.msk [vmem:[%s11 + $0x310] sm:$0xff] %vm6026, %v4332
  %6997 = vst.msk [vmem:[%s11 + $0x318] sm:$0xff] %vm6026, %v4333
  %6998 = vst.msk [vmem:[%s11 + $0x320] sm:$0xff] %vm6026, %v4334
  %6999 = vst.msk [vmem:[%s11 + $0x328] sm:$0xff] %vm6026, %v4335
  %7000 = vst.msk [vmem:[%s11 + $0x330] sm:$0xff] %vm6026, %v4336
  %7001 = vst.msk [vmem:[%s11 + $0x338] sm:$0xff] %vm6026, %v4337
  %7002 = vst.msk [vmem:[%s11 + $0x340] sm:$0xff] %vm6026, %v4338
  %7003 = vst.msk [vmem:[%s11 + $0x348] sm:$0xff] %vm6026, %v4339
  %7004 = vst.msk [vmem:[%s11 + $0x350] sm:$0xff] %vm6026, %v4340
  %7005 = vst.msk [vmem:[%s11 + $0x358] sm:$0xff] %vm6026, %v4341
  %7006 = vst.msk [vmem:[%s11 + $0x360] sm:$0xff] %vm6026, %v4342
  %7007 = vst.msk [vmem:[%s11 + $0x368] sm:$0xff] %vm6026, %v4343
  %7008 = vst.msk [vmem:[%s11 + $0x370] sm:$0xff] %vm6026, %v4344
  %7009 = vst.msk [vmem:[%s11 + $0x378] sm:$0xff] %vm6026, %v4345
  %7010 = vst.msk [vmem:[%s11 + $0x380] sm:$0xff] %vm6026, %v4346
  %7011 = vst.msk [vmem:[%s11 + $0x388] sm:$0xff] %vm6026, %v4347
  %7012 = vst.msk [vmem:[%s11 + $0x390] sm:$0xff] %vm6026, %v4348
  %7013 = vst.msk [vmem:[%s11 + $0x398] sm:$0xff] %vm6026, %v4349
  %7014 = vst.msk [vmem:[%s11 + $0x3a0] sm:$0xff] %vm6026, %v4350
  %7015 = vst.msk [vmem:[%s11 + $0x3a8] sm:$0xff] %vm6026, %v4351
  %7016 = vst.msk [vmem:[%s11 + $0x3b0] sm:$0xff] %vm6026, %v4352
  %7017 = vst.msk [vmem:[%s11 + $0x3b8] sm:$0xff] %vm6026, %v4353
  %7018 = vst.msk [vmem:[%s11 + $0x3c0] sm:$0xff] %vm6026, %v4354
  %7019 = vst.msk [vmem:[%s11 + $0x3c8] sm:$0xff] %vm6026, %v4355
  %7020 = vst.msk [vmem:[%s11 + $0x3d0] sm:$0xff] %vm6026, %v4356
  %7021 = vst.msk [vmem:[%s11 + $0x3d8] sm:$0xff] %vm6026, %v4357
  %7022 = vst.msk [vmem:[%s11 + $0x3e0] sm:$0xff] %vm6026, %v4358
  %7023 = vst.msk [vmem:[%s11 + $0x3e8] sm:$0xff] %vm6026, %v4359
  %7024 = vst.msk [vmem:[%s11 + $0x3f0] sm:$0xff] %vm6026, %v4360
  %7025 = vst.msk [vmem:[%s11 + $0x3f8] sm:$0xff] %vm6026, %v4361
  %7026 = vst.msk [vmem:[%s12] sm:$0xff] %vm6026, %v5514
  %7027 = vst.msk [vmem:[%s12 + $0x8] sm:$0xff] %vm6026, %v5515
  %7028 = vst.msk [vmem:[%s12 + $0x10] sm:$0xff] %vm6026, %v5516
  %7029 = vst.msk [vmem:[%s12 + $0x18] sm:$0xff] %vm6026, %v5517
  %7030 = vst.msk [vmem:[%s12 + $0x20] sm:$0xff] %vm6026, %v5518
  %7031 = vst.msk [vmem:[%s12 + $0x28] sm:$0xff] %vm6026, %v5519
  %7032 = vst.msk [vmem:[%s12 + $0x30] sm:$0xff] %vm6026, %v5520
  %7033 = vst.msk [vmem:[%s12 + $0x38] sm:$0xff] %vm6026, %v5521
  %7034 = vst.msk [vmem:[%s12 + $0x40] sm:$0xff] %vm6026, %v5522
  %7035 = vst.msk [vmem:[%s12 + $0x48] sm:$0xff] %vm6026, %v5523
  %7036 = vst.msk [vmem:[%s12 + $0x50] sm:$0xff] %vm6026, %v5524
  %7037 = vst.msk [vmem:[%s12 + $0x58] sm:$0xff] %vm6026, %v5525
  %7038 = vst.msk [vmem:[%s12 + $0x60] sm:$0xff] %vm6026, %v5526
  %7039 = vst.msk [vmem:[%s12 + $0x68] sm:$0xff] %vm6026, %v5527
  %7040 = vst.msk [vmem:[%s12 + $0x70] sm:$0xff] %vm6026, %v5528
  %7041 = vst.msk [vmem:[%s12 + $0x78] sm:$0xff] %vm6026, %v5529
  %7042 = vst.msk [vmem:[%s12 + $0x80] sm:$0xff] %vm6026, %v5530
  %7043 = vst.msk [vmem:[%s12 + $0x88] sm:$0xff] %vm6026, %v5531
  %7044 = vst.msk [vmem:[%s12 + $0x90] sm:$0xff] %vm6026, %v5532
  %7045 = vst.msk [vmem:[%s12 + $0x98] sm:$0xff] %vm6026, %v5533
  %7046 = vst.msk [vmem:[%s12 + $0xa0] sm:$0xff] %vm6026, %v5534
  %7047 = vst.msk [vmem:[%s12 + $0xa8] sm:$0xff] %vm6026, %v5535
  %7048 = vst.msk [vmem:[%s12 + $0xb0] sm:$0xff] %vm6026, %v5536
  %7049 = vst.msk [vmem:[%s12 + $0xb8] sm:$0xff] %vm6026, %v5537
  %7050 = vst.msk [vmem:[%s12 + $0xc0] sm:$0xff] %vm6026, %v5538
  %7051 = vst.msk [vmem:[%s12 + $0xc8] sm:$0xff] %vm6026, %v5539
  %7052 = vst.msk [vmem:[%s12 + $0xd0] sm:$0xff] %vm6026, %v5540
  %7053 = vst.msk [vmem:[%s12 + $0xd8] sm:$0xff] %vm6026, %v5541
  %7054 = vst.msk [vmem:[%s12 + $0xe0] sm:$0xff] %vm6026, %v5542
  %7055 = vst.msk [vmem:[%s12 + $0xe8] sm:$0xff] %vm6026, %v5543
  %7056 = vst.msk [vmem:[%s12 + $0xf0] sm:$0xff] %vm6026, %v5544
  %7057 = vst.msk [vmem:[%s12 + $0xf8] sm:$0xff] %vm6026, %v5545
  %7058 = vst.msk [vmem:[%s12 + $0x100] sm:$0xff] %vm6026, %v5546
  %7059 = vst.msk [vmem:[%s12 + $0x108] sm:$0xff] %vm6026, %v5547
  %7060 = vst.msk [vmem:[%s12 + $0x110] sm:$0xff] %vm6026, %v5548
  %7061 = vst.msk [vmem:[%s12 + $0x118] sm:$0xff] %vm6026, %v5549
  %7062 = vst.msk [vmem:[%s12 + $0x120] sm:$0xff] %vm6026, %v5550
  %7063 = vst.msk [vmem:[%s12 + $0x128] sm:$0xff] %vm6026, %v5551
  %7064 = vst.msk [vmem:[%s12 + $0x130] sm:$0xff] %vm6026, %v5552
  %7065 = vst.msk [vmem:[%s12 + $0x138] sm:$0xff] %vm6026, %v5553
  %7066 = vst.msk [vmem:[%s12 + $0x140] sm:$0xff] %vm6026, %v5554
  %7067 = vst.msk [vmem:[%s12 + $0x148] sm:$0xff] %vm6026, %v5555
  %7068 = vst.msk [vmem:[%s12 + $0x150] sm:$0xff] %vm6026, %v5556
  %7069 = vst.msk [vmem:[%s12 + $0x158] sm:$0xff] %vm6026, %v5557
  %7070 = vst.msk [vmem:[%s12 + $0x160] sm:$0xff] %vm6026, %v5558
  %7071 = vst.msk [vmem:[%s12 + $0x168] sm:$0xff] %vm6026, %v5559
  %7072 = vst.msk [vmem:[%s12 + $0x170] sm:$0xff] %vm6026, %v5560
  %7073 = vst.msk [vmem:[%s12 + $0x178] sm:$0xff] %vm6026, %v5561
  %7074 = vst.msk [vmem:[%s12 + $0x180] sm:$0xff] %vm6026, %v5562
  %7075 = vst.msk [vmem:[%s12 + $0x188] sm:$0xff] %vm6026, %v5563
  %7076 = vst.msk [vmem:[%s12 + $0x190] sm:$0xff] %vm6026, %v5564
  %7077 = vst.msk [vmem:[%s12 + $0x198] sm:$0xff] %vm6026, %v5565
  %7078 = vst.msk [vmem:[%s12 + $0x1a0] sm:$0xff] %vm6026, %v5566
  %7079 = vst.msk [vmem:[%s12 + $0x1a8] sm:$0xff] %vm6026, %v5567
  %7080 = vst.msk [vmem:[%s12 + $0x1b0] sm:$0xff] %vm6026, %v5568
  %7081 = vst.msk [vmem:[%s12 + $0x1b8] sm:$0xff] %vm6026, %v5569
  %7082 = vst.msk [vmem:[%s12 + $0x1c0] sm:$0xff] %vm6026, %v5570
  %7083 = vst.msk [vmem:[%s12 + $0x1c8] sm:$0xff] %vm6026, %v5571
  %7084 = vst.msk [vmem:[%s12 + $0x1d0] sm:$0xff] %vm6026, %v5572
  %7085 = vst.msk [vmem:[%s12 + $0x1d8] sm:$0xff] %vm6026, %v5573
  %7086 = vst.msk [vmem:[%s12 + $0x1e0] sm:$0xff] %vm6026, %v5574
  %7087 = vst.msk [vmem:[%s12 + $0x1e8] sm:$0xff] %vm6026, %v5575
  %7088 = vst.msk [vmem:[%s12 + $0x1f0] sm:$0xff] %vm6026, %v5576
  %7089 = vst.msk [vmem:[%s12 + $0x1f8] sm:$0xff] %vm6026, %v5577
  %7090 = vst.msk [vmem:[%s12 + $0x200] sm:$0xff] %vm6026, %v5578
  %7091 = vst.msk [vmem:[%s12 + $0x208] sm:$0xff] %vm6026, %v5579
  %7092 = vst.msk [vmem:[%s12 + $0x210] sm:$0xff] %vm6026, %v5580
  %7093 = vst.msk [vmem:[%s12 + $0x218] sm:$0xff] %vm6026, %v5581
  %7094 = vst.msk [vmem:[%s12 + $0x220] sm:$0xff] %vm6026, %v5582
  %7095 = vst.msk [vmem:[%s12 + $0x228] sm:$0xff] %vm6026, %v5583
  %7096 = vst.msk [vmem:[%s12 + $0x230] sm:$0xff] %vm6026, %v5584
  %7097 = vst.msk [vmem:[%s12 + $0x238] sm:$0xff] %vm6026, %v5585
  %7098 = vst.msk [vmem:[%s12 + $0x240] sm:$0xff] %vm6026, %v5586
  %7099 = vst.msk [vmem:[%s12 + $0x248] sm:$0xff] %vm6026, %v5587
  %7100 = vst.msk [vmem:[%s12 + $0x250] sm:$0xff] %vm6026, %v5588
  %7101 = vst.msk [vmem:[%s12 + $0x258] sm:$0xff] %vm6026, %v5589
  %7102 = vst.msk [vmem:[%s12 + $0x260] sm:$0xff] %vm6026, %v5590
  %7103 = vst.msk [vmem:[%s12 + $0x268] sm:$0xff] %vm6026, %v5591
  %7104 = vst.msk [vmem:[%s12 + $0x270] sm:$0xff] %vm6026, %v5592
  %7105 = vst.msk [vmem:[%s12 + $0x278] sm:$0xff] %vm6026, %v5593
  %7106 = vst.msk [vmem:[%s12 + $0x280] sm:$0xff] %vm6026, %v5594
  %7107 = vst.msk [vmem:[%s12 + $0x288] sm:$0xff] %vm6026, %v5595
  %7108 = vst.msk [vmem:[%s12 + $0x290] sm:$0xff] %vm6026, %v5596
  %7109 = vst.msk [vmem:[%s12 + $0x298] sm:$0xff] %vm6026, %v5597
  %7110 = vst.msk [vmem:[%s12 + $0x2a0] sm:$0xff] %vm6026, %v5598
  %7111 = vst.msk [vmem:[%s12 + $0x2a8] sm:$0xff] %vm6026, %v5599
  %7112 = vst.msk [vmem:[%s12 + $0x2b0] sm:$0xff] %vm6026, %v5600
  %7113 = vst.msk [vmem:[%s12 + $0x2b8] sm:$0xff] %vm6026, %v5601
  %7114 = vst.msk [vmem:[%s12 + $0x2c0] sm:$0xff] %vm6026, %v5602
  %7115 = vst.msk [vmem:[%s12 + $0x2c8] sm:$0xff] %vm6026, %v5603
  %7116 = vst.msk [vmem:[%s12 + $0x2d0] sm:$0xff] %vm6026, %v5604
  %7117 = vst.msk [vmem:[%s12 + $0x2d8] sm:$0xff] %vm6026, %v5605
  %7118 = vst.msk [vmem:[%s12 + $0x2e0] sm:$0xff] %vm6026, %v5606
  %7119 = vst.msk [vmem:[%s12 + $0x2e8] sm:$0xff] %vm6026, %v5607
  %7120 = vst.msk [vmem:[%s12 + $0x2f0] sm:$0xff] %vm6026, %v5608
  %7121 = vst.msk [vmem:[%s12 + $0x2f8] sm:$0xff] %vm6026, %v5609
  %7122 = vst.msk [vmem:[%s12 + $0x300] sm:$0xff] %vm6026, %v5610
  %7123 = vst.msk [vmem:[%s12 + $0x308] sm:$0xff] %vm6026, %v5611
  %7124 = vst.msk [vmem:[%s12 + $0x310] sm:$0xff] %vm6026, %v5612
  %7125 = vst.msk [vmem:[%s12 + $0x318] sm:$0xff] %vm6026, %v5613
  %7126 = vst.msk [vmem:[%s12 + $0x320] sm:$0xff] %vm6026, %v5614
  %7127 = vst.msk [vmem:[%s12 + $0x328] sm:$0xff] %vm6026, %v5615
  %7128 = vst.msk [vmem:[%s12 + $0x330] sm:$0xff] %vm6026, %v5616
  %7129 = vst.msk [vmem:[%s12 + $0x338] sm:$0xff] %vm6026, %v5617
  %7130 = vst.msk [vmem:[%s12 + $0x340] sm:$0xff] %vm6026, %v5618
  %7131 = vst.msk [vmem:[%s12 + $0x348] sm:$0xff] %vm6026, %v5619
  %7132 = vst.msk [vmem:[%s12 + $0x350] sm:$0xff] %vm6026, %v5620
  %7133 = vst.msk [vmem:[%s12 + $0x358] sm:$0xff] %vm6026, %v5621
  %7134 = vst.msk [vmem:[%s12 + $0x360] sm:$0xff] %vm6026, %v5622
  %7135 = vst.msk [vmem:[%s12 + $0x368] sm:$0xff] %vm6026, %v5623
  %7136 = vst.msk [vmem:[%s12 + $0x370] sm:$0xff] %vm6026, %v5624
  %7137 = vst.msk [vmem:[%s12 + $0x378] sm:$0xff] %vm6026, %v5625
  %7138 = vst.msk [vmem:[%s12 + $0x380] sm:$0xff] %vm6026, %v5626
  %7139 = vst.msk [vmem:[%s12 + $0x388] sm:$0xff] %vm6026, %v5627
  %7140 = vst.msk [vmem:[%s12 + $0x390] sm:$0xff] %vm6026, %v5628
  %7141 = vst.msk [vmem:[%s12 + $0x398] sm:$0xff] %vm6026, %v5629
  %7142 = vst.msk [vmem:[%s12 + $0x3a0] sm:$0xff] %vm6026, %v5630
  %7143 = vst.msk [vmem:[%s12 + $0x3a8] sm:$0xff] %vm6026, %v5631
  %7144 = vst.msk [vmem:[%s12 + $0x3b0] sm:$0xff] %vm6026, %v5632
  %7145 = vst.msk [vmem:[%s12 + $0x3b8] sm:$0xff] %vm6026, %v5633
  %7146 = vst.msk [vmem:[%s12 + $0x3c0] sm:$0xff] %vm6026, %v5634
  %7147 = vst.msk [vmem:[%s12 + $0x3c8] sm:$0xff] %vm6026, %v5635
  %7148 = vst.msk [vmem:[%s12 + $0x3d0] sm:$0xff] %vm6026, %v5636
  %7149 = vst.msk [vmem:[%s12 + $0x3d8] sm:$0xff] %vm6026, %v5637
  %7150 = vst.msk [vmem:[%s12 + $0x3e0] sm:$0xff] %vm6026, %v5638
  %7151 = vst.msk [vmem:[%s12 + $0x3e8] sm:$0xff] %vm6026, %v5639
  %7152 = vst.msk [vmem:[%s12 + $0x3f0] sm:$0xff] %vm6026, %v5640
  %7153 = vst.msk [vmem:[%s12 + $0x3f8] sm:$0xff] %vm6026, %v5641
  // Predicated region
  $region42: #{stp_cell_forward.1} parent=0 // pred_check
    _
  $region43: #{stp_cell_forward.1} parent=0 // pred_check_branch
    %7155 = sbr.rel (0) target = $region45
  $region44: #{stp_cell_forward.1} parent=0 // pred_region
    _
  $region45: #{stp_cell_forward.1} parent=0 // pred_fallthru
    _
  // Predicated region
  $region46: #{stp_cell_forward.1} parent=0 // pred_check
    _
  $region47: #{stp_cell_forward.1} parent=0 // pred_check_branch
    %7157 = sbr.rel (0) target = $region49
  $region48: #{stp_cell_forward.1} parent=0 // pred_region
    _
  $region49: #{stp_cell_forward.1} parent=0 // pred_fallthru
    _
  // Predicated region
  $region50: #{stp_cell_forward.1} parent=0 // pred_check
    _
  $region51: #{stp_cell_forward.1} parent=0 // pred_check_branch
    %7159 = sbr.rel (0) target = $region53
  $region52: #{stp_cell_forward.1} parent=0 // pred_region
    _
  $region53: #{stp_cell_forward.1} parent=0 // pred_fallthru
    _
  // Predicated region
  $region54: #{stp_cell_forward.1} parent=0 // pred_check
    _
  $region55: #{stp_cell_forward.1} parent=0 // pred_check_branch
    %7161 = sbr.rel (0) target = $region57
  $region56: #{stp_cell_forward.1} parent=0 // pred_region
    _
  $region57: #{stp_cell_forward.1} parent=0 // pred_fallthru
    _
  // Predicated region
  $region58: #{stp_cell_forward.1} parent=0 // pred_check
    _
  $region59: #{stp_cell_forward.1} parent=0 // pred_check_branch
    %7163 = sbr.rel (0) target = $region61
  $region60: #{stp_cell_forward.1} parent=0 // pred_region
    _
  $region61: #{stp_cell_forward.1} parent=0 // pred_fallthru
    _
  // Predicated region
  $region62: #{stp_cell_forward.1} parent=0 // pred_check
    _
  $region63: #{stp_cell_forward.1} parent=0 // pred_check_branch
    %7165 = sbr.rel (0) target = $region65
  $region64: #{stp_cell_forward.1} parent=0 // pred_region
    _
  $region65: #{stp_cell_forward.1} parent=0 // pred_fallthru
    _

</llo_original>
